<compile_context>
chip_gen: v6e
topology: v6e:2x2x1
jax: 0.10.0
libtpu: 0.0.40
codegen_flags: <defaults>
</compile_context>

<pallas_src>
import functools

import jax
import jax.numpy as jnp
from jax.experimental import pallas as pl
from jax.experimental.pallas import tpu as pltpu


def _round_up(x, m):
    return (x + m - 1) // m * m


# ----------------------------------------------------------------------------
# Kernel 1: K-blocked matmul, fused per-channel shift + optional LeakyReLU.
#   y = leaky_relu(P @ W + shift)   (BN scale already folded into W,
#                                    shift = bias*scale + bn_shift)
# Grid = (M tiles ["parallel"], K tiles ["arbitrary"]); f32 accumulator scratch.
# ----------------------------------------------------------------------------
def _conv_matmul_kernel(p_ref, w_ref, s_ref, o_ref, acc_ref, *, alpha, apply_leaky):
    k = pl.program_id(1)

    @pl.when(k == 0)
    def _():
        acc_ref[...] = jnp.zeros_like(acc_ref)

    acc_ref[...] += jnp.dot(p_ref[...], w_ref[...],
                            preferred_element_type=jnp.float32)

    @pl.when(k == pl.num_programs(1) - 1)
    def _():
        y = acc_ref[...] + s_ref[...]
        if apply_leaky:
            y = jnp.where(y > 0, y, alpha * y)
        o_ref[...] = y.astype(o_ref.dtype)


def conv_matmul(patches, w, shift, *, alpha, apply_leaky, out_dtype):
    """patches: (M, K) bf16, w: (K, N) bf16, shift: (1, N) f32 -> (M, N)."""
    M, K = patches.shape
    K2, N = w.shape
    assert K == K2
    # M tiling: large M -> 256-row tiles (>=2 grid points keeps both v7x cores
    # busy and halves per-step overhead vs 128); small M -> one padded tile.
    if M > 256 and M % 256 == 0:
        TM, Mp = 256, M
    else:
        Mp = _round_up(M, 8)
        TM = Mp
    if Mp != M:
        patches = jnp.pad(patches, ((0, Mp - M), (0, 0)))
    # K tiling: block the contraction so weight DMA overlaps the MXU.
    TK = 512 if (K > 512 and K % 512 == 0) else K
    nk = K // TK

    cost = pl.CostEstimate(
        flops=2 * Mp * K * N, transcendentals=0,
        bytes_accessed=Mp * K * 2 + K * N * 2 + 4 * N
        + Mp * N * jnp.dtype(out_dtype).itemsize)

    out = pl.pallas_call(
        functools.partial(_conv_matmul_kernel, alpha=alpha,
                          apply_leaky=apply_leaky),
        out_shape=jax.ShapeDtypeStruct((Mp, N), out_dtype),
        grid=(Mp // TM, nk),
        in_specs=[
            pl.BlockSpec((TM, TK), lambda i, k: (i, k)),   # patch tile
            pl.BlockSpec((TK, N), lambda i, k: (k, 0)),    # weight K-slab
            pl.BlockSpec((1, N), lambda i, k: (0, 0)),     # fused bias/BN shift
        ],
        out_specs=pl.BlockSpec((TM, N), lambda i, k: (i, 0)),
        scratch_shapes=[pltpu.VMEM((TM, N), jnp.float32)],
        compiler_params=pltpu.CompilerParams(
            dimension_semantics=("parallel", "arbitrary")),
        cost_estimate=cost,
    )(patches, w, shift)
    return out[:M] if Mp != M else out


# ----------------------------------------------------------------------------
# Kernel 2: fused c4 + c5.
#   h = leaky_relu(P @ W4 + s4);   y = h @ W5 + s5
# Grid = (K4 tiles ["arbitrary"]); the second (tiny) matmul runs on the VMEM
# result on the last K step, avoiding an HBM roundtrip and a launch.
# ----------------------------------------------------------------------------
def _fused_c45_kernel(p_ref, w4_ref, s4_ref, w5_ref, s5_ref, o_ref, acc_ref,
                      *, alpha):
    k = pl.program_id(0)

    @pl.when(k == 0)
    def _():
        acc_ref[...] = jnp.zeros_like(acc_ref)

    acc_ref[...] += jnp.dot(p_ref[...], w4_ref[...],
                            preferred_element_type=jnp.float32)

    @pl.when(k == pl.num_programs(0) - 1)
    def _():
        h = acc_ref[...] + s4_ref[...]
        h = jnp.where(h > 0, h, alpha * h)                 # LeakyReLU after c4
        y = jnp.dot(h.astype(jnp.bfloat16), w5_ref[...],
                    preferred_element_type=jnp.float32)
        o_ref[...] = (y + s5_ref[...]).astype(o_ref.dtype)


def fused_c45(patches, w4, s4, w5, s5, *, alpha):
    M, K = patches.shape
    _, N4 = w4.shape
    _, N5 = w5.shape
    Mp = _round_up(M, 8)
    if Mp != M:
        patches = jnp.pad(patches, ((0, Mp - M), (0, 0)))
    TK = 512 if (K > 512 and K % 512 == 0) else K
    nk = K // TK

    cost = pl.CostEstimate(
        flops=2 * Mp * K * N4 + 2 * Mp * N4 * N5, transcendentals=0,
        bytes_accessed=Mp * K * 2 + K * N4 * 2 + N4 * N5 * 2
        + 4 * (N4 + N5) + Mp * N5 * 4)

    out = pl.pallas_call(
        functools.partial(_fused_c45_kernel, alpha=alpha),
        out_shape=jax.ShapeDtypeStruct((Mp, N5), jnp.float32),
        grid=(nk,),
        in_specs=[
            pl.BlockSpec((Mp, TK), lambda k: (0, k)),      # patch K-slab
            pl.BlockSpec((TK, N4), lambda k: (k, 0)),      # c4 weight K-slab
            pl.BlockSpec((1, N4), lambda k: (0, 0)),       # c4 shift (bias)
            pl.BlockSpec((N4, N5), lambda k: (0, 0)),      # c5 weight (resident)
            pl.BlockSpec((1, N5), lambda k: (0, 0)),       # c5 shift (bias)
        ],
        out_specs=pl.BlockSpec((Mp, N5), lambda k: (0, 0)),
        scratch_shapes=[pltpu.VMEM((Mp, N4), jnp.float32)],
        compiler_params=pltpu.CompilerParams(
            dimension_semantics=("arbitrary",)),
        cost_estimate=cost,
    )(patches, w4, s4, w5, s5)
    return out[:M]


# ----------------------------------------------------------------------------
# Glue: im2col + per-layer wrapper (NHWC, bf16 internally)
# ----------------------------------------------------------------------------
def im2col(x_nhwc, kh, kw, stride, pad):
    if pad:
        x_nhwc = jnp.pad(x_nhwc, ((0, 0), (pad, pad), (pad, pad), (0, 0)))
    n, h, w, c = x_nhwc.shape
    ho = (h - kh) // stride + 1
    wo = (w - kw) // stride + 1
    cols = []
    for i in range(kh):
        for j in range(kw):
            cols.append(x_nhwc[:, i:i + stride * ho:stride,
                               j:j + stride * wo:stride, :])
    p = jnp.stack(cols, axis=3)                    # (n, ho, wo, kh*kw, c)
    return p.reshape(n * ho * wo, kh * kw * c), ho, wo


def conv_layer(x_nhwc, layer, *, ksize, stride, pad, alpha, leaky,
               out_dtype=jnp.bfloat16):
    wm, sh = layer                                 # wm: (K, Cout) bf16, sh: (1, Cout) f32
    patches, ho, wo = im2col(x_nhwc, ksize, ksize, stride, pad)
    y = conv_matmul(patches, wm, sh, alpha=alpha, apply_leaky=leaky,
                    out_dtype=out_dtype)
    n = x_nhwc.shape[0]
    return y.reshape(n, ho, wo, wm.shape[1])


# ----------------------------------------------------------------------------
# Deterministic parameter init (mirrors PyTorch shapes) + fold-at-init
# ----------------------------------------------------------------------------
def init_params(key):
    ks = jax.random.split(key, 18)
    eps = 1e-5

    def conv(kw_, kb_, cout, cin, kh, kwd):
        fan_in = cin * kh * kwd
        bound = 1.0 / (fan_in ** 0.5)
        w = jax.random.uniform(kw_, (cout, cin, kh, kwd), jnp.float32,
                               -bound, bound)           # PyTorch (Cout,Cin,kh,kw)
        b = jax.random.uniform(kb_, (cout,), jnp.float32, -bound, bound)
        wm = jnp.transpose(w, (2, 3, 1, 0))             # -> (kh, kw, Cin, Cout)
        return wm, b

    def bn(kg, kb, km, kv, c):
        gamma = jax.random.uniform(kg, (c,), jnp.float32, 0.5, 1.5)
        beta = 0.1 * jax.random.normal(kb, (c,), jnp.float32)
        mean = 0.1 * jax.random.normal(km, (c,), jnp.float32)
        var = jax.random.uniform(kv, (c,), jnp.float32, 0.5, 1.5)
        scale = gamma * jax.lax.rsqrt(var + eps)
        shift = beta - mean * scale
        return scale, shift

    def fold(w4d, b, scale=None, bshift=None):
        kh, kw_, ci, co = w4d.shape
        if scale is None:
            scale = jnp.ones((co,), jnp.float32)
            bshift = jnp.zeros((co,), jnp.float32)
        wm = (w4d * scale).reshape(kh * kw_ * ci, co).astype(jnp.bfloat16)
        sh = (b * scale + bshift).reshape(1, co).astype(jnp.float32)
        return wm, sh

    params = {}
    w1, b1 = conv(ks[0], ks[1], 64, 1, 4, 4)
    params['c1'] = fold(w1, b1)
    w2, b2 = conv(ks[2], ks[3], 128, 64, 4, 4)
    s2, t2 = bn(ks[4], ks[5], ks[6], ks[7], 128)
    params['c2'] = fold(w2, b2, s2, t2)
    w3, b3 = conv(ks[8], ks[9], 256, 128, 4, 4)
    s3, t3 = bn(ks[10], ks[11], ks[12], ks[13], 256)
    params['c3'] = fold(w3, b3, s3, t3)
    w4, b4 = conv(ks[14], ks[15], 128, 256, 4, 4)
    params['c4'] = fold(w4, b4)
    w5, b5 = conv(ks[16], ks[17], 3, 128, 1, 1)
    wm5, sh5 = fold(w5, b5)
    # Pad c5 Cout 3 -> 128 once at init so the fused kernel writes a lane-dense
    # tile; the wrapper slices the 3 real channels back out.
    params['c5'] = (jnp.pad(wm5, ((0, 0), (0, 125))),
                    jnp.pad(sh5, ((0, 0), (0, 125))))
    return params


# ----------------------------------------------------------------------------
# Full module forward: upblock (3 strided convs) + downblock (2 convs)
# ----------------------------------------------------------------------------
def d_forward(x_nchw, params, alpha=0.2):
    x = jnp.transpose(x_nchw, (0, 2, 3, 1)).astype(jnp.bfloat16)   # NCHW -> NHWC
    # upblock: Conv(1->64,4,s2,p1) + LeakyReLU
    x = conv_layer(x, params['c1'], ksize=4, stride=2, pad=1, alpha=alpha, leaky=True)
    # Conv(64->128,4,s2,p1) + BN + LeakyReLU
    x = conv_layer(x, params['c2'], ksize=4, stride=2, pad=1, alpha=alpha, leaky=True)
    # Conv(128->256,4,s2,p1) + BN, with downblock's leading LeakyReLU fused here
    x = conv_layer(x, params['c3'], ksize=4, stride=2, pad=1, alpha=alpha, leaky=True)
    # downblock: Conv(256->128,4,s1,p0) + LeakyReLU + Conv(128->3,1,s1,p0), fused
    patches, ho, wo = im2col(x, 4, 4, 1, 0)
    w4, s4 = params['c4']
    w5, s5 = params['c5']
    y = fused_c45(patches, w4, s4, w5, s5, alpha=alpha)            # (N*ho*wo, 128) f32
    n = x.shape[0]
    y = y[:, :3].reshape(n, ho, wo, 3)
    return jnp.transpose(y, (0, 3, 1, 2))                          # NHWC -> NCHW


if __name__ == "__main__":
    key = jax.random.PRNGKey(0)
    pkey, xkey = jax.random.split(key)
    params = init_params(pkey)
    # 1-channel 32x32 input: 32 -> 16 -> 8 -> 4 -> 1 -> 1 spatial, 3 output chans
    x = jax.random.normal(xkey, (2, 1, 32, 32), jnp.float32)

    out = jax.jit(lambda xx: d_forward(xx, params))(x)
    out = jax.block_until_ready(out)
    assert out.shape == (2, 3, 1, 1), out.shape
    assert out.dtype == jnp.float32
    assert bool(jnp.all(jnp.isfinite(out)))
    print("KERNEL_OK")
</pallas_src>

<mosaic_0001>
module attributes {stable_mosaic.version = 11 : i64} {
  func.func @_conv_matmul_kernel(%arg0: i32, %arg1: i32, %arg2: memref<256x16xbf16, #tpu.memory_space<vmem>>, %arg3: memref<16x64xbf16, #tpu.memory_space<vmem>>, %arg4: memref<1x64xf32, #tpu.memory_space<vmem>>, %arg5: memref<256x64xbf16, #tpu.memory_space<vmem>>, %arg6: memref<256x64xf32, #tpu.memory_space<vmem>>) attributes {dimension_semantics = [#tpu.dimension_semantics<parallel>, #tpu.dimension_semantics<arbitrary>], iteration_bounds = array<i64: 2, 1>, scalar_prefetch = 0 : i64, scratch_operands = 1 : i64, tpu.core_type = #tpu.core_type<tc>, window_params = [{transform_indices = @transform_0, window_bounds = array<i64: 256, 16>}, {transform_indices = @transform_1, window_bounds = array<i64: 16, 64>}, {pipeline_mode = #tpu.pipeline_mode<synchronous>, transform_indices = @transform_2, window_bounds = array<i64: 1, 64>}, {transform_indices = @transform_3, window_bounds = array<i64: 256, 64>}]} {
    %c0_i32 = arith.constant 0 : i32
    %0 = arith.cmpi eq, %arg1, %c0_i32 : i32
    %1 = arith.extui %0 : i1 to i32
    %c0_i32_0 = arith.constant 0 : i32
    %2 = arith.cmpi ne, %1, %c0_i32_0 : i32
    scf.if %2 {
      %cst_10 = arith.constant 0.000000e+00 : f32
      %12 = vector.broadcast %cst_10 : f32 to vector<256x64xf32>
      %c0_11 = arith.constant 0 : index
      %c0_12 = arith.constant 0 : index
      %13 = vector.load %arg6[%c0_11, %c0_12] : memref<256x64xf32, #tpu.memory_space<vmem>>, vector<256x64xf32>
      tpu.vector_store %arg6[%c0_11, %c0_12], %12 {strides = array<i32>} : memref<256x64xf32, #tpu.memory_space<vmem>>, vector<256x64xf32>,
    } else {
    }
    %c0 = arith.constant 0 : index
    %c0_1 = arith.constant 0 : index
    %3 = vector.load %arg6[%c0, %c0_1] : memref<256x64xf32, #tpu.memory_space<vmem>>, vector<256x64xf32>
    %c0_2 = arith.constant 0 : index
    %c0_3 = arith.constant 0 : index
    %4 = vector.load %arg2[%c0_2, %c0_3] : memref<256x16xbf16, #tpu.memory_space<vmem>>, vector<256x16xbf16>
    %c0_4 = arith.constant 0 : index
    %c0_5 = arith.constant 0 : index
    %5 = vector.load %arg3[%c0_4, %c0_5] : memref<16x64xbf16, #tpu.memory_space<vmem>>, vector<16x64xbf16>
    %cst = arith.constant dense<0.000000e+00> : vector<256x64xf32>
    %6 = tpu.matmul %4, %5, %cst {dimension_numbers = #tpu.dot_dimension_numbers<[1], [0], [0], [1], [0, 0, 1, 1], [], []>} : vector<256x16xbf16>, vector<16x64xbf16>, vector<256x64xf32> -> vector<256x64xf32>
    %7 = arith.addf %3, %6 : vector<256x64xf32>
    %c0_6 = arith.constant 0 : index
    %c0_7 = arith.constant 0 : index
    %8 = vector.load %arg6[%c0_6, %c0_7] : memref<256x64xf32, #tpu.memory_space<vmem>>, vector<256x64xf32>
    tpu.vector_store %arg6[%c0_6, %c0_7], %7 {strides = array<i32>} : memref<256x64xf32, #tpu.memory_space<vmem>>, vector<256x64xf32>,
    %c0_i32_8 = arith.constant 0 : i32
    %9 = arith.cmpi eq, %arg1, %c0_i32_8 : i32
    %10 = arith.extui %9 : i1 to i32
    %c0_i32_9 = arith.constant 0 : i32
    %11 = arith.cmpi ne, %10, %c0_i32_9 : i32
    scf.if %11 {
      %c0_10 = arith.constant 0 : index
      %c0_11 = arith.constant 0 : index
      %12 = vector.load %arg6[%c0_10, %c0_11] : memref<256x64xf32, #tpu.memory_space<vmem>>, vector<256x64xf32>
      %c0_12 = arith.constant 0 : index
      %c0_13 = arith.constant 0 : index
      %13 = vector.load %arg4[%c0_12, %c0_13] : memref<1x64xf32, #tpu.memory_space<vmem>>, vector<1x64xf32>
      %14 = vector.broadcast %13 : vector<1x64xf32> to vector<256x64xf32>
      %15 = arith.addf %12, %14 : vector<256x64xf32>
      %cst_14 = arith.constant 0.000000e+00 : f32
      %16 = vector.broadcast %cst_14 : f32 to vector<256x64xf32>
      %17 = arith.cmpf ogt, %15, %16 : vector<256x64xf32>
      %cst_15 = arith.constant 2.000000e-01 : f32
      %18 = vector.broadcast %cst_15 : f32 to vector<256x64xf32>
      %19 = arith.mulf %18, %15 : vector<256x64xf32>
      %20 = arith.select %17, %15, %19 : vector<256x64xi1>, vector<256x64xf32>
      %21 = arith.truncf %20 : vector<256x64xf32> to vector<256x64xbf16>
      %c0_16 = arith.constant 0 : index
      %c0_17 = arith.constant 0 : index
      %22 = vector.load %arg5[%c0_16, %c0_17] : memref<256x64xbf16, #tpu.memory_space<vmem>>, vector<256x64xbf16>
      tpu.vector_store %arg5[%c0_16, %c0_17], %21 {strides = array<i32>} : memref<256x64xbf16, #tpu.memory_space<vmem>>, vector<256x64xbf16>,
    } else {
    }
    return
  }
  func.func @transform_0(%arg0: i32, %arg1: i32) -> (i32, i32) {
    %c0_i32 = arith.constant 0 : i32
    return %arg0, %arg1 : i32, i32
  }
  func.func @transform_1(%arg0: i32, %arg1: i32) -> (i32, i32) {
    %c0_i32 = arith.constant 0 : i32
    %c0_i32_0 = arith.constant 0 : i32
    return %arg1, %c0_i32 : i32, i32
  }
  func.func @transform_2(%arg0: i32, %arg1: i32) -> (i32, i32) {
    %c0_i32 = arith.constant 0 : i32
    %c0_i32_0 = arith.constant 0 : i32
    %c0_i32_1 = arith.constant 0 : i32
    return %c0_i32, %c0_i32_0 : i32, i32
  }
  func.func @transform_3(%arg0: i32, %arg1: i32) -> (i32, i32) {
    %c0_i32 = arith.constant 0 : i32
    %c0_i32_0 = arith.constant 0 : i32
    return %arg0, %c0_i32 : i32, i32
  }
}

module attributes {stable_mosaic.version = 11 : i64} {
  func.func @_conv_matmul_kernel(%arg0: i32, %arg1: i32, %arg2: memref<128x512xbf16, #tpu.memory_space<vmem>>, %arg3: memref<512x128xbf16, #tpu.memory_space<vmem>>, %arg4: memref<1x128xf32, #tpu.memory_space<vmem>>, %arg5: memref<128x128xbf16, #tpu.memory_space<vmem>>, %arg6: memref<128x128xf32, #tpu.memory_space<vmem>>) attributes {dimension_semantics = [#tpu.dimension_semantics<parallel>, #tpu.dimension_semantics<arbitrary>], iteration_bounds = array<i64: 1, 2>, scalar_prefetch = 0 : i64, scratch_operands = 1 : i64, tpu.core_type = #tpu.core_type<tc>, window_params = [{transform_indices = @transform_0, window_bounds = array<i64: 128, 512>}, {transform_indices = @transform_1, window_bounds = array<i64: 512, 128>}, {pipeline_mode = #tpu.pipeline_mode<synchronous>, transform_indices = @transform_2, window_bounds = array<i64: 1, 128>}, {transform_indices = @transform_3, window_bounds = array<i64: 128, 128>}]} {
    %c0_i32 = arith.constant 0 : i32
    %0 = arith.cmpi eq, %arg1, %c0_i32 : i32
    %1 = arith.extui %0 : i1 to i32
    %c0_i32_0 = arith.constant 0 : i32
    %2 = arith.cmpi ne, %1, %c0_i32_0 : i32
    scf.if %2 {
      %cst_9 = arith.constant 0.000000e+00 : f32
      %12 = vector.broadcast %cst_9 : f32 to vector<128x128xf32>
      %c0_10 = arith.constant 0 : index
      %c0_11 = arith.constant 0 : index
      %13 = vector.load %arg6[%c0_10, %c0_11] : memref<128x128xf32, #tpu.memory_space<vmem>>, vector<128x128xf32>
      tpu.vector_store %arg6[%c0_10, %c0_11], %12 {strides = array<i32>} : memref<128x128xf32, #tpu.memory_space<vmem>>, vector<128x128xf32>,
    } else {
    }
    %c0 = arith.constant 0 : index
    %c0_1 = arith.constant 0 : index
    %3 = vector.load %arg6[%c0, %c0_1] : memref<128x128xf32, #tpu.memory_space<vmem>>, vector<128x128xf32>
    %c0_2 = arith.constant 0 : index
    %c0_3 = arith.constant 0 : index
    %4 = vector.load %arg2[%c0_2, %c0_3] : memref<128x512xbf16, #tpu.memory_space<vmem>>, vector<128x512xbf16>
    %c0_4 = arith.constant 0 : index
    %c0_5 = arith.constant 0 : index
    %5 = vector.load %arg3[%c0_4, %c0_5] : memref<512x128xbf16, #tpu.memory_space<vmem>>, vector<512x128xbf16>
    %cst = arith.constant dense<0.000000e+00> : vector<128x128xf32>
    %6 = tpu.matmul %4, %5, %cst {dimension_numbers = #tpu.dot_dimension_numbers<[1], [0], [0], [1], [0, 0, 1, 1], [], []>} : vector<128x512xbf16>, vector<512x128xbf16>, vector<128x128xf32> -> vector<128x128xf32>
    %7 = arith.addf %3, %6 : vector<128x128xf32>
    %c0_6 = arith.constant 0 : index
    %c0_7 = arith.constant 0 : index
    %8 = vector.load %arg6[%c0_6, %c0_7] : memref<128x128xf32, #tpu.memory_space<vmem>>, vector<128x128xf32>
    tpu.vector_store %arg6[%c0_6, %c0_7], %7 {strides = array<i32>} : memref<128x128xf32, #tpu.memory_space<vmem>>, vector<128x128xf32>,
    %c1_i32 = arith.constant 1 : i32
    %9 = arith.cmpi eq, %arg1, %c1_i32 : i32
    %10 = arith.extui %9 : i1 to i32
    %c0_i32_8 = arith.constant 0 : i32
    %11 = arith.cmpi ne, %10, %c0_i32_8 : i32
    scf.if %11 {
      %c0_9 = arith.constant 0 : index
      %c0_10 = arith.constant 0 : index
      %12 = vector.load %arg6[%c0_9, %c0_10] : memref<128x128xf32, #tpu.memory_space<vmem>>, vector<128x128xf32>
      %c0_11 = arith.constant 0 : index
      %c0_12 = arith.constant 0 : index
      %13 = vector.load %arg4[%c0_11, %c0_12] : memref<1x128xf32, #tpu.memory_space<vmem>>, vector<1x128xf32>
      %14 = vector.broadcast %13 : vector<1x128xf32> to vector<128x128xf32>
      %15 = arith.addf %12, %14 : vector<128x128xf32>
      %cst_13 = arith.constant 0.000000e+00 : f32
      %16 = vector.broadcast %cst_13 : f32 to vector<128x128xf32>
      %17 = arith.cmpf ogt, %15, %16 : vector<128x128xf32>
      %cst_14 = arith.constant 2.000000e-01 : f32
      %18 = vector.broadcast %cst_14 : f32 to vector<128x128xf32>
      %19 = arith.mulf %18, %15 : vector<128x128xf32>
      %20 = arith.select %17, %15, %19 : vector<128x128xi1>, vector<128x128xf32>
      %21 = arith.truncf %20 : vector<128x128xf32> to vector<128x128xbf16>
      %c0_15 = arith.constant 0 : index
      %c0_16 = arith.constant 0 : index
      %22 = vector.load %arg5[%c0_15, %c0_16] : memref<128x128xbf16, #tpu.memory_space<vmem>>, vector<128x128xbf16>
      tpu.vector_store %arg5[%c0_15, %c0_16], %21 {strides = array<i32>} : memref<128x128xbf16, #tpu.memory_space<vmem>>, vector<128x128xbf16>,
    } else {
    }
    return
  }
  func.func @transform_0(%arg0: i32, %arg1: i32) -> (i32, i32) {
    %c0_i32 = arith.constant 0 : i32
    return %arg0, %arg1 : i32, i32
  }
  func.func @transform_1(%arg0: i32, %arg1: i32) -> (i32, i32) {
    %c0_i32 = arith.constant 0 : i32
    %c0_i32_0 = arith.constant 0 : i32
    return %arg1, %c0_i32 : i32, i32
  }
  func.func @transform_2(%arg0: i32, %arg1: i32) -> (i32, i32) {
    %c0_i32 = arith.constant 0 : i32
    %c0_i32_0 = arith.constant 0 : i32
    %c0_i32_1 = arith.constant 0 : i32
    return %c0_i32, %c0_i32_0 : i32, i32
  }
  func.func @transform_3(%arg0: i32, %arg1: i32) -> (i32, i32) {
    %c0_i32 = arith.constant 0 : i32
    %c0_i32_0 = arith.constant 0 : i32
    return %arg0, %c0_i32 : i32, i32
  }
}

module attributes {stable_mosaic.version = 11 : i64} {
  func.func @_conv_matmul_kernel(%arg0: i32, %arg1: i32, %arg2: memref<32x512xbf16, #tpu.memory_space<vmem>>, %arg3: memref<512x256xbf16, #tpu.memory_space<vmem>>, %arg4: memref<1x256xf32, #tpu.memory_space<vmem>>, %arg5: memref<32x256xbf16, #tpu.memory_space<vmem>>, %arg6: memref<32x256xf32, #tpu.memory_space<vmem>>) attributes {dimension_semantics = [#tpu.dimension_semantics<parallel>, #tpu.dimension_semantics<arbitrary>], iteration_bounds = array<i64: 1, 4>, scalar_prefetch = 0 : i64, scratch_operands = 1 : i64, tpu.core_type = #tpu.core_type<tc>, window_params = [{transform_indices = @transform_0, window_bounds = array<i64: 32, 512>}, {transform_indices = @transform_1, window_bounds = array<i64: 512, 256>}, {pipeline_mode = #tpu.pipeline_mode<synchronous>, transform_indices = @transform_2, window_bounds = array<i64: 1, 256>}, {transform_indices = @transform_3, window_bounds = array<i64: 32, 256>}]} {
    %c0_i32 = arith.constant 0 : i32
    %0 = arith.cmpi eq, %arg1, %c0_i32 : i32
    %1 = arith.extui %0 : i1 to i32
    %c0_i32_0 = arith.constant 0 : i32
    %2 = arith.cmpi ne, %1, %c0_i32_0 : i32
    scf.if %2 {
      %cst_9 = arith.constant 0.000000e+00 : f32
      %12 = vector.broadcast %cst_9 : f32 to vector<32x256xf32>
      %c0_10 = arith.constant 0 : index
      %c0_11 = arith.constant 0 : index
      %13 = vector.load %arg6[%c0_10, %c0_11] : memref<32x256xf32, #tpu.memory_space<vmem>>, vector<32x256xf32>
      tpu.vector_store %arg6[%c0_10, %c0_11], %12 {strides = array<i32>} : memref<32x256xf32, #tpu.memory_space<vmem>>, vector<32x256xf32>,
    } else {
    }
    %c0 = arith.constant 0 : index
    %c0_1 = arith.constant 0 : index
    %3 = vector.load %arg6[%c0, %c0_1] : memref<32x256xf32, #tpu.memory_space<vmem>>, vector<32x256xf32>
    %c0_2 = arith.constant 0 : index
    %c0_3 = arith.constant 0 : index
    %4 = vector.load %arg2[%c0_2, %c0_3] : memref<32x512xbf16, #tpu.memory_space<vmem>>, vector<32x512xbf16>
    %c0_4 = arith.constant 0 : index
    %c0_5 = arith.constant 0 : index
    %5 = vector.load %arg3[%c0_4, %c0_5] : memref<512x256xbf16, #tpu.memory_space<vmem>>, vector<512x256xbf16>
    %cst = arith.constant dense<0.000000e+00> : vector<32x256xf32>
    %6 = tpu.matmul %4, %5, %cst {dimension_numbers = #tpu.dot_dimension_numbers<[1], [0], [0], [1], [0, 0, 1, 1], [], []>} : vector<32x512xbf16>, vector<512x256xbf16>, vector<32x256xf32> -> vector<32x256xf32>
    %7 = arith.addf %3, %6 : vector<32x256xf32>
    %c0_6 = arith.constant 0 : index
    %c0_7 = arith.constant 0 : index
    %8 = vector.load %arg6[%c0_6, %c0_7] : memref<32x256xf32, #tpu.memory_space<vmem>>, vector<32x256xf32>
    tpu.vector_store %arg6[%c0_6, %c0_7], %7 {strides = array<i32>} : memref<32x256xf32, #tpu.memory_space<vmem>>, vector<32x256xf32>,
    %c3_i32 = arith.constant 3 : i32
    %9 = arith.cmpi eq, %arg1, %c3_i32 : i32
    %10 = arith.extui %9 : i1 to i32
    %c0_i32_8 = arith.constant 0 : i32
    %11 = arith.cmpi ne, %10, %c0_i32_8 : i32
    scf.if %11 {
      %c0_9 = arith.constant 0 : index
      %c0_10 = arith.constant 0 : index
      %12 = vector.load %arg6[%c0_9, %c0_10] : memref<32x256xf32, #tpu.memory_space<vmem>>, vector<32x256xf32>
      %c0_11 = arith.constant 0 : index
      %c0_12 = arith.constant 0 : index
      %13 = vector.load %arg4[%c0_11, %c0_12] : memref<1x256xf32, #tpu.memory_space<vmem>>, vector<1x256xf32>
      %14 = vector.broadcast %13 : vector<1x256xf32> to vector<32x256xf32>
      %15 = arith.addf %12, %14 : vector<32x256xf32>
      %cst_13 = arith.constant 0.000000e+00 : f32
      %16 = vector.broadcast %cst_13 : f32 to vector<32x256xf32>
      %17 = arith.cmpf ogt, %15, %16 : vector<32x256xf32>
      %cst_14 = arith.constant 2.000000e-01 : f32
      %18 = vector.broadcast %cst_14 : f32 to vector<32x256xf32>
      %19 = arith.mulf %18, %15 : vector<32x256xf32>
      %20 = arith.select %17, %15, %19 : vector<32x256xi1>, vector<32x256xf32>
      %21 = arith.truncf %20 : vector<32x256xf32> to vector<32x256xbf16>
      %c0_15 = arith.constant 0 : index
      %c0_16 = arith.constant 0 : index
      %22 = vector.load %arg5[%c0_15, %c0_16] : memref<32x256xbf16, #tpu.memory_space<vmem>>, vector<32x256xbf16>
      tpu.vector_store %arg5[%c0_15, %c0_16], %21 {strides = array<i32>} : memref<32x256xbf16, #tpu.memory_space<vmem>>, vector<32x256xbf16>,
    } else {
    }
    return
  }
  func.func @transform_0(%arg0: i32, %arg1: i32) -> (i32, i32) {
    %c0_i32 = arith.constant 0 : i32
    return %arg0, %arg1 : i32, i32
  }
  func.func @transform_1(%arg0: i32, %arg1: i32) -> (i32, i32) {
    %c0_i32 = arith.constant 0 : i32
    %c0_i32_0 = arith.constant 0 : i32
    return %arg1, %c0_i32 : i32, i32
  }
  func.func @transform_2(%arg0: i32, %arg1: i32) -> (i32, i32) {
    %c0_i32 = arith.constant 0 : i32
    %c0_i32_0 = arith.constant 0 : i32
    %c0_i32_1 = arith.constant 0 : i32
    return %c0_i32, %c0_i32_0 : i32, i32
  }
  func.func @transform_3(%arg0: i32, %arg1: i32) -> (i32, i32) {
    %c0_i32 = arith.constant 0 : i32
    %c0_i32_0 = arith.constant 0 : i32
    return %arg0, %c0_i32 : i32, i32
  }
}

module attributes {stable_mosaic.version = 11 : i64} {
  func.func @_fused_c45_kernel(%arg0: i32, %arg1: memref<8x512xbf16, #tpu.memory_space<vmem>>, %arg2: memref<512x128xbf16, #tpu.memory_space<vmem>>, %arg3: memref<1x128xf32, #tpu.memory_space<vmem>>, %arg4: memref<128x128xbf16, #tpu.memory_space<vmem>>, %arg5: memref<1x128xf32, #tpu.memory_space<vmem>>, %arg6: memref<8x128xf32, #tpu.memory_space<vmem>>, %arg7: memref<8x128xf32, #tpu.memory_space<vmem>>) attributes {dimension_semantics = [#tpu.dimension_semantics<arbitrary>], iteration_bounds = array<i64: 8>, scalar_prefetch = 0 : i64, scratch_operands = 1 : i64, tpu.core_type = #tpu.core_type<tc>, window_params = [{transform_indices = @transform_0, window_bounds = array<i64: 8, 512>}, {transform_indices = @transform_1, window_bounds = array<i64: 512, 128>}, {pipeline_mode = #tpu.pipeline_mode<synchronous>, transform_indices = @transform_2, window_bounds = array<i64: 1, 128>}, {pipeline_mode = #tpu.pipeline_mode<synchronous>, transform_indices = @transform_3, window_bounds = array<i64: 128, 128>}, {pipeline_mode = #tpu.pipeline_mode<synchronous>, transform_indices = @transform_4, window_bounds = array<i64: 1, 128>}, {pipeline_mode = #tpu.pipeline_mode<synchronous>, transform_indices = @transform_5, window_bounds = array<i64: 8, 128>}]} {
    %c0_i32 = arith.constant 0 : i32
    %0 = arith.cmpi eq, %arg0, %c0_i32 : i32
    %1 = arith.extui %0 : i1 to i32
    %c0_i32_0 = arith.constant 0 : i32
    %2 = arith.cmpi ne, %1, %c0_i32_0 : i32
    scf.if %2 {
      %cst_9 = arith.constant 0.000000e+00 : f32
      %12 = vector.broadcast %cst_9 : f32 to vector<8x128xf32>
      %c0_10 = arith.constant 0 : index
      %c0_11 = arith.constant 0 : index
      %13 = vector.load %arg7[%c0_10, %c0_11] : memref<8x128xf32, #tpu.memory_space<vmem>>, vector<8x128xf32>
      tpu.vector_store %arg7[%c0_10, %c0_11], %12 {strides = array<i32>} : memref<8x128xf32, #tpu.memory_space<vmem>>, vector<8x128xf32>,
    } else {
    }
    %c0 = arith.constant 0 : index
    %c0_1 = arith.constant 0 : index
    %3 = vector.load %arg7[%c0, %c0_1] : memref<8x128xf32, #tpu.memory_space<vmem>>, vector<8x128xf32>
    %c0_2 = arith.constant 0 : index
    %c0_3 = arith.constant 0 : index
    %4 = vector.load %arg1[%c0_2, %c0_3] : memref<8x512xbf16, #tpu.memory_space<vmem>>, vector<8x512xbf16>
    %c0_4 = arith.constant 0 : index
    %c0_5 = arith.constant 0 : index
    %5 = vector.load %arg2[%c0_4, %c0_5] : memref<512x128xbf16, #tpu.memory_space<vmem>>, vector<512x128xbf16>
    %cst = arith.constant dense<0.000000e+00> : vector<8x128xf32>
    %6 = tpu.matmul %4, %5, %cst {dimension_numbers = #tpu.dot_dimension_numbers<[1], [0], [0], [1], [0, 0, 1, 1], [], []>} : vector<8x512xbf16>, vector<512x128xbf16>, vector<8x128xf32> -> vector<8x128xf32>
    %7 = arith.addf %3, %6 : vector<8x128xf32>
    %c0_6 = arith.constant 0 : index
    %c0_7 = arith.constant 0 : index
    %8 = vector.load %arg7[%c0_6, %c0_7] : memref<8x128xf32, #tpu.memory_space<vmem>>, vector<8x128xf32>
    tpu.vector_store %arg7[%c0_6, %c0_7], %7 {strides = array<i32>} : memref<8x128xf32, #tpu.memory_space<vmem>>, vector<8x128xf32>,
    %c7_i32 = arith.constant 7 : i32
    %9 = arith.cmpi eq, %arg0, %c7_i32 : i32
    %10 = arith.extui %9 : i1 to i32
    %c0_i32_8 = arith.constant 0 : i32
    %11 = arith.cmpi ne, %10, %c0_i32_8 : i32
    scf.if %11 {
      %c0_9 = arith.constant 0 : index
      %c0_10 = arith.constant 0 : index
      %12 = vector.load %arg7[%c0_9, %c0_10] : memref<8x128xf32, #tpu.memory_space<vmem>>, vector<8x128xf32>
      %c0_11 = arith.constant 0 : index
      %c0_12 = arith.constant 0 : index
      %13 = vector.load %arg3[%c0_11, %c0_12] : memref<1x128xf32, #tpu.memory_space<vmem>>, vector<1x128xf32>
      %14 = vector.broadcast %13 : vector<1x128xf32> to vector<8x128xf32>
      %15 = arith.addf %12, %14 : vector<8x128xf32>
      %cst_13 = arith.constant 0.000000e+00 : f32
      %16 = vector.broadcast %cst_13 : f32 to vector<8x128xf32>
      %17 = arith.cmpf ogt, %15, %16 : vector<8x128xf32>
      %cst_14 = arith.constant 2.000000e-01 : f32
      %18 = vector.broadcast %cst_14 : f32 to vector<8x128xf32>
      %19 = arith.mulf %18, %15 : vector<8x128xf32>
      %20 = arith.select %17, %15, %19 : vector<8x128xi1>, vector<8x128xf32>
      %21 = arith.truncf %20 : vector<8x128xf32> to vector<8x128xbf16>
      %c0_15 = arith.constant 0 : index
      %c0_16 = arith.constant 0 : index
      %22 = vector.load %arg4[%c0_15, %c0_16] : memref<128x128xbf16, #tpu.memory_space<vmem>>, vector<128x128xbf16>
      %cst_17 = arith.constant dense<0.000000e+00> : vector<8x128xf32>
      %23 = tpu.matmul %21, %22, %cst_17 {dimension_numbers = #tpu.dot_dimension_numbers<[1], [0], [0], [1], [0, 0, 1, 1], [], []>} : vector<8x128xbf16>, vector<128x128xbf16>, vector<8x128xf32> -> vector<8x128xf32>
      %c0_18 = arith.constant 0 : index
      %c0_19 = arith.constant 0 : index
      %24 = vector.load %arg5[%c0_18, %c0_19] : memref<1x128xf32, #tpu.memory_space<vmem>>, vector<1x128xf32>
      %25 = vector.broadcast %24 : vector<1x128xf32> to vector<8x128xf32>
      %26 = arith.addf %23, %25 : vector<8x128xf32>
      %c0_20 = arith.constant 0 : index
      %c0_21 = arith.constant 0 : index
      %27 = vector.load %arg6[%c0_20, %c0_21] : memref<8x128xf32, #tpu.memory_space<vmem>>, vector<8x128xf32>
      tpu.vector_store %arg6[%c0_20, %c0_21], %26 {strides = array<i32>} : memref<8x128xf32, #tpu.memory_space<vmem>>, vector<8x128xf32>,
    } else {
    }
    return
  }
  func.func @transform_0(%arg0: i32) -> (i32, i32) {
    %c0_i32 = arith.constant 0 : i32
    %c0_i32_0 = arith.constant 0 : i32
    return %c0_i32, %arg0 : i32, i32
  }
  func.func @transform_1(%arg0: i32) -> (i32, i32) {
    %c0_i32 = arith.constant 0 : i32
    %c0_i32_0 = arith.constant 0 : i32
    return %arg0, %c0_i32 : i32, i32
  }
  func.func @transform_2(%arg0: i32) -> (i32, i32) {
    %c0_i32 = arith.constant 0 : i32
    %c0_i32_0 = arith.constant 0 : i32
    %c0_i32_1 = arith.constant 0 : i32
    return %c0_i32, %c0_i32_0 : i32, i32
  }
  func.func @transform_3(%arg0: i32) -> (i32, i32) {
    %c0_i32 = arith.constant 0 : i32
    %c0_i32_0 = arith.constant 0 : i32
    %c0_i32_1 = arith.constant 0 : i32
    return %c0_i32, %c0_i32_0 : i32, i32
  }
  func.func @transform_4(%arg0: i32) -> (i32, i32) {
    %c0_i32 = arith.constant 0 : i32
    %c0_i32_0 = arith.constant 0 : i32
    %c0_i32_1 = arith.constant 0 : i32
    return %c0_i32, %c0_i32_0 : i32, i32
  }
  func.func @transform_5(%arg0: i32) -> (i32, i32) {
    %c0_i32 = arith.constant 0 : i32
    %c0_i32_0 = arith.constant 0 : i32
    %c0_i32_1 = arith.constant 0 : i32
    return %c0_i32, %c0_i32_0 : i32, i32
  }
}

</mosaic_0001>

<llo_original>
// kernel: _lambda_.4
$region0: #{_lambda_.4}
  #allocation0 [shape = 'u32[]', space=smem, size = 0x4, offset = 0x4, fixed_abs, tag = 'smem constant byte address 0x4 - core index']
  #allocation1 [shape = 'u32[144,128]{1,0:T(1,128)}', space=vmem, size = 0x12000, scoped, tag = 'internal scratch']
  #allocation2 [shape = 'f32[256,64]{1,0:T(8,128)}', space=vmem, size = 0x20000, scoped, tag = 'scratch operand']
  %s0 = inlined_call_operand.vmem [shape: bf16[512,16], index: 0, kind: input, shape index: {}]
  %s1 = inlined_call_operand.vmem [shape: bf16[16,64], index: 1, kind: input, shape index: {}]
  %s2 = inlined_call_operand.vmem [shape: f32[1,64], index: 2, kind: input, shape index: {}]
  %s3 = inlined_call_operand.vmem [shape: bf16[512,64], index: 3, kind: output, shape index: {}]
  %s4 = sld [smem:[#allocation0]]
  $region53: #{_lambda_.4} parent=0
    _
  %s6 = ssub.s32 1, %s4
  %s7 = scalar_select 0, %s6, %s4
  loop: start=0, step=1, limit=4
  $region2: #{_lambda_.4} parent=0 // loop_pre_header
    _
  $region3: #{_lambda_.4} parent=0 // loop_header
    %s9 = sphi 0, %s13
    %p10 = scmp.ge.s32.totalorder %s9, 4
    %s16 = sphi 0, %s28
    %s17 = sphi 0, %s24
    %s18 = sphi 0, %s16
    %s19 = sphi 0, %s17
    %s20 = sphi 0, %s18
    %s21 = sphi 0, %s19
    %s33 = sphi 0, %s35
    %s36 = sphi 0, %s33
    %s37 = sphi 0, %s36
    %s53 = sphi 0, %s37
    %s59 = sphi 0, %s61
    %s62 = sphi 0, %s59
    %s63 = sphi 0, %s62
    %s79 = sphi 0, %s63
    %s83 = sphi 0, %s83
    %s85 = sphi 0, %s83
    %s86 = sphi 0, %s85
    %s100 = sphi 0, %s86
    %s106 = sphi 0, %s108
    %s109 = sphi 0, %s106
    %s110 = sphi 0, %s109
    %s126 = sphi 0, %s110
  $region4: #{_lambda_.4} parent=0 // loop_header_branch
    %12 = sbr.rel (%p10) target = $region8
  $region5: #{_lambda_.4} parent=0 // loop_body
    %s14 = ssub.s32 %s9, 1
    %s15 = ssub.s32 %s9, 2
    %s22 = sadd.s32 1, %s17
    %p23 = scmp.ge.s32.totalorder %s22, 1
    %s24 = scalar_select %p23, 0, %s22
    %s25 = sadd.s32 1, %s16
    %s26 = scalar_select %p23, %s25, %s16
    %p27 = scmp.ge.s32.totalorder %s26, 2
    %s28 = scalar_select %p27, 0, %s26
    %s29 = ssub.s32 %s16, %s28
    %s30 = ssub.s32 %s17, %s24
    %s31 = sor.u32 %s29, %s30
    %p32 = scmp.eq.s32.totalorder %s31, 0
    %s34 = sadd.s32 %s33, 1
    %s35 = scalar_select %p32, %s33, %s34
    %p38 = pneg %p32
    %p39 = scmp.eq.s32.totalorder %s9, 1
    %p40 = por %p38, %p39
    %p41 = scmp.ne.s32.totalorder %s33, %s36
    %p42 = scmp.eq.s32.totalorder %s9, 0
    %p43 = por %p41, %p42
    %p44 = scmp.ne.s32.totalorder %s33, %s36
    %p45 = scmp.eq.s32.totalorder %s14, 1
    %p46 = por %p44, %p45
    %p47 = scmp.ne.s32.totalorder %s36, %s37
    %p48 = scmp.eq.s32.totalorder %s14, 0
    %p49 = por %p47, %p48
    %p50 = scmp.ne.s32.totalorder %s36, %s37
    %p51 = scmp.eq.s32.totalorder %s15, 1
    %p52 = por %p50, %p51
    %p54 = scmp.ne.s32.totalorder %s37, %s53
    %p55 = scmp.eq.s32.totalorder %s15, 0
    %p56 = por %p54, %p55
    %s57 = ssub.s32 %s17, %s24
    %p58 = scmp.eq.s32.totalorder %s57, 0
    %s60 = sadd.s32 %s59, 1
    %s61 = scalar_select %p58, %s59, %s60
    %p64 = pneg %p58
    %p65 = scmp.eq.s32.totalorder %s9, 1
    %p66 = por %p64, %p65
    %p67 = scmp.ne.s32.totalorder %s59, %s62
    %p68 = scmp.eq.s32.totalorder %s9, 0
    %p69 = por %p67, %p68
    %p70 = scmp.ne.s32.totalorder %s59, %s62
    %p71 = scmp.eq.s32.totalorder %s14, 1
    %p72 = por %p70, %p71
    %p73 = scmp.ne.s32.totalorder %s62, %s63
    %p74 = scmp.eq.s32.totalorder %s14, 0
    %p75 = por %p73, %p74
    %p76 = scmp.ne.s32.totalorder %s62, %s63
    %p77 = scmp.eq.s32.totalorder %s15, 1
    %p78 = por %p76, %p77
    %p80 = scmp.ne.s32.totalorder %s63, %s79
    %p81 = scmp.eq.s32.totalorder %s15, 0
    %p82 = por %p80, %p81
    %s84 = sadd.s32 %s83, 1
    %p87 = scmp.eq.s32.totalorder %s9, 1
    %p88 = scmp.ne.s32.totalorder %s83, %s85
    %p89 = scmp.eq.s32.totalorder %s9, 0
    %p90 = por %p88, %p89
    %p91 = scmp.ne.s32.totalorder %s83, %s85
    %p92 = scmp.eq.s32.totalorder %s14, 1
    %p93 = por %p91, %p92
    %p94 = scmp.ne.s32.totalorder %s85, %s86
    %p95 = scmp.eq.s32.totalorder %s14, 0
    %p96 = por %p94, %p95
    %p97 = scmp.ne.s32.totalorder %s85, %s86
    %p98 = scmp.eq.s32.totalorder %s15, 1
    %p99 = por %p97, %p98
    %p101 = scmp.ne.s32.totalorder %s86, %s100
    %p102 = scmp.eq.s32.totalorder %s15, 0
    %p103 = por %p101, %p102
    %s104 = ssub.s32 %s16, %s28
    %p105 = scmp.eq.s32.totalorder %s104, 0
    %s107 = sadd.s32 %s106, 1
    %s108 = scalar_select %p105, %s106, %s107
    %p111 = pneg %p105
    %p112 = scmp.eq.s32.totalorder %s9, 1
    %p113 = por %p111, %p112
    %p114 = scmp.ne.s32.totalorder %s106, %s109
    %p115 = scmp.eq.s32.totalorder %s9, 0
    %p116 = por %p114, %p115
    %p117 = scmp.ne.s32.totalorder %s106, %s109
    %p118 = scmp.eq.s32.totalorder %s14, 1
    %p119 = por %p117, %p118
    %p120 = scmp.ne.s32.totalorder %s109, %s110
    %p121 = scmp.eq.s32.totalorder %s14, 0
    %p122 = por %p120, %p121
    %p123 = scmp.ne.s32.totalorder %s109, %s110
    %p124 = scmp.eq.s32.totalorder %s15, 1
    %p125 = por %p123, %p124
    %p127 = scmp.ne.s32.totalorder %s110, %s126
    %p128 = scmp.eq.s32.totalorder %s15, 0
    %p129 = por %p127, %p128
    %p130 = scmp.le.s32.totalorder 1, %s9
    %p131 = scmp.lt.s32.totalorder %s9, 3
    %p132 = pnand %p130, %p131
    %p133 = pneg %p132
    // Predicated region
    $region9: #{_lambda_.4} parent=5 // pred_check
      _
    $region10: #{_lambda_.4} parent=5 // pred_check_branch
      %135 = sbr.rel (%p132) target = $region12
    $region11: #{_lambda_.4} parent=5 // pred_region
      %s136 = ssub.s32 %s9, 1
      // Predicated region
      $region13: #{_lambda_.4} parent=11 // pred_check
        %p137 = pneg %p75
      $region14: #{_lambda_.4} parent=11 // pred_check_branch
        %139 = sbr.rel (%p137) target = $region16
      $region15: #{_lambda_.4} parent=11 // pred_region
        %s140 = smul.u32 2, %s19
        %p141 = scmp.lt.s32.totalorder %s140, 1
        %s142 = scalar_select %p141, %s140, 1
        %s143 = smul.addr %s142, 4
        %s144 = scalar_lea.vmem %s1, %s143
        %s145 = smul.u32 2, %s19
      $region16: #{_lambda_.4} parent=11 // pred_fallthru
        _
      // Predicated region
      $region17: #{_lambda_.4} parent=11 // pred_check
        %p146 = pneg %p96
      $region18: #{_lambda_.4} parent=11 // pred_check_branch
        %148 = sbr.rel (%p146) target = $region20
      $region19: #{_lambda_.4} parent=11 // pred_region
        _
      $region20: #{_lambda_.4} parent=11 // pred_fallthru
        _
    $region12: #{_lambda_.4} parent=5 // pred_fallthru
      _
    %p149 = scmp.lt.s32.totalorder %s9, 2
    // Predicated region
    $region21: #{_lambda_.4} parent=5 // pred_check
      %p150 = pneg %p149
    $region22: #{_lambda_.4} parent=5 // pred_check_branch
      %152 = sbr.rel (%p150) target = $region24
    $region23: #{_lambda_.4} parent=5 // pred_region
      // Predicated region
      $region25: #{_lambda_.4} parent=23 // pred_check
        %p153 = pneg %p43
      $region26: #{_lambda_.4} parent=23 // pred_check_branch
        %155 = sbr.rel (%p153) target = $region28
      $region27: #{_lambda_.4} parent=23 // pred_region
        %s156 = smul.u32 32, %s16
        %p157 = scmp.lt.s32.totalorder %s156, 63
        %s158 = scalar_select %p157, %s156, 63
        %p159 = scmp.lt.s32.totalorder %s17, 0
        %s160 = scalar_select %p159, %s17, 0
        %s161 = sadd.s32 %s160, %s158
        %s162 = smul.addr %s161, 4
        %s163 = scalar_lea.vmem %s0, %s162
        %s164 = smul.u32 32, %s16
      $region28: #{_lambda_.4} parent=23 // pred_fallthru
        _
    $region24: #{_lambda_.4} parent=5 // pred_fallthru
      _
    %p165 = scmp.le.s32.totalorder 1, %s9
    %p166 = scmp.lt.s32.totalorder %s9, 3
    %p167 = pnand %p165, %p166
    %p168 = pneg %p167
    // Predicated region
    $region29: #{_lambda_.4} parent=5 // pred_check
      _
    $region30: #{_lambda_.4} parent=5 // pred_check_branch
      %170 = sbr.rel (%p167) target = $region32
    $region31: #{_lambda_.4} parent=5 // pred_region
      %s171 = ssub.s32 %s9, 1
      %s172 = smul.u32 32, %s18
      %p173 = scmp.lt.s32.totalorder %s172, 63
      %s174 = scalar_select %p173, %s172, 63
      %p175 = scmp.lt.s32.totalorder %s19, 0
      %s176 = scalar_select %p175, %s19, 0
      %s177 = sadd.s32 %s176, %s174
      %s178 = smul.addr %s177, 4
      %s179 = scalar_lea.vmem %s0, %s178
      %p180 = pneg %p49
      %p181 = pneg %p46
      %s182 = smul.u32 2, %s19
      %p183 = scmp.lt.s32.totalorder %s182, 1
      %s184 = scalar_select %p183, %s182, 1
      %s185 = smul.addr %s184, 4
      %s186 = scalar_lea.vmem %s1, %s185
      %p187 = pneg %p75
      %p188 = pneg %p72
      %p189 = pneg %p96
      %p190 = pneg %p93
      %p191 = pneg %p122
      %p192 = pneg %p119
      %s193 = smul.u32 32, %s18
      %p194 = scmp.lt.s32.totalorder %s193, 63
      %s195 = scalar_select %p194, %s193, 63
      %s196 = smul.addr %s195, 4
      %s197 = scalar_lea.vmem %s3, %s196
      %s198 = smul.u32 32, %s18
      %p199 = scmp.lt.s32.totalorder %s198, 63
      %s200 = scalar_select %p199, %s198, 63
      %p201 = scmp.lt.s32.totalorder %s19, 0
      %s202 = scalar_select %p201, %s19, 0
      %s203 = sadd.s32 %s202, %s200
      %s204 = smul.addr %s203, 4
      %s205 = scalar_lea.vmem %s0, %s204
      %s206 = smul.u32 32, %s18
      %s207 = smul.u32 2, %s19
      %p208 = scmp.lt.s32.totalorder %s207, 1
      %s209 = scalar_select %p208, %s207, 1
      %s210 = smul.addr %s209, 4
      %s211 = scalar_lea.vmem %s1, %s210
      %s212 = smul.u32 2, %s19
      %s213 = smul.u32 32, %s18
      %p214 = scmp.lt.s32.totalorder %s213, 63
      %s215 = scalar_select %p214, %s213, 63
      %s216 = smul.addr %s215, 4
      %s217 = scalar_lea.vmem %s3, %s216
      %s218 = smul.u32 32, %s18
      %p220 = scmp.eq.s32.totalorder %s19, 0
      // Predicated region
      $region33: #{_lambda_.4} parent=31 // pred_check
        %p221 = pneg %p220
      $region34: #{_lambda_.4} parent=31 // pred_check_branch
        %223 = sbr.rel (%p221) target = $region36
      $region35: #{_lambda_.4} parent=31 // pred_region
        %vm224 = vcmask 523264
        %225 = vst.msk [vmem:[#allocation2] sm:$0xff] %vm224, 0.0
        %226 = vst.msk [vmem:[#allocation2 + $0x8] sm:$0xff] %vm224, 0.0
        %227 = vst.msk [vmem:[#allocation2 + $0x10] sm:$0xff] %vm224, 0.0
        %228 = vst.msk [vmem:[#allocation2 + $0x18] sm:$0xff] %vm224, 0.0
        %229 = vst.msk [vmem:[#allocation2 + $0x20] sm:$0xff] %vm224, 0.0
        %230 = vst.msk [vmem:[#allocation2 + $0x28] sm:$0xff] %vm224, 0.0
        %231 = vst.msk [vmem:[#allocation2 + $0x30] sm:$0xff] %vm224, 0.0
        %232 = vst.msk [vmem:[#allocation2 + $0x38] sm:$0xff] %vm224, 0.0
        %233 = vst.msk [vmem:[#allocation2 + $0x40] sm:$0xff] %vm224, 0.0
        %234 = vst.msk [vmem:[#allocation2 + $0x48] sm:$0xff] %vm224, 0.0
        %235 = vst.msk [vmem:[#allocation2 + $0x50] sm:$0xff] %vm224, 0.0
        %236 = vst.msk [vmem:[#allocation2 + $0x58] sm:$0xff] %vm224, 0.0
        %237 = vst.msk [vmem:[#allocation2 + $0x60] sm:$0xff] %vm224, 0.0
        %238 = vst.msk [vmem:[#allocation2 + $0x68] sm:$0xff] %vm224, 0.0
        %239 = vst.msk [vmem:[#allocation2 + $0x70] sm:$0xff] %vm224, 0.0
        %240 = vst.msk [vmem:[#allocation2 + $0x78] sm:$0xff] %vm224, 0.0
        %241 = vst.msk [vmem:[#allocation2 + $0x80] sm:$0xff] %vm224, 0.0
        %242 = vst.msk [vmem:[#allocation2 + $0x88] sm:$0xff] %vm224, 0.0
        %243 = vst.msk [vmem:[#allocation2 + $0x90] sm:$0xff] %vm224, 0.0
        %244 = vst.msk [vmem:[#allocation2 + $0x98] sm:$0xff] %vm224, 0.0
        %245 = vst.msk [vmem:[#allocation2 + $0xa0] sm:$0xff] %vm224, 0.0
        %246 = vst.msk [vmem:[#allocation2 + $0xa8] sm:$0xff] %vm224, 0.0
        %247 = vst.msk [vmem:[#allocation2 + $0xb0] sm:$0xff] %vm224, 0.0
        %248 = vst.msk [vmem:[#allocation2 + $0xb8] sm:$0xff] %vm224, 0.0
        %249 = vst.msk [vmem:[#allocation2 + $0xc0] sm:$0xff] %vm224, 0.0
        %250 = vst.msk [vmem:[#allocation2 + $0xc8] sm:$0xff] %vm224, 0.0
        %251 = vst.msk [vmem:[#allocation2 + $0xd0] sm:$0xff] %vm224, 0.0
        %252 = vst.msk [vmem:[#allocation2 + $0xd8] sm:$0xff] %vm224, 0.0
        %253 = vst.msk [vmem:[#allocation2 + $0xe0] sm:$0xff] %vm224, 0.0
        %254 = vst.msk [vmem:[#allocation2 + $0xe8] sm:$0xff] %vm224, 0.0
        %255 = vst.msk [vmem:[#allocation2 + $0xf0] sm:$0xff] %vm224, 0.0
        %256 = vst.msk [vmem:[#allocation2 + $0xf8] sm:$0xff] %vm224, 0.0
      $region36: #{_lambda_.4} parent=31 // pred_fallthru
        _
      %v257 = vld [vmem:[#allocation2] sm:$0xff]
      %v258 = vld [vmem:[#allocation2 + $0x8] sm:$0xff]
      %v259 = vld [vmem:[#allocation2 + $0x10] sm:$0xff]
      %v260 = vld [vmem:[#allocation2 + $0x18] sm:$0xff]
      %v261 = vld [vmem:[#allocation2 + $0x20] sm:$0xff]
      %v262 = vld [vmem:[#allocation2 + $0x28] sm:$0xff]
      %v263 = vld [vmem:[#allocation2 + $0x30] sm:$0xff]
      %v264 = vld [vmem:[#allocation2 + $0x38] sm:$0xff]
      %v265 = vld [vmem:[#allocation2 + $0x40] sm:$0xff]
      %v266 = vld [vmem:[#allocation2 + $0x48] sm:$0xff]
      %v267 = vld [vmem:[#allocation2 + $0x50] sm:$0xff]
      %v268 = vld [vmem:[#allocation2 + $0x58] sm:$0xff]
      %v269 = vld [vmem:[#allocation2 + $0x60] sm:$0xff]
      %v270 = vld [vmem:[#allocation2 + $0x68] sm:$0xff]
      %v271 = vld [vmem:[#allocation2 + $0x70] sm:$0xff]
      %v272 = vld [vmem:[#allocation2 + $0x78] sm:$0xff]
      %v273 = vld [vmem:[#allocation2 + $0x80] sm:$0xff]
      %v274 = vld [vmem:[#allocation2 + $0x88] sm:$0xff]
      %v275 = vld [vmem:[#allocation2 + $0x90] sm:$0xff]
      %v276 = vld [vmem:[#allocation2 + $0x98] sm:$0xff]
      %v277 = vld [vmem:[#allocation2 + $0xa0] sm:$0xff]
      %v278 = vld [vmem:[#allocation2 + $0xa8] sm:$0xff]
      %v279 = vld [vmem:[#allocation2 + $0xb0] sm:$0xff]
      %v280 = vld [vmem:[#allocation2 + $0xb8] sm:$0xff]
      %v281 = vld [vmem:[#allocation2 + $0xc0] sm:$0xff]
      %v282 = vld [vmem:[#allocation2 + $0xc8] sm:$0xff]
      %v283 = vld [vmem:[#allocation2 + $0xd0] sm:$0xff]
      %v284 = vld [vmem:[#allocation2 + $0xd8] sm:$0xff]
      %v285 = vld [vmem:[#allocation2 + $0xe0] sm:$0xff]
      %v286 = vld [vmem:[#allocation2 + $0xe8] sm:$0xff]
      %v287 = vld [vmem:[#allocation2 + $0xf0] sm:$0xff]
      %v288 = vld [vmem:[#allocation2 + $0xf8] sm:$0xff]
      %v289 = vld [vmem:[%s205] sm:$0xf]
      %v290 = vld [vmem:[%s205 + $0x4] sm:$0xf]
      %v291 = vld [vmem:[%s205 + $0x8] sm:$0xf]
      %v292 = vld [vmem:[%s205 + $0xc] sm:$0xf]
      %v293 = vld [vmem:[%s205 + $0x10] sm:$0xf]
      %v294 = vld [vmem:[%s205 + $0x14] sm:$0xf]
      %v295 = vld [vmem:[%s205 + $0x18] sm:$0xf]
      %v296 = vld [vmem:[%s205 + $0x1c] sm:$0xf]
      %v297 = vld [vmem:[%s205 + $0x20] sm:$0xf]
      %v298 = vld [vmem:[%s205 + $0x24] sm:$0xf]
      %v299 = vld [vmem:[%s205 + $0x28] sm:$0xf]
      %v300 = vld [vmem:[%s205 + $0x2c] sm:$0xf]
      %v301 = vld [vmem:[%s205 + $0x30] sm:$0xf]
      %v302 = vld [vmem:[%s205 + $0x34] sm:$0xf]
      %v303 = vld [vmem:[%s205 + $0x38] sm:$0xf]
      %v304 = vld [vmem:[%s205 + $0x3c] sm:$0xf]
      %v305 = vld [vmem:[%s205 + $0x40] sm:$0xf]
      %v306 = vld [vmem:[%s205 + $0x44] sm:$0xf]
      %v307 = vld [vmem:[%s205 + $0x48] sm:$0xf]
      %v308 = vld [vmem:[%s205 + $0x4c] sm:$0xf]
      %v309 = vld [vmem:[%s205 + $0x50] sm:$0xf]
      %v310 = vld [vmem:[%s205 + $0x54] sm:$0xf]
      %v311 = vld [vmem:[%s205 + $0x58] sm:$0xf]
      %v312 = vld [vmem:[%s205 + $0x5c] sm:$0xf]
      %v313 = vld [vmem:[%s205 + $0x60] sm:$0xf]
      %v314 = vld [vmem:[%s205 + $0x64] sm:$0xf]
      %v315 = vld [vmem:[%s205 + $0x68] sm:$0xf]
      %v316 = vld [vmem:[%s205 + $0x6c] sm:$0xf]
      %v317 = vld [vmem:[%s205 + $0x70] sm:$0xf]
      %v318 = vld [vmem:[%s205 + $0x74] sm:$0xf]
      %v319 = vld [vmem:[%s205 + $0x78] sm:$0xf]
      %v320 = vld [vmem:[%s205 + $0x7c] sm:$0xf]
      %v321 = vld [vmem:[%s211] sm:$0xf]
      %v322 = vld [vmem:[%s211 + $0x4] sm:$0xf]
      %v355 = vunpack.c.l.b16 %v289
      %v356 = vunpack.c.l.b16 %v290
      %v357 = vunpack.c.l.b16 %v291
      %v358 = vunpack.c.l.b16 %v292
      %v359 = vunpack.c.l.b16 %v293
      %v360 = vunpack.c.l.b16 %v294
      %v361 = vunpack.c.l.b16 %v295
      %v362 = vunpack.c.l.b16 %v296
      %v363 = vunpack.c.l.b16 %v297
      %v364 = vunpack.c.l.b16 %v298
      %v365 = vunpack.c.l.b16 %v299
      %v366 = vunpack.c.l.b16 %v300
      %v367 = vunpack.c.l.b16 %v301
      %v368 = vunpack.c.l.b16 %v302
      %v369 = vunpack.c.l.b16 %v303
      %v370 = vunpack.c.l.b16 %v304
      %v371 = vunpack.c.l.b16 %v305
      %v372 = vunpack.c.l.b16 %v306
      %v373 = vunpack.c.l.b16 %v307
      %v374 = vunpack.c.l.b16 %v308
      %v375 = vunpack.c.l.b16 %v309
      %v376 = vunpack.c.l.b16 %v310
      %v377 = vunpack.c.l.b16 %v311
      %v378 = vunpack.c.l.b16 %v312
      %v379 = vunpack.c.l.b16 %v313
      %v380 = vunpack.c.l.b16 %v314
      %v381 = vunpack.c.l.b16 %v315
      %v382 = vunpack.c.l.b16 %v316
      %v383 = vunpack.c.l.b16 %v317
      %v384 = vunpack.c.l.b16 %v318
      %v385 = vunpack.c.l.b16 %v319
      %v386 = vunpack.c.l.b16 %v320
      %v387 = vpack.c.b16 %v356, %v355
      %v388 = vpack.c.b16 %v358, %v357
      %v389 = vpack.c.b16 %v360, %v359
      %v390 = vpack.c.b16 %v362, %v361
      %v391 = vpack.c.b16 %v364, %v363
      %v392 = vpack.c.b16 %v366, %v365
      %v393 = vpack.c.b16 %v368, %v367
      %v394 = vpack.c.b16 %v370, %v369
      %v395 = vpack.c.b16 %v372, %v371
      %v396 = vpack.c.b16 %v374, %v373
      %v397 = vpack.c.b16 %v376, %v375
      %v398 = vpack.c.b16 %v378, %v377
      %v399 = vpack.c.b16 %v380, %v379
      %v400 = vpack.c.b16 %v382, %v381
      %v401 = vpack.c.b16 %v384, %v383
      %v402 = vpack.c.b16 %v386, %v385
      %v405 = vunpack.c.l.b16 %v321
      %v406 = vunpack.c.l.b16 %v322
      %v407 = vpack.c.b16 %v406, %v405
      %vm409 = vcmask 130048
      %v411 = vsel %vm409, %v387, 0
      %v414 = vsel %vm409, %v388, 0
      %v417 = vsel %vm409, %v389, 0
      %v420 = vsel %vm409, %v390, 0
      %v423 = vsel %vm409, %v391, 0
      %v426 = vsel %vm409, %v392, 0
      %v429 = vsel %vm409, %v393, 0
      %v432 = vsel %vm409, %v394, 0
      %v435 = vsel %vm409, %v395, 0
      %v438 = vsel %vm409, %v396, 0
      %v441 = vsel %vm409, %v397, 0
      %v444 = vsel %vm409, %v398, 0
      %v447 = vsel %vm409, %v399, 0
      %v450 = vsel %vm409, %v400, 0
      %v453 = vsel %vm409, %v401, 0
      %v456 = vsel %vm409, %v402, 0
      %458 = vmatprep.subr.bf16.mxu0 0
      %459 = vmatpush1.bf16.msra.mxu0 0
      %460 = vmatprep.subr.bf16.mxu0 0
      %461 = vmatpush1.bf16.msra.mxu0 0
      %462 = vmatprep.subr.bf16.mxu0 0
      %463 = vmatpush1.bf16.msra.mxu0 0
      %464 = vmatprep.subr.bf16.mxu0 0
      %465 = vmatpush1.bf16.msra.mxu0 0
      %466 = vmatprep.subr.bf16.mxu0 0
      %467 = vmatpush1.bf16.msra.mxu0 0
      %468 = vmatprep.subr.bf16.mxu0 0
      %469 = vmatpush1.bf16.msra.mxu0 0
      %470 = vmatprep.subr.bf16.mxu0 0
      %471 = vmatpush1.bf16.msra.mxu0 0
      %472 = vmatprep.subr.bf16.mxu0 0
      %473 = vmatpush1.bf16.msra.mxu0 %v407
      %474 = vmatprep.subr.bf16.mxu0 0
      %475 = vmatpush2.bf16.msra.mxu0 0
      %476 = vmatprep.subr.bf16.mxu0 0
      %477 = vmatpush2.bf16.msra.mxu0 0
      %478 = vmatprep.subr.bf16.mxu0 0
      %479 = vmatpush2.bf16.msra.mxu0 0
      %480 = vmatprep.subr.bf16.mxu0 0
      %481 = vmatpush2.bf16.msra.mxu0 0
      %482 = vmatprep.subr.bf16.mxu0 0
      %483 = vmatpush2.bf16.msra.mxu0 0
      %484 = vmatprep.subr.bf16.mxu0 0
      %485 = vmatpush2.bf16.msra.mxu0 0
      %486 = vmatprep.subr.bf16.mxu0 0
      %487 = vmatpush2.bf16.msra.mxu0 0
      %488 = vmatprep.subr.bf16.mxu0 0
      %489 = vmatpush2.bf16.msra.mxu0 0
      %490 = vmatprep.mubr.bf16.mxu0 0
      %491 = vmatmul.mubr.bf16.gmra.mxu0 %v411
      %v492 = vpop.f32.mrf.mxu0
      %v493 = vadd.f32 0.0, %v492
      %v494 = vpop.f32.mrf.mxu0
      %v495 = vpop.f32.mrf.mxu0
      %v496 = vadd.f32 0.0, %v495
      %v497 = vpop.f32.mrf.mxu0
      %498 = vmatprep.mubr.bf16.mxu0 0
      %499 = vmatmul.mubr.bf16.gmra.mxu0 %v414
      %v500 = vpop.f32.mrf.mxu0
      %v501 = vadd.f32 0.0, %v500
      %v502 = vpop.f32.mrf.mxu0
      %v503 = vpop.f32.mrf.mxu0
      %v504 = vadd.f32 0.0, %v503
      %v505 = vpop.f32.mrf.mxu0
      %506 = vmatprep.mubr.bf16.mxu0 0
      %507 = vmatmul.mubr.bf16.gmra.mxu0 %v417
      %v508 = vpop.f32.mrf.mxu0
      %v509 = vadd.f32 0.0, %v508
      %v510 = vpop.f32.mrf.mxu0
      %v511 = vpop.f32.mrf.mxu0
      %v512 = vadd.f32 0.0, %v511
      %v513 = vpop.f32.mrf.mxu0
      %514 = vmatprep.mubr.bf16.mxu0 0
      %515 = vmatmul.mubr.bf16.gmra.mxu0 %v420
      %v516 = vpop.f32.mrf.mxu0
      %v517 = vadd.f32 0.0, %v516
      %v518 = vpop.f32.mrf.mxu0
      %v519 = vpop.f32.mrf.mxu0
      %v520 = vadd.f32 0.0, %v519
      %v521 = vpop.f32.mrf.mxu0
      %522 = vmatprep.mubr.bf16.mxu0 0
      %523 = vmatmul.mubr.bf16.gmra.mxu0 %v423
      %v524 = vpop.f32.mrf.mxu0
      %v525 = vadd.f32 0.0, %v524
      %v526 = vpop.f32.mrf.mxu0
      %v527 = vpop.f32.mrf.mxu0
      %v528 = vadd.f32 0.0, %v527
      %v529 = vpop.f32.mrf.mxu0
      %530 = vmatprep.mubr.bf16.mxu0 0
      %531 = vmatmul.mubr.bf16.gmra.mxu0 %v426
      %v532 = vpop.f32.mrf.mxu0
      %v533 = vadd.f32 0.0, %v532
      %v534 = vpop.f32.mrf.mxu0
      %v535 = vpop.f32.mrf.mxu0
      %v536 = vadd.f32 0.0, %v535
      %v537 = vpop.f32.mrf.mxu0
      %538 = vmatprep.mubr.bf16.mxu0 0
      %539 = vmatmul.mubr.bf16.gmra.mxu0 %v429
      %v540 = vpop.f32.mrf.mxu0
      %v541 = vadd.f32 0.0, %v540
      %v542 = vpop.f32.mrf.mxu0
      %v543 = vpop.f32.mrf.mxu0
      %v544 = vadd.f32 0.0, %v543
      %v545 = vpop.f32.mrf.mxu0
      %546 = vmatprep.mubr.bf16.mxu0 0
      %547 = vmatmul.mubr.bf16.gmra.mxu0 %v432
      %v548 = vpop.f32.mrf.mxu0
      %v549 = vadd.f32 0.0, %v548
      %v550 = vpop.f32.mrf.mxu0
      %v551 = vpop.f32.mrf.mxu0
      %v552 = vadd.f32 0.0, %v551
      %v553 = vpop.f32.mrf.mxu0
      %554 = vmatprep.mubr.bf16.mxu0 0
      %555 = vmatmul.mubr.bf16.gmra.mxu0 %v435
      %v556 = vpop.f32.mrf.mxu0
      %v557 = vadd.f32 0.0, %v556
      %v558 = vpop.f32.mrf.mxu0
      %v559 = vpop.f32.mrf.mxu0
      %v560 = vadd.f32 0.0, %v559
      %v561 = vpop.f32.mrf.mxu0
      %562 = vmatprep.mubr.bf16.mxu0 0
      %563 = vmatmul.mubr.bf16.gmra.mxu0 %v438
      %v564 = vpop.f32.mrf.mxu0
      %v565 = vadd.f32 0.0, %v564
      %v566 = vpop.f32.mrf.mxu0
      %v567 = vpop.f32.mrf.mxu0
      %v568 = vadd.f32 0.0, %v567
      %v569 = vpop.f32.mrf.mxu0
      %570 = vmatprep.mubr.bf16.mxu0 0
      %571 = vmatmul.mubr.bf16.gmra.mxu0 %v441
      %v572 = vpop.f32.mrf.mxu0
      %v573 = vadd.f32 0.0, %v572
      %v574 = vpop.f32.mrf.mxu0
      %v575 = vpop.f32.mrf.mxu0
      %v576 = vadd.f32 0.0, %v575
      %v577 = vpop.f32.mrf.mxu0
      %578 = vmatprep.mubr.bf16.mxu0 0
      %579 = vmatmul.mubr.bf16.gmra.mxu0 %v444
      %v580 = vpop.f32.mrf.mxu0
      %v581 = vadd.f32 0.0, %v580
      %v582 = vpop.f32.mrf.mxu0
      %v583 = vpop.f32.mrf.mxu0
      %v584 = vadd.f32 0.0, %v583
      %v585 = vpop.f32.mrf.mxu0
      %586 = vmatprep.mubr.bf16.mxu0 0
      %587 = vmatmul.mubr.bf16.gmra.mxu0 %v447
      %v588 = vpop.f32.mrf.mxu0
      %v589 = vadd.f32 0.0, %v588
      %v590 = vpop.f32.mrf.mxu0
      %v591 = vpop.f32.mrf.mxu0
      %v592 = vadd.f32 0.0, %v591
      %v593 = vpop.f32.mrf.mxu0
      %594 = vmatprep.mubr.bf16.mxu0 0
      %595 = vmatmul.mubr.bf16.gmra.mxu0 %v450
      %v596 = vpop.f32.mrf.mxu0
      %v597 = vadd.f32 0.0, %v596
      %v598 = vpop.f32.mrf.mxu0
      %v599 = vpop.f32.mrf.mxu0
      %v600 = vadd.f32 0.0, %v599
      %v601 = vpop.f32.mrf.mxu0
      %602 = vmatprep.mubr.bf16.mxu0 0
      %603 = vmatmul.mubr.bf16.gmra.mxu0 %v453
      %v604 = vpop.f32.mrf.mxu0
      %v605 = vadd.f32 0.0, %v604
      %v606 = vpop.f32.mrf.mxu0
      %v607 = vpop.f32.mrf.mxu0
      %v608 = vadd.f32 0.0, %v607
      %v609 = vpop.f32.mrf.mxu0
      %610 = vmatprep.mubr.bf16.mxu0 0
      %611 = vmatmul.mubr.bf16.gmra.mxu0 %v456
      %v612 = vpop.f32.mrf.mxu0
      %v613 = vadd.f32 0.0, %v612
      %v614 = vpop.f32.mrf.mxu0
      %v615 = vpop.f32.mrf.mxu0
      %v616 = vadd.f32 0.0, %v615
      %v617 = vpop.f32.mrf.mxu0
      %618 = vdwg.mxu0
      %v619 = vadd.f32 %v257, %v493
      %v620 = vadd.f32 %v258, %v496
      %v621 = vadd.f32 %v259, %v501
      %v622 = vadd.f32 %v260, %v504
      %v623 = vadd.f32 %v261, %v509
      %v624 = vadd.f32 %v262, %v512
      %v625 = vadd.f32 %v263, %v517
      %v626 = vadd.f32 %v264, %v520
      %v627 = vadd.f32 %v265, %v525
      %v628 = vadd.f32 %v266, %v528
      %v629 = vadd.f32 %v267, %v533
      %v630 = vadd.f32 %v268, %v536
      %v631 = vadd.f32 %v269, %v541
      %v632 = vadd.f32 %v270, %v544
      %v633 = vadd.f32 %v271, %v549
      %v634 = vadd.f32 %v272, %v552
      %v635 = vadd.f32 %v273, %v557
      %v636 = vadd.f32 %v274, %v560
      %v637 = vadd.f32 %v275, %v565
      %v638 = vadd.f32 %v276, %v568
      %v639 = vadd.f32 %v277, %v573
      %v640 = vadd.f32 %v278, %v576
      %v641 = vadd.f32 %v279, %v581
      %v642 = vadd.f32 %v280, %v584
      %v643 = vadd.f32 %v281, %v589
      %v644 = vadd.f32 %v282, %v592
      %v645 = vadd.f32 %v283, %v597
      %v646 = vadd.f32 %v284, %v600
      %v647 = vadd.f32 %v285, %v605
      %v648 = vadd.f32 %v286, %v608
      %v649 = vadd.f32 %v287, %v613
      %v650 = vadd.f32 %v288, %v616
      %vm651 = vcmask 523264
      %652 = vst.msk [vmem:[#allocation2] sm:$0xff] %vm651, %v619
      %653 = vst.msk [vmem:[#allocation2 + $0x8] sm:$0xff] %vm651, %v620
      %654 = vst.msk [vmem:[#allocation2 + $0x10] sm:$0xff] %vm651, %v621
      %655 = vst.msk [vmem:[#allocation2 + $0x18] sm:$0xff] %vm651, %v622
      %656 = vst.msk [vmem:[#allocation2 + $0x20] sm:$0xff] %vm651, %v623
      %657 = vst.msk [vmem:[#allocation2 + $0x28] sm:$0xff] %vm651, %v624
      %658 = vst.msk [vmem:[#allocation2 + $0x30] sm:$0xff] %vm651, %v625
      %659 = vst.msk [vmem:[#allocation2 + $0x38] sm:$0xff] %vm651, %v626
      %660 = vst.msk [vmem:[#allocation2 + $0x40] sm:$0xff] %vm651, %v627
      %661 = vst.msk [vmem:[#allocation2 + $0x48] sm:$0xff] %vm651, %v628
      %662 = vst.msk [vmem:[#allocation2 + $0x50] sm:$0xff] %vm651, %v629
      %663 = vst.msk [vmem:[#allocation2 + $0x58] sm:$0xff] %vm651, %v630
      %664 = vst.msk [vmem:[#allocation2 + $0x60] sm:$0xff] %vm651, %v631
      %665 = vst.msk [vmem:[#allocation2 + $0x68] sm:$0xff] %vm651, %v632
      %666 = vst.msk [vmem:[#allocation2 + $0x70] sm:$0xff] %vm651, %v633
      %667 = vst.msk [vmem:[#allocation2 + $0x78] sm:$0xff] %vm651, %v634
      %668 = vst.msk [vmem:[#allocation2 + $0x80] sm:$0xff] %vm651, %v635
      %669 = vst.msk [vmem:[#allocation2 + $0x88] sm:$0xff] %vm651, %v636
      %670 = vst.msk [vmem:[#allocation2 + $0x90] sm:$0xff] %vm651, %v637
      %671 = vst.msk [vmem:[#allocation2 + $0x98] sm:$0xff] %vm651, %v638
      %672 = vst.msk [vmem:[#allocation2 + $0xa0] sm:$0xff] %vm651, %v639
      %673 = vst.msk [vmem:[#allocation2 + $0xa8] sm:$0xff] %vm651, %v640
      %674 = vst.msk [vmem:[#allocation2 + $0xb0] sm:$0xff] %vm651, %v641
      %675 = vst.msk [vmem:[#allocation2 + $0xb8] sm:$0xff] %vm651, %v642
      %676 = vst.msk [vmem:[#allocation2 + $0xc0] sm:$0xff] %vm651, %v643
      %677 = vst.msk [vmem:[#allocation2 + $0xc8] sm:$0xff] %vm651, %v644
      %678 = vst.msk [vmem:[#allocation2 + $0xd0] sm:$0xff] %vm651, %v645
      %679 = vst.msk [vmem:[#allocation2 + $0xd8] sm:$0xff] %vm651, %v646
      %680 = vst.msk [vmem:[#allocation2 + $0xe0] sm:$0xff] %vm651, %v647
      %681 = vst.msk [vmem:[#allocation2 + $0xe8] sm:$0xff] %vm651, %v648
      %682 = vst.msk [vmem:[#allocation2 + $0xf0] sm:$0xff] %vm651, %v649
      %683 = vst.msk [vmem:[#allocation2 + $0xf8] sm:$0xff] %vm651, %v650
      // Predicated region
      $region37: #{_lambda_.4} parent=31 // pred_check
        %p684 = pneg %p220
      $region38: #{_lambda_.4} parent=31 // pred_check_branch
        %686 = sbr.rel (%p684) target = $region40
      $region39: #{_lambda_.4} parent=31 // pred_region
        %v687 = vld [vmem:[#allocation2] sm:$0xff]
        %v688 = vld [vmem:[#allocation2 + $0x8] sm:$0xff]
        %v689 = vld [vmem:[#allocation2 + $0x10] sm:$0xff]
        %v690 = vld [vmem:[#allocation2 + $0x18] sm:$0xff]
        %v691 = vld [vmem:[#allocation2 + $0x20] sm:$0xff]
        %v692 = vld [vmem:[#allocation2 + $0x28] sm:$0xff]
        %v693 = vld [vmem:[#allocation2 + $0x30] sm:$0xff]
        %v694 = vld [vmem:[#allocation2 + $0x38] sm:$0xff]
        %v695 = vld [vmem:[#allocation2 + $0x40] sm:$0xff]
        %v696 = vld [vmem:[#allocation2 + $0x48] sm:$0xff]
        %v697 = vld [vmem:[#allocation2 + $0x50] sm:$0xff]
        %v698 = vld [vmem:[#allocation2 + $0x58] sm:$0xff]
        %v699 = vld [vmem:[#allocation2 + $0x60] sm:$0xff]
        %v700 = vld [vmem:[#allocation2 + $0x68] sm:$0xff]
        %v701 = vld [vmem:[#allocation2 + $0x70] sm:$0xff]
        %v702 = vld [vmem:[#allocation2 + $0x78] sm:$0xff]
        %v703 = vld [vmem:[#allocation2 + $0x80] sm:$0xff]
        %v704 = vld [vmem:[#allocation2 + $0x88] sm:$0xff]
        %v705 = vld [vmem:[#allocation2 + $0x90] sm:$0xff]
        %v706 = vld [vmem:[#allocation2 + $0x98] sm:$0xff]
        %v707 = vld [vmem:[#allocation2 + $0xa0] sm:$0xff]
        %v708 = vld [vmem:[#allocation2 + $0xa8] sm:$0xff]
        %v709 = vld [vmem:[#allocation2 + $0xb0] sm:$0xff]
        %v710 = vld [vmem:[#allocation2 + $0xb8] sm:$0xff]
        %v711 = vld [vmem:[#allocation2 + $0xc0] sm:$0xff]
        %v712 = vld [vmem:[#allocation2 + $0xc8] sm:$0xff]
        %v713 = vld [vmem:[#allocation2 + $0xd0] sm:$0xff]
        %v714 = vld [vmem:[#allocation2 + $0xd8] sm:$0xff]
        %v715 = vld [vmem:[#allocation2 + $0xe0] sm:$0xff]
        %v716 = vld [vmem:[#allocation2 + $0xe8] sm:$0xff]
        %v717 = vld [vmem:[#allocation2 + $0xf0] sm:$0xff]
        %v718 = vld [vmem:[#allocation2 + $0xf8] sm:$0xff]
        %v719 = vld [vmem:[%s2] sm:$0x1]
        %v721 = vlaneseq
        %v722 = vshrl.u32 %v721, 7
        %v723 = vsub.s32 0, %v722
        %v724 = vrot.slane %v719, %v723
        %v726 = vadd.f32 %v687, %v724
        %v727 = vadd.f32 %v688, %v724
        %v728 = vadd.f32 %v689, %v724
        %v729 = vadd.f32 %v690, %v724
        %v730 = vadd.f32 %v691, %v724
        %v731 = vadd.f32 %v692, %v724
        %v732 = vadd.f32 %v693, %v724
        %v733 = vadd.f32 %v694, %v724
        %v734 = vadd.f32 %v695, %v724
        %v735 = vadd.f32 %v696, %v724
        %v736 = vadd.f32 %v697, %v724
        %v737 = vadd.f32 %v698, %v724
        %v738 = vadd.f32 %v699, %v724
        %v739 = vadd.f32 %v700, %v724
        %v740 = vadd.f32 %v701, %v724
        %v741 = vadd.f32 %v702, %v724
        %v742 = vadd.f32 %v703, %v724
        %v743 = vadd.f32 %v704, %v724
        %v744 = vadd.f32 %v705, %v724
        %v745 = vadd.f32 %v706, %v724
        %v746 = vadd.f32 %v707, %v724
        %v747 = vadd.f32 %v708, %v724
        %v748 = vadd.f32 %v709, %v724
        %v749 = vadd.f32 %v710, %v724
        %v750 = vadd.f32 %v711, %v724
        %v751 = vadd.f32 %v712, %v724
        %v752 = vadd.f32 %v713, %v724
        %v753 = vadd.f32 %v714, %v724
        %v754 = vadd.f32 %v715, %v724
        %v755 = vadd.f32 %v716, %v724
        %v756 = vadd.f32 %v717, %v724
        %v757 = vadd.f32 %v718, %v724
        %vm758 = vcmp.gt.f32.partialorder %v726, 0.0
        %vm759 = vcmp.gt.f32.partialorder %v727, 0.0
        %vm760 = vcmp.gt.f32.partialorder %v728, 0.0
        %vm761 = vcmp.gt.f32.partialorder %v729, 0.0
        %vm762 = vcmp.gt.f32.partialorder %v730, 0.0
        %vm763 = vcmp.gt.f32.partialorder %v731, 0.0
        %vm764 = vcmp.gt.f32.partialorder %v732, 0.0
        %vm765 = vcmp.gt.f32.partialorder %v733, 0.0
        %vm766 = vcmp.gt.f32.partialorder %v734, 0.0
        %vm767 = vcmp.gt.f32.partialorder %v735, 0.0
        %vm768 = vcmp.gt.f32.partialorder %v736, 0.0
        %vm769 = vcmp.gt.f32.partialorder %v737, 0.0
        %vm770 = vcmp.gt.f32.partialorder %v738, 0.0
        %vm771 = vcmp.gt.f32.partialorder %v739, 0.0
        %vm772 = vcmp.gt.f32.partialorder %v740, 0.0
        %vm773 = vcmp.gt.f32.partialorder %v741, 0.0
        %vm774 = vcmp.gt.f32.partialorder %v742, 0.0
        %vm775 = vcmp.gt.f32.partialorder %v743, 0.0
        %vm776 = vcmp.gt.f32.partialorder %v744, 0.0
        %vm777 = vcmp.gt.f32.partialorder %v745, 0.0
        %vm778 = vcmp.gt.f32.partialorder %v746, 0.0
        %vm779 = vcmp.gt.f32.partialorder %v747, 0.0
        %vm780 = vcmp.gt.f32.partialorder %v748, 0.0
        %vm781 = vcmp.gt.f32.partialorder %v749, 0.0
        %vm782 = vcmp.gt.f32.partialorder %v750, 0.0
        %vm783 = vcmp.gt.f32.partialorder %v751, 0.0
        %vm784 = vcmp.gt.f32.partialorder %v752, 0.0
        %vm785 = vcmp.gt.f32.partialorder %v753, 0.0
        %vm786 = vcmp.gt.f32.partialorder %v754, 0.0
        %vm787 = vcmp.gt.f32.partialorder %v755, 0.0
        %vm788 = vcmp.gt.f32.partialorder %v756, 0.0
        %vm789 = vcmp.gt.f32.partialorder %v757, 0.0
        %v790 = vmul.f32 %v726, 0.2
        %v791 = vmul.f32 %v727, 0.2
        %v792 = vmul.f32 %v728, 0.2
        %v793 = vmul.f32 %v729, 0.2
        %v794 = vmul.f32 %v730, 0.2
        %v795 = vmul.f32 %v731, 0.2
        %v796 = vmul.f32 %v732, 0.2
        %v797 = vmul.f32 %v733, 0.2
        %v798 = vmul.f32 %v734, 0.2
        %v799 = vmul.f32 %v735, 0.2
        %v800 = vmul.f32 %v736, 0.2
        %v801 = vmul.f32 %v737, 0.2
        %v802 = vmul.f32 %v738, 0.2
        %v803 = vmul.f32 %v739, 0.2
        %v804 = vmul.f32 %v740, 0.2
        %v805 = vmul.f32 %v741, 0.2
        %v806 = vmul.f32 %v742, 0.2
        %v807 = vmul.f32 %v743, 0.2
        %v808 = vmul.f32 %v744, 0.2
        %v809 = vmul.f32 %v745, 0.2
        %v810 = vmul.f32 %v746, 0.2
        %v811 = vmul.f32 %v747, 0.2
        %v812 = vmul.f32 %v748, 0.2
        %v813 = vmul.f32 %v749, 0.2
        %v814 = vmul.f32 %v750, 0.2
        %v815 = vmul.f32 %v751, 0.2
        %v816 = vmul.f32 %v752, 0.2
        %v817 = vmul.f32 %v753, 0.2
        %v818 = vmul.f32 %v754, 0.2
        %v819 = vmul.f32 %v755, 0.2
        %v820 = vmul.f32 %v756, 0.2
        %v821 = vmul.f32 %v757, 0.2
        %v822 = vsel %vm758, %v726, %v790
        %v823 = vsel %vm759, %v727, %v791
        %v824 = vsel %vm760, %v728, %v792
        %v825 = vsel %vm761, %v729, %v793
        %v826 = vsel %vm762, %v730, %v794
        %v827 = vsel %vm763, %v731, %v795
        %v828 = vsel %vm764, %v732, %v796
        %v829 = vsel %vm765, %v733, %v797
        %v830 = vsel %vm766, %v734, %v798
        %v831 = vsel %vm767, %v735, %v799
        %v832 = vsel %vm768, %v736, %v800
        %v833 = vsel %vm769, %v737, %v801
        %v834 = vsel %vm770, %v738, %v802
        %v835 = vsel %vm771, %v739, %v803
        %v836 = vsel %vm772, %v740, %v804
        %v837 = vsel %vm773, %v741, %v805
        %v838 = vsel %vm774, %v742, %v806
        %v839 = vsel %vm775, %v743, %v807
        %v840 = vsel %vm776, %v744, %v808
        %v841 = vsel %vm777, %v745, %v809
        %v842 = vsel %vm778, %v746, %v810
        %v843 = vsel %vm779, %v747, %v811
        %v844 = vsel %vm780, %v748, %v812
        %v845 = vsel %vm781, %v749, %v813
        %v846 = vsel %vm782, %v750, %v814
        %v847 = vsel %vm783, %v751, %v815
        %v848 = vsel %vm784, %v752, %v816
        %v849 = vsel %vm785, %v753, %v817
        %v850 = vsel %vm786, %v754, %v818
        %v851 = vsel %vm787, %v755, %v819
        %v852 = vsel %vm788, %v756, %v820
        %v853 = vsel %vm789, %v757, %v821
        %v854 = vpack.c.bf16 %v823, %v822
        %v855 = vpack.c.bf16 %v825, %v824
        %v856 = vpack.c.bf16 %v827, %v826
        %v857 = vpack.c.bf16 %v829, %v828
        %v858 = vpack.c.bf16 %v831, %v830
        %v859 = vpack.c.bf16 %v833, %v832
        %v860 = vpack.c.bf16 %v835, %v834
        %v861 = vpack.c.bf16 %v837, %v836
        %v862 = vpack.c.bf16 %v839, %v838
        %v863 = vpack.c.bf16 %v841, %v840
        %v864 = vpack.c.bf16 %v843, %v842
        %v865 = vpack.c.bf16 %v845, %v844
        %v866 = vpack.c.bf16 %v847, %v846
        %v867 = vpack.c.bf16 %v849, %v848
        %v868 = vpack.c.bf16 %v851, %v850
        %v869 = vpack.c.bf16 %v853, %v852
        %v886 = vunpack.c.l.b16 %v854
        %v887 = vunpack.c.h.b16 %v854
        %v888 = vunpack.c.l.b16 %v855
        %v889 = vunpack.c.h.b16 %v855
        %v890 = vunpack.c.l.b16 %v856
        %v891 = vunpack.c.h.b16 %v856
        %v892 = vunpack.c.l.b16 %v857
        %v893 = vunpack.c.h.b16 %v857
        %v894 = vunpack.c.l.b16 %v858
        %v895 = vunpack.c.h.b16 %v858
        %v896 = vunpack.c.l.b16 %v859
        %v897 = vunpack.c.h.b16 %v859
        %v898 = vunpack.c.l.b16 %v860
        %v899 = vunpack.c.h.b16 %v860
        %v900 = vunpack.c.l.b16 %v861
        %v901 = vunpack.c.h.b16 %v861
        %v902 = vunpack.c.l.b16 %v862
        %v903 = vunpack.c.h.b16 %v862
        %v904 = vunpack.c.l.b16 %v863
        %v905 = vunpack.c.h.b16 %v863
        %v906 = vunpack.c.l.b16 %v864
        %v907 = vunpack.c.h.b16 %v864
        %v908 = vunpack.c.l.b16 %v865
        %v909 = vunpack.c.h.b16 %v865
        %v910 = vunpack.c.l.b16 %v866
        %v911 = vunpack.c.h.b16 %v866
        %v912 = vunpack.c.l.b16 %v867
        %v913 = vunpack.c.h.b16 %v867
        %v914 = vunpack.c.l.b16 %v868
        %v915 = vunpack.c.h.b16 %v868
        %v916 = vunpack.c.l.b16 %v869
        %v917 = vunpack.c.h.b16 %v869
        %v918 = vpack.c.b16 %v886, %v886
        %v919 = vpack.c.b16 %v887, %v887
        %v920 = vpack.c.b16 %v888, %v888
        %v921 = vpack.c.b16 %v889, %v889
        %v922 = vpack.c.b16 %v890, %v890
        %v923 = vpack.c.b16 %v891, %v891
        %v924 = vpack.c.b16 %v892, %v892
        %v925 = vpack.c.b16 %v893, %v893
        %v926 = vpack.c.b16 %v894, %v894
        %v927 = vpack.c.b16 %v895, %v895
        %v928 = vpack.c.b16 %v896, %v896
        %v929 = vpack.c.b16 %v897, %v897
        %v930 = vpack.c.b16 %v898, %v898
        %v931 = vpack.c.b16 %v899, %v899
        %v932 = vpack.c.b16 %v900, %v900
        %v933 = vpack.c.b16 %v901, %v901
        %v934 = vpack.c.b16 %v902, %v902
        %v935 = vpack.c.b16 %v903, %v903
        %v936 = vpack.c.b16 %v904, %v904
        %v937 = vpack.c.b16 %v905, %v905
        %v938 = vpack.c.b16 %v906, %v906
        %v939 = vpack.c.b16 %v907, %v907
        %v940 = vpack.c.b16 %v908, %v908
        %v941 = vpack.c.b16 %v909, %v909
        %v942 = vpack.c.b16 %v910, %v910
        %v943 = vpack.c.b16 %v911, %v911
        %v944 = vpack.c.b16 %v912, %v912
        %v945 = vpack.c.b16 %v913, %v913
        %v946 = vpack.c.b16 %v914, %v914
        %v947 = vpack.c.b16 %v915, %v915
        %v948 = vpack.c.b16 %v916, %v916
        %v949 = vpack.c.b16 %v917, %v917
        %vm982 = vcmask 519168
        %983 = vst.msk [vmem:[%s217] sm:$0xf] %vm982, %v918
        %984 = vst.msk [vmem:[%s217 + $0x4] sm:$0xf] %vm982, %v919
        %985 = vst.msk [vmem:[%s217 + $0x8] sm:$0xf] %vm982, %v920
        %986 = vst.msk [vmem:[%s217 + $0xc] sm:$0xf] %vm982, %v921
        %987 = vst.msk [vmem:[%s217 + $0x10] sm:$0xf] %vm982, %v922
        %988 = vst.msk [vmem:[%s217 + $0x14] sm:$0xf] %vm982, %v923
        %989 = vst.msk [vmem:[%s217 + $0x18] sm:$0xf] %vm982, %v924
        %990 = vst.msk [vmem:[%s217 + $0x1c] sm:$0xf] %vm982, %v925
        %991 = vst.msk [vmem:[%s217 + $0x20] sm:$0xf] %vm982, %v926
        %992 = vst.msk [vmem:[%s217 + $0x24] sm:$0xf] %vm982, %v927
        %993 = vst.msk [vmem:[%s217 + $0x28] sm:$0xf] %vm982, %v928
        %994 = vst.msk [vmem:[%s217 + $0x2c] sm:$0xf] %vm982, %v929
        %995 = vst.msk [vmem:[%s217 + $0x30] sm:$0xf] %vm982, %v930
        %996 = vst.msk [vmem:[%s217 + $0x34] sm:$0xf] %vm982, %v931
        %997 = vst.msk [vmem:[%s217 + $0x38] sm:$0xf] %vm982, %v932
        %998 = vst.msk [vmem:[%s217 + $0x3c] sm:$0xf] %vm982, %v933
        %999 = vst.msk [vmem:[%s217 + $0x40] sm:$0xf] %vm982, %v934
        %1000 = vst.msk [vmem:[%s217 + $0x44] sm:$0xf] %vm982, %v935
        %1001 = vst.msk [vmem:[%s217 + $0x48] sm:$0xf] %vm982, %v936
        %1002 = vst.msk [vmem:[%s217 + $0x4c] sm:$0xf] %vm982, %v937
        %1003 = vst.msk [vmem:[%s217 + $0x50] sm:$0xf] %vm982, %v938
        %1004 = vst.msk [vmem:[%s217 + $0x54] sm:$0xf] %vm982, %v939
        %1005 = vst.msk [vmem:[%s217 + $0x58] sm:$0xf] %vm982, %v940
        %1006 = vst.msk [vmem:[%s217 + $0x5c] sm:$0xf] %vm982, %v941
        %1007 = vst.msk [vmem:[%s217 + $0x60] sm:$0xf] %vm982, %v942
        %1008 = vst.msk [vmem:[%s217 + $0x64] sm:$0xf] %vm982, %v943
        %1009 = vst.msk [vmem:[%s217 + $0x68] sm:$0xf] %vm982, %v944
        %1010 = vst.msk [vmem:[%s217 + $0x6c] sm:$0xf] %vm982, %v945
        %1011 = vst.msk [vmem:[%s217 + $0x70] sm:$0xf] %vm982, %v946
        %1012 = vst.msk [vmem:[%s217 + $0x74] sm:$0xf] %vm982, %v947
        %1013 = vst.msk [vmem:[%s217 + $0x78] sm:$0xf] %vm982, %v948
        %1014 = vst.msk [vmem:[%s217 + $0x7c] sm:$0xf] %vm982, %v949
      $region40: #{_lambda_.4} parent=31 // pred_fallthru
        _
      %s1015 = smul.u32 32, %s18
      %p1016 = scmp.lt.s32.totalorder %s1015, 63
      %s1017 = scalar_select %p1016, %s1015, 63
      %s1018 = smul.addr %s1017, 4
      %s1019 = scalar_lea.vmem %s3, %s1018
      // Predicated region
      $region41: #{_lambda_.4} parent=31 // pred_check
        %p1020 = pneg %p119
      $region42: #{_lambda_.4} parent=31 // pred_check_branch
        %1022 = sbr.rel (%p1020) target = $region44
      $region43: #{_lambda_.4} parent=31 // pred_region
        %s1023 = smul.u32 32, %s18
      $region44: #{_lambda_.4} parent=31 // pred_fallthru
        _
    $region32: #{_lambda_.4} parent=5 // pred_fallthru
      _
    %p1024 = scmp.le.s32.totalorder 2, %s9
    // Predicated region
    $region45: #{_lambda_.4} parent=5 // pred_check
      %p1025 = pneg %p1024
    $region46: #{_lambda_.4} parent=5 // pred_check_branch
      %1027 = sbr.rel (%p1025) target = $region48
    $region47: #{_lambda_.4} parent=5 // pred_region
      %s1028 = ssub.s32 %s9, 2
      // Predicated region
      $region49: #{_lambda_.4} parent=47 // pred_check
        %p1029 = pneg %p125
      $region50: #{_lambda_.4} parent=47 // pred_check_branch
        %1031 = sbr.rel (%p1029) target = $region52
      $region51: #{_lambda_.4} parent=47 // pred_region
        %s1032 = smul.u32 32, %s20
        %p1033 = scmp.lt.s32.totalorder %s1032, 63
        %s1034 = scalar_select %p1033, %s1032, 63
        %s1035 = smul.addr %s1034, 4
        %s1036 = scalar_lea.vmem %s3, %s1035
      $region52: #{_lambda_.4} parent=47 // pred_fallthru
        _
    $region48: #{_lambda_.4} parent=5 // pred_fallthru
      _
  $region6: #{_lambda_.4} parent=0 // loop_footer
    %s13 = sadd.s32 1, %s9
  $region7: #{_lambda_.4} parent=0 // loop_footer_branch
    %8 = sbr.rel target = $region3
  $region8: #{_lambda_.4} parent=0 // loop_exit
    _

// kernel: _lambda_.5
$region0: #{_lambda_.5}
  #allocation0 [shape = 'u32[]', space=smem, size = 0x4, offset = 0x4, fixed_abs, tag = 'smem constant byte address 0x4 - core index']
  #allocation1 [shape = 'u32[144,128]{1,0:T(1,128)}', space=vmem, size = 0x12000, scoped, tag = 'internal scratch']
  #allocation2 [shape = 'f32[128,128]{1,0:T(8,128)}', space=vmem, size = 0x10000, scoped, tag = 'scratch operand']
  %s0 = inlined_call_operand.vmem [shape: bf16[128,1024], index: 0, kind: input, shape index: {}]
  %s1 = inlined_call_operand.vmem [shape: bf16[1024,128], index: 1, kind: input, shape index: {}]
  %s2 = inlined_call_operand.vmem [shape: f32[1,128], index: 2, kind: input, shape index: {}]
  %s3 = inlined_call_operand.vmem [shape: bf16[128,128], index: 3, kind: output, shape index: {}]
  %s4 = sld [smem:[#allocation0]]
  $region76: #{_lambda_.5} parent=0
    _
  %s6 = ssub.s32 1, %s4
  %s7 = scalar_select 0, %s6, %s4
  $region1: #{_lambda_.5} parent=0
    #allocation3 [shape = 'u8[262144]{0}', space=vmem, size = 0x40000, scoped, tag = 'input window, operand 0']
    loop: start=0, step=1, limit=4
    $region2: #{_lambda_.5} parent=1 // loop_pre_header
      _
    $region3: #{_lambda_.5} parent=1 // loop_header
      %s9 = sphi 0, %s13
      %p10 = scmp.ge.s32.totalorder %s9, 4
      %s16 = sphi 0, %s28
      %s17 = sphi 0, %s24
      %s18 = sphi 0, %s16
      %s19 = sphi 0, %s17
      %s20 = sphi 0, %s18
      %s21 = sphi 0, %s19
      %s33 = sphi 0, %s35
      %s36 = sphi 0, %s33
      %s37 = sphi 0, %s36
      %s53 = sphi 0, %s37
      %s59 = sphi 0, %s61
      %s62 = sphi 0, %s59
      %s63 = sphi 0, %s62
      %s79 = sphi 0, %s63
      %s83 = sphi 0, %s83
      %s85 = sphi 0, %s83
      %s86 = sphi 0, %s85
      %s100 = sphi 0, %s86
      %s106 = sphi 0, %s108
      %s109 = sphi 0, %s106
      %s110 = sphi 0, %s109
      %s126 = sphi 0, %s110
    $region4: #{_lambda_.5} parent=1 // loop_header_branch
      %12 = sbr.rel (%p10) target = $region8
    $region5: #{_lambda_.5} parent=1 // loop_body
      %s14 = ssub.s32 %s9, 1
      %s15 = ssub.s32 %s9, 2
      %s22 = sadd.s32 1, %s17
      %p23 = scmp.ge.s32.totalorder %s22, 2
      %s24 = scalar_select %p23, 0, %s22
      %s25 = sadd.s32 1, %s16
      %s26 = scalar_select %p23, %s25, %s16
      %p27 = scmp.ge.s32.totalorder %s26, 1
      %s28 = scalar_select %p27, 0, %s26
      %s29 = ssub.s32 %s16, %s28
      %s30 = ssub.s32 %s17, %s24
      %s31 = sor.u32 %s29, %s30
      %p32 = scmp.eq.s32.totalorder %s31, 0
      %s34 = sadd.s32 %s33, 1
      %s35 = scalar_select %p32, %s33, %s34
      %p38 = pneg %p32
      %p39 = scmp.eq.s32.totalorder %s9, 1
      %p40 = por %p38, %p39
      %p41 = scmp.ne.s32.totalorder %s33, %s36
      %p42 = scmp.eq.s32.totalorder %s9, 0
      %p43 = por %p41, %p42
      %p44 = scmp.ne.s32.totalorder %s33, %s36
      %p45 = scmp.eq.s32.totalorder %s14, 1
      %p46 = por %p44, %p45
      %p47 = scmp.ne.s32.totalorder %s36, %s37
      %p48 = scmp.eq.s32.totalorder %s14, 0
      %p49 = por %p47, %p48
      %p50 = scmp.ne.s32.totalorder %s36, %s37
      %p51 = scmp.eq.s32.totalorder %s15, 1
      %p52 = por %p50, %p51
      %p54 = scmp.ne.s32.totalorder %s37, %s53
      %p55 = scmp.eq.s32.totalorder %s15, 0
      %p56 = por %p54, %p55
      %s57 = ssub.s32 %s17, %s24
      %p58 = scmp.eq.s32.totalorder %s57, 0
      %s60 = sadd.s32 %s59, 1
      %s61 = scalar_select %p58, %s59, %s60
      %p64 = pneg %p58
      %p65 = scmp.eq.s32.totalorder %s9, 1
      %p66 = por %p64, %p65
      %p67 = scmp.ne.s32.totalorder %s59, %s62
      %p68 = scmp.eq.s32.totalorder %s9, 0
      %p69 = por %p67, %p68
      %p70 = scmp.ne.s32.totalorder %s59, %s62
      %p71 = scmp.eq.s32.totalorder %s14, 1
      %p72 = por %p70, %p71
      %p73 = scmp.ne.s32.totalorder %s62, %s63
      %p74 = scmp.eq.s32.totalorder %s14, 0
      %p75 = por %p73, %p74
      %p76 = scmp.ne.s32.totalorder %s62, %s63
      %p77 = scmp.eq.s32.totalorder %s15, 1
      %p78 = por %p76, %p77
      %p80 = scmp.ne.s32.totalorder %s63, %s79
      %p81 = scmp.eq.s32.totalorder %s15, 0
      %p82 = por %p80, %p81
      %s84 = sadd.s32 %s83, 1
      %p87 = scmp.eq.s32.totalorder %s9, 1
      %p88 = scmp.ne.s32.totalorder %s83, %s85
      %p89 = scmp.eq.s32.totalorder %s9, 0
      %p90 = por %p88, %p89
      %p91 = scmp.ne.s32.totalorder %s83, %s85
      %p92 = scmp.eq.s32.totalorder %s14, 1
      %p93 = por %p91, %p92
      %p94 = scmp.ne.s32.totalorder %s85, %s86
      %p95 = scmp.eq.s32.totalorder %s14, 0
      %p96 = por %p94, %p95
      %p97 = scmp.ne.s32.totalorder %s85, %s86
      %p98 = scmp.eq.s32.totalorder %s15, 1
      %p99 = por %p97, %p98
      %p101 = scmp.ne.s32.totalorder %s86, %s100
      %p102 = scmp.eq.s32.totalorder %s15, 0
      %p103 = por %p101, %p102
      %s104 = ssub.s32 %s16, %s28
      %p105 = scmp.eq.s32.totalorder %s104, 0
      %s107 = sadd.s32 %s106, 1
      %s108 = scalar_select %p105, %s106, %s107
      %p111 = pneg %p105
      %p112 = scmp.eq.s32.totalorder %s9, 1
      %p113 = por %p111, %p112
      %p114 = scmp.ne.s32.totalorder %s106, %s109
      %p115 = scmp.eq.s32.totalorder %s9, 0
      %p116 = por %p114, %p115
      %p117 = scmp.ne.s32.totalorder %s106, %s109
      %p118 = scmp.eq.s32.totalorder %s14, 1
      %p119 = por %p117, %p118
      %p120 = scmp.ne.s32.totalorder %s109, %s110
      %p121 = scmp.eq.s32.totalorder %s14, 0
      %p122 = por %p120, %p121
      %p123 = scmp.ne.s32.totalorder %s109, %s110
      %p124 = scmp.eq.s32.totalorder %s15, 1
      %p125 = por %p123, %p124
      %p127 = scmp.ne.s32.totalorder %s110, %s126
      %p128 = scmp.eq.s32.totalorder %s15, 0
      %p129 = por %p127, %p128
      %p130 = scmp.le.s32.totalorder 1, %s9
      %p131 = scmp.lt.s32.totalorder %s9, 3
      %p132 = pnand %p130, %p131
      %p133 = pneg %p132
      // Predicated region
      $region9: #{_lambda_.5} parent=5 // pred_check
        _
      $region10: #{_lambda_.5} parent=5 // pred_check_branch
        %135 = sbr.rel (%p132) target = $region12
      $region11: #{_lambda_.5} parent=5 // pred_region
        %s136 = ssub.s32 %s9, 1
        // Predicated region
        $region13: #{_lambda_.5} parent=11 // pred_check
          %p137 = pneg %p96
        $region14: #{_lambda_.5} parent=11 // pred_check_branch
          %139 = sbr.rel (%p137) target = $region16
        $region15: #{_lambda_.5} parent=11 // pred_region
          _
        $region16: #{_lambda_.5} parent=11 // pred_fallthru
          _
      $region12: #{_lambda_.5} parent=5 // pred_fallthru
        _
      %p140 = scmp.lt.s32.totalorder %s9, 2
      // Predicated region
      $region17: #{_lambda_.5} parent=5 // pred_check
        %p141 = pneg %p140
      $region18: #{_lambda_.5} parent=5 // pred_check_branch
        %143 = sbr.rel (%p141) target = $region20
      $region19: #{_lambda_.5} parent=5 // pred_region
        // Predicated region
        $region21: #{_lambda_.5} parent=19 // pred_check
          %p144 = pneg %p43
        $region22: #{_lambda_.5} parent=19 // pred_check_branch
          %146 = sbr.rel (%p144) target = $region24
        $region23: #{_lambda_.5} parent=19 // pred_region
          %s147 = sand.u32 %s33, 1
          %s148 = sand.u32 %s33, 1
          %s149 = smul.addr %s148, 256
          %s150 = scalar_lea.vmem [#allocation3], %s149
          %s151 = smul.u32 16, %s16
          %s152 = smul.u32 4, %s17
          %s153 = smul.addr %s151, 8
          %s154 = sadd.s32 %s152, %s153
          %s155 = smul.addr %s154, 4
          %s156 = scalar_lea.vmem %s0, %s155
          // Predicated region
          $region25: #{_lambda_.5} parent=23 // pred_check
            _
          $region26: #{_lambda_.5} parent=23 // pred_check_branch
            %158 = sbr.rel (0) target = $region28
          $region27: #{_lambda_.5} parent=23 // pred_region
            // Predicated region
            $region29: #{_lambda_.5} parent=27 // pred_check
              _
            $region30: #{_lambda_.5} parent=27 // pred_check_branch
              %160 = sbr.rel (0) target = $region32
            $region31: #{_lambda_.5} parent=27 // pred_region
              loop: start=0, step=1, limit=1
              $region33: #{_lambda_.5} parent=31 // loop_pre_header
                _
              $region34: #{_lambda_.5} parent=31 // loop_header
                %s162 = sphi 0, %s166
                %p163 = scmp.ge.s32.totalorder %s162, 1
                %s167 = sphi %s156, %s156
                %s168 = sphi %s150, %s150
              $region35: #{_lambda_.5} parent=31 // loop_header_branch
                %165 = sbr.rel (%p163) target = $region39
              $region36: #{_lambda_.5} parent=31 // loop_body
                %v169 = vld [vmem:[%s167] sm:$0xff]
                %170 = vst [vmem:[%s168] sm:$0xff] %v169
                %v171 = vld [vmem:[%s167 + $0x8] sm:$0xff]
                %172 = vst [vmem:[%s168 + $0x8] sm:$0xff] %v171
                %v173 = vld [vmem:[%s167 + $0x20] sm:$0xff]
                %174 = vst [vmem:[%s168 + $0x10] sm:$0xff] %v173
                %v175 = vld [vmem:[%s167 + $0x28] sm:$0xff]
                %176 = vst [vmem:[%s168 + $0x18] sm:$0xff] %v175
                %v177 = vld [vmem:[%s167 + $0x40] sm:$0xff]
                %178 = vst [vmem:[%s168 + $0x20] sm:$0xff] %v177
                %v179 = vld [vmem:[%s167 + $0x48] sm:$0xff]
                %180 = vst [vmem:[%s168 + $0x28] sm:$0xff] %v179
                %v181 = vld [vmem:[%s167 + $0x60] sm:$0xff]
                %182 = vst [vmem:[%s168 + $0x30] sm:$0xff] %v181
                %v183 = vld [vmem:[%s167 + $0x68] sm:$0xff]
                %184 = vst [vmem:[%s168 + $0x38] sm:$0xff] %v183
                %v185 = vld [vmem:[%s167 + $0x80] sm:$0xff]
                %186 = vst [vmem:[%s168 + $0x40] sm:$0xff] %v185
                %v187 = vld [vmem:[%s167 + $0x88] sm:$0xff]
                %188 = vst [vmem:[%s168 + $0x48] sm:$0xff] %v187
                %v189 = vld [vmem:[%s167 + $0xa0] sm:$0xff]
                %190 = vst [vmem:[%s168 + $0x50] sm:$0xff] %v189
                %v191 = vld [vmem:[%s167 + $0xa8] sm:$0xff]
                %192 = vst [vmem:[%s168 + $0x58] sm:$0xff] %v191
                %v193 = vld [vmem:[%s167 + $0xc0] sm:$0xff]
                %194 = vst [vmem:[%s168 + $0x60] sm:$0xff] %v193
                %v195 = vld [vmem:[%s167 + $0xc8] sm:$0xff]
                %196 = vst [vmem:[%s168 + $0x68] sm:$0xff] %v195
                %v197 = vld [vmem:[%s167 + $0xe0] sm:$0xff]
                %198 = vst [vmem:[%s168 + $0x70] sm:$0xff] %v197
                %v199 = vld [vmem:[%s167 + $0xe8] sm:$0xff]
                %200 = vst [vmem:[%s168 + $0x78] sm:$0xff] %v199
                %v201 = vld [vmem:[%s167 + $0x100] sm:$0xff]
                %202 = vst [vmem:[%s168 + $0x80] sm:$0xff] %v201
                %v203 = vld [vmem:[%s167 + $0x108] sm:$0xff]
                %204 = vst [vmem:[%s168 + $0x88] sm:$0xff] %v203
                %v205 = vld [vmem:[%s167 + $0x120] sm:$0xff]
                %206 = vst [vmem:[%s168 + $0x90] sm:$0xff] %v205
                %v207 = vld [vmem:[%s167 + $0x128] sm:$0xff]
                %208 = vst [vmem:[%s168 + $0x98] sm:$0xff] %v207
                %v209 = vld [vmem:[%s167 + $0x140] sm:$0xff]
                %210 = vst [vmem:[%s168 + $0xa0] sm:$0xff] %v209
                %v211 = vld [vmem:[%s167 + $0x148] sm:$0xff]
                %212 = vst [vmem:[%s168 + $0xa8] sm:$0xff] %v211
                %v213 = vld [vmem:[%s167 + $0x160] sm:$0xff]
                %214 = vst [vmem:[%s168 + $0xb0] sm:$0xff] %v213
                %v215 = vld [vmem:[%s167 + $0x168] sm:$0xff]
                %216 = vst [vmem:[%s168 + $0xb8] sm:$0xff] %v215
                %v217 = vld [vmem:[%s167 + $0x180] sm:$0xff]
                %218 = vst [vmem:[%s168 + $0xc0] sm:$0xff] %v217
                %v219 = vld [vmem:[%s167 + $0x188] sm:$0xff]
                %220 = vst [vmem:[%s168 + $0xc8] sm:$0xff] %v219
                %v221 = vld [vmem:[%s167 + $0x1a0] sm:$0xff]
                %222 = vst [vmem:[%s168 + $0xd0] sm:$0xff] %v221
                %v223 = vld [vmem:[%s167 + $0x1a8] sm:$0xff]
                %224 = vst [vmem:[%s168 + $0xd8] sm:$0xff] %v223
                %v225 = vld [vmem:[%s167 + $0x1c0] sm:$0xff]
                %226 = vst [vmem:[%s168 + $0xe0] sm:$0xff] %v225
                %v227 = vld [vmem:[%s167 + $0x1c8] sm:$0xff]
                %228 = vst [vmem:[%s168 + $0xe8] sm:$0xff] %v227
                %v229 = vld [vmem:[%s167 + $0x1e0] sm:$0xff]
                %230 = vst [vmem:[%s168 + $0xf0] sm:$0xff] %v229
                %v231 = vld [vmem:[%s167 + $0x1e8] sm:$0xff]
                %232 = vst [vmem:[%s168 + $0xf8] sm:$0xff] %v231
              $region37: #{_lambda_.5} parent=31 // loop_footer
                %s166 = sadd.s32 1, %s162
              $region38: #{_lambda_.5} parent=31 // loop_footer_branch
                %161 = sbr.rel target = $region34
              $region39: #{_lambda_.5} parent=31 // loop_exit
                _
            $region32: #{_lambda_.5} parent=27 // pred_fallthru
              _
            // Predicated region
            $region40: #{_lambda_.5} parent=27 // pred_check
              _
            $region41: #{_lambda_.5} parent=27 // pred_check_branch
              %234 = sbr.rel target = $region43
            $region42: #{_lambda_.5} parent=27 // pred_region
              _
            $region43: #{_lambda_.5} parent=27 // pred_fallthru
              _
          $region28: #{_lambda_.5} parent=23 // pred_fallthru
            _
          %235 = vnop
        $region24: #{_lambda_.5} parent=19 // pred_fallthru
          _
        // Predicated region
        $region44: #{_lambda_.5} parent=19 // pred_check
          %p236 = pneg %p69
        $region45: #{_lambda_.5} parent=19 // pred_check_branch
          %238 = sbr.rel (%p236) target = $region47
        $region46: #{_lambda_.5} parent=19 // pred_region
          %s239 = smul.u32 64, %s17
          %p240 = scmp.lt.s32.totalorder %s239, 127
          %s241 = scalar_select %p240, %s239, 127
          %s242 = smul.addr %s241, 4
          %s243 = scalar_lea.vmem %s1, %s242
          %s244 = smul.u32 64, %s17
        $region47: #{_lambda_.5} parent=19 // pred_fallthru
          _
      $region20: #{_lambda_.5} parent=5 // pred_fallthru
        _
      %p245 = scmp.le.s32.totalorder 1, %s9
      %p246 = scmp.lt.s32.totalorder %s9, 3
      %p247 = pnand %p245, %p246
      %p248 = pneg %p247
      // Predicated region
      $region48: #{_lambda_.5} parent=5 // pred_check
        _
      $region49: #{_lambda_.5} parent=5 // pred_check_branch
        %250 = sbr.rel (%p247) target = $region51
      $region50: #{_lambda_.5} parent=5 // pred_region
        %s251 = ssub.s32 %s9, 1
        %s252 = sand.u32 %s36, 1
        %s253 = sand.u32 %s36, 1
        %s254 = smul.addr %s253, 256
        %s255 = scalar_lea.vmem [#allocation3], %s254
        // Predicated region
        $region52: #{_lambda_.5} parent=50 // pred_check
          %p256 = pneg %p49
        $region53: #{_lambda_.5} parent=50 // pred_check_branch
          %258 = sbr.rel (%p256) target = $region55
        $region54: #{_lambda_.5} parent=50 // pred_region
          _
        $region55: #{_lambda_.5} parent=50 // pred_fallthru
          _
        %s259 = sand.u32 %s36, 1
        %s260 = sand.u32 %s36, 1
        %s261 = smul.addr %s260, 256
        %s262 = scalar_lea.vmem [#allocation3], %s261
        %p263 = pneg %p49
        %p264 = pneg %p46
        %s265 = smul.u32 64, %s19
        %p266 = scmp.lt.s32.totalorder %s265, 127
        %s267 = scalar_select %p266, %s265, 127
        %s268 = smul.addr %s267, 4
        %s269 = scalar_lea.vmem %s1, %s268
        %p270 = pneg %p75
        %p271 = pneg %p72
        %p272 = pneg %p96
        %p273 = pneg %p93
        %p274 = pneg %p122
        %p275 = pneg %p119
        %s276 = smul.u32 16, %s18
        %p277 = scmp.lt.s32.totalorder %s276, 15
        %s278 = scalar_select %p277, %s276, 15
        %s279 = smul.addr %s278, 4
        %s280 = scalar_lea.vmem %s3, %s279
        %s281 = smul.u32 16, %s18
        %s282 = smul.u32 4, %s19
        %s283 = smul.u32 64, %s19
        %p284 = scmp.lt.s32.totalorder %s283, 127
        %s285 = scalar_select %p284, %s283, 127
        %s286 = smul.addr %s285, 4
        %s287 = scalar_lea.vmem %s1, %s286
        %s288 = smul.u32 64, %s19
        %s289 = smul.u32 16, %s18
        %p290 = scmp.lt.s32.totalorder %s289, 15
        %s291 = scalar_select %p290, %s289, 15
        %s292 = smul.addr %s291, 4
        %s293 = scalar_lea.vmem %s3, %s292
        %s294 = smul.u32 16, %s18
        %p296 = scmp.eq.s32.totalorder %s19, 0
        // Predicated region
        $region56: #{_lambda_.5} parent=50 // pred_check
          %p297 = pneg %p296
        $region57: #{_lambda_.5} parent=50 // pred_check_branch
          %299 = sbr.rel (%p297) target = $region59
        $region58: #{_lambda_.5} parent=50 // pred_region
          %300 = vst [vmem:[#allocation2] sm:$0xff] 0.0
          %301 = vst [vmem:[#allocation2 + $0x8] sm:$0xff] 0.0
          %302 = vst [vmem:[#allocation2 + $0x10] sm:$0xff] 0.0
          %303 = vst [vmem:[#allocation2 + $0x18] sm:$0xff] 0.0
          %304 = vst [vmem:[#allocation2 + $0x20] sm:$0xff] 0.0
          %305 = vst [vmem:[#allocation2 + $0x28] sm:$0xff] 0.0
          %306 = vst [vmem:[#allocation2 + $0x30] sm:$0xff] 0.0
          %307 = vst [vmem:[#allocation2 + $0x38] sm:$0xff] 0.0
          %308 = vst [vmem:[#allocation2 + $0x40] sm:$0xff] 0.0
          %309 = vst [vmem:[#allocation2 + $0x48] sm:$0xff] 0.0
          %310 = vst [vmem:[#allocation2 + $0x50] sm:$0xff] 0.0
          %311 = vst [vmem:[#allocation2 + $0x58] sm:$0xff] 0.0
          %312 = vst [vmem:[#allocation2 + $0x60] sm:$0xff] 0.0
          %313 = vst [vmem:[#allocation2 + $0x68] sm:$0xff] 0.0
          %314 = vst [vmem:[#allocation2 + $0x70] sm:$0xff] 0.0
          %315 = vst [vmem:[#allocation2 + $0x78] sm:$0xff] 0.0
        $region59: #{_lambda_.5} parent=50 // pred_fallthru
          _
        %v316 = vld [vmem:[#allocation2] sm:$0xff]
        %v317 = vld [vmem:[#allocation2 + $0x8] sm:$0xff]
        %v318 = vld [vmem:[#allocation2 + $0x10] sm:$0xff]
        %v319 = vld [vmem:[#allocation2 + $0x18] sm:$0xff]
        %v320 = vld [vmem:[#allocation2 + $0x20] sm:$0xff]
        %v321 = vld [vmem:[#allocation2 + $0x28] sm:$0xff]
        %v322 = vld [vmem:[#allocation2 + $0x30] sm:$0xff]
        %v323 = vld [vmem:[#allocation2 + $0x38] sm:$0xff]
        %v324 = vld [vmem:[#allocation2 + $0x40] sm:$0xff]
        %v325 = vld [vmem:[#allocation2 + $0x48] sm:$0xff]
        %v326 = vld [vmem:[#allocation2 + $0x50] sm:$0xff]
        %v327 = vld [vmem:[#allocation2 + $0x58] sm:$0xff]
        %v328 = vld [vmem:[#allocation2 + $0x60] sm:$0xff]
        %v329 = vld [vmem:[#allocation2 + $0x68] sm:$0xff]
        %v330 = vld [vmem:[#allocation2 + $0x70] sm:$0xff]
        %v331 = vld [vmem:[#allocation2 + $0x78] sm:$0xff]
        %v332 = vld [vmem:[%s255] sm:$0xff]
        %v333 = vld [vmem:[%s255 + $0x8] sm:$0xff]
        %v334 = vld [vmem:[%s255 + $0x10] sm:$0xff]
        %v335 = vld [vmem:[%s255 + $0x18] sm:$0xff]
        %v336 = vld [vmem:[%s255 + $0x20] sm:$0xff]
        %v337 = vld [vmem:[%s255 + $0x28] sm:$0xff]
        %v338 = vld [vmem:[%s255 + $0x30] sm:$0xff]
        %v339 = vld [vmem:[%s255 + $0x38] sm:$0xff]
        %v340 = vld [vmem:[%s255 + $0x40] sm:$0xff]
        %v341 = vld [vmem:[%s255 + $0x48] sm:$0xff]
        %v342 = vld [vmem:[%s255 + $0x50] sm:$0xff]
        %v343 = vld [vmem:[%s255 + $0x58] sm:$0xff]
        %v344 = vld [vmem:[%s255 + $0x60] sm:$0xff]
        %v345 = vld [vmem:[%s255 + $0x68] sm:$0xff]
        %v346 = vld [vmem:[%s255 + $0x70] sm:$0xff]
        %v347 = vld [vmem:[%s255 + $0x78] sm:$0xff]
        %v348 = vld [vmem:[%s255 + $0x80] sm:$0xff]
        %v349 = vld [vmem:[%s255 + $0x88] sm:$0xff]
        %v350 = vld [vmem:[%s255 + $0x90] sm:$0xff]
        %v351 = vld [vmem:[%s255 + $0x98] sm:$0xff]
        %v352 = vld [vmem:[%s255 + $0xa0] sm:$0xff]
        %v353 = vld [vmem:[%s255 + $0xa8] sm:$0xff]
        %v354 = vld [vmem:[%s255 + $0xb0] sm:$0xff]
        %v355 = vld [vmem:[%s255 + $0xb8] sm:$0xff]
        %v356 = vld [vmem:[%s255 + $0xc0] sm:$0xff]
        %v357 = vld [vmem:[%s255 + $0xc8] sm:$0xff]
        %v358 = vld [vmem:[%s255 + $0xd0] sm:$0xff]
        %v359 = vld [vmem:[%s255 + $0xd8] sm:$0xff]
        %v360 = vld [vmem:[%s255 + $0xe0] sm:$0xff]
        %v361 = vld [vmem:[%s255 + $0xe8] sm:$0xff]
        %v362 = vld [vmem:[%s255 + $0xf0] sm:$0xff]
        %v363 = vld [vmem:[%s255 + $0xf8] sm:$0xff]
        %v364 = vld [vmem:[%s287] sm:$0xf]
        %v365 = vld [vmem:[%s287 + $0x4] sm:$0xf]
        %v366 = vld [vmem:[%s287 + $0x8] sm:$0xf]
        %v367 = vld [vmem:[%s287 + $0xc] sm:$0xf]
        %v368 = vld [vmem:[%s287 + $0x10] sm:$0xf]
        %v369 = vld [vmem:[%s287 + $0x14] sm:$0xf]
        %v370 = vld [vmem:[%s287 + $0x18] sm:$0xf]
        %v371 = vld [vmem:[%s287 + $0x1c] sm:$0xf]
        %v372 = vld [vmem:[%s287 + $0x20] sm:$0xf]
        %v373 = vld [vmem:[%s287 + $0x24] sm:$0xf]
        %v374 = vld [vmem:[%s287 + $0x28] sm:$0xf]
        %v375 = vld [vmem:[%s287 + $0x2c] sm:$0xf]
        %v376 = vld [vmem:[%s287 + $0x30] sm:$0xf]
        %v377 = vld [vmem:[%s287 + $0x34] sm:$0xf]
        %v378 = vld [vmem:[%s287 + $0x38] sm:$0xf]
        %v379 = vld [vmem:[%s287 + $0x3c] sm:$0xf]
        %v380 = vld [vmem:[%s287 + $0x40] sm:$0xf]
        %v381 = vld [vmem:[%s287 + $0x44] sm:$0xf]
        %v382 = vld [vmem:[%s287 + $0x48] sm:$0xf]
        %v383 = vld [vmem:[%s287 + $0x4c] sm:$0xf]
        %v384 = vld [vmem:[%s287 + $0x50] sm:$0xf]
        %v385 = vld [vmem:[%s287 + $0x54] sm:$0xf]
        %v386 = vld [vmem:[%s287 + $0x58] sm:$0xf]
        %v387 = vld [vmem:[%s287 + $0x5c] sm:$0xf]
        %v388 = vld [vmem:[%s287 + $0x60] sm:$0xf]
        %v389 = vld [vmem:[%s287 + $0x64] sm:$0xf]
        %v390 = vld [vmem:[%s287 + $0x68] sm:$0xf]
        %v391 = vld [vmem:[%s287 + $0x6c] sm:$0xf]
        %v392 = vld [vmem:[%s287 + $0x70] sm:$0xf]
        %v393 = vld [vmem:[%s287 + $0x74] sm:$0xf]
        %v394 = vld [vmem:[%s287 + $0x78] sm:$0xf]
        %v395 = vld [vmem:[%s287 + $0x7c] sm:$0xf]
        %v396 = vld [vmem:[%s287 + $0x80] sm:$0xf]
        %v397 = vld [vmem:[%s287 + $0x84] sm:$0xf]
        %v398 = vld [vmem:[%s287 + $0x88] sm:$0xf]
        %v399 = vld [vmem:[%s287 + $0x8c] sm:$0xf]
        %v400 = vld [vmem:[%s287 + $0x90] sm:$0xf]
        %v401 = vld [vmem:[%s287 + $0x94] sm:$0xf]
        %v402 = vld [vmem:[%s287 + $0x98] sm:$0xf]
        %v403 = vld [vmem:[%s287 + $0x9c] sm:$0xf]
        %v404 = vld [vmem:[%s287 + $0xa0] sm:$0xf]
        %v405 = vld [vmem:[%s287 + $0xa4] sm:$0xf]
        %v406 = vld [vmem:[%s287 + $0xa8] sm:$0xf]
        %v407 = vld [vmem:[%s287 + $0xac] sm:$0xf]
        %v408 = vld [vmem:[%s287 + $0xb0] sm:$0xf]
        %v409 = vld [vmem:[%s287 + $0xb4] sm:$0xf]
        %v410 = vld [vmem:[%s287 + $0xb8] sm:$0xf]
        %v411 = vld [vmem:[%s287 + $0xbc] sm:$0xf]
        %v412 = vld [vmem:[%s287 + $0xc0] sm:$0xf]
        %v413 = vld [vmem:[%s287 + $0xc4] sm:$0xf]
        %v414 = vld [vmem:[%s287 + $0xc8] sm:$0xf]
        %v415 = vld [vmem:[%s287 + $0xcc] sm:$0xf]
        %v416 = vld [vmem:[%s287 + $0xd0] sm:$0xf]
        %v417 = vld [vmem:[%s287 + $0xd4] sm:$0xf]
        %v418 = vld [vmem:[%s287 + $0xd8] sm:$0xf]
        %v419 = vld [vmem:[%s287 + $0xdc] sm:$0xf]
        %v420 = vld [vmem:[%s287 + $0xe0] sm:$0xf]
        %v421 = vld [vmem:[%s287 + $0xe4] sm:$0xf]
        %v422 = vld [vmem:[%s287 + $0xe8] sm:$0xf]
        %v423 = vld [vmem:[%s287 + $0xec] sm:$0xf]
        %v424 = vld [vmem:[%s287 + $0xf0] sm:$0xf]
        %v425 = vld [vmem:[%s287 + $0xf4] sm:$0xf]
        %v426 = vld [vmem:[%s287 + $0xf8] sm:$0xf]
        %v427 = vld [vmem:[%s287 + $0xfc] sm:$0xf]
        %v460 = vunpack.c.l.b16 %v332
        %v461 = vunpack.c.h.b16 %v332
        %v462 = vunpack.c.l.b16 %v333
        %v463 = vunpack.c.h.b16 %v333
        %v464 = vunpack.c.l.b16 %v334
        %v465 = vunpack.c.h.b16 %v334
        %v466 = vunpack.c.l.b16 %v335
        %v467 = vunpack.c.h.b16 %v335
        %v468 = vunpack.c.l.b16 %v336
        %v469 = vunpack.c.h.b16 %v336
        %v470 = vunpack.c.l.b16 %v337
        %v471 = vunpack.c.h.b16 %v337
        %v472 = vunpack.c.l.b16 %v338
        %v473 = vunpack.c.h.b16 %v338
        %v474 = vunpack.c.l.b16 %v339
        %v475 = vunpack.c.h.b16 %v339
        %v476 = vunpack.c.l.b16 %v340
        %v477 = vunpack.c.h.b16 %v340
        %v478 = vunpack.c.l.b16 %v341
        %v479 = vunpack.c.h.b16 %v341
        %v480 = vunpack.c.l.b16 %v342
        %v481 = vunpack.c.h.b16 %v342
        %v482 = vunpack.c.l.b16 %v343
        %v483 = vunpack.c.h.b16 %v343
        %v484 = vunpack.c.l.b16 %v344
        %v485 = vunpack.c.h.b16 %v344
        %v486 = vunpack.c.l.b16 %v345
        %v487 = vunpack.c.h.b16 %v345
        %v488 = vunpack.c.l.b16 %v346
        %v489 = vunpack.c.h.b16 %v346
        %v490 = vunpack.c.l.b16 %v347
        %v491 = vunpack.c.h.b16 %v347
        %v492 = vunpack.c.l.b16 %v348
        %v493 = vunpack.c.h.b16 %v348
        %v494 = vunpack.c.l.b16 %v349
        %v495 = vunpack.c.h.b16 %v349
        %v496 = vunpack.c.l.b16 %v350
        %v497 = vunpack.c.h.b16 %v350
        %v498 = vunpack.c.l.b16 %v351
        %v499 = vunpack.c.h.b16 %v351
        %v500 = vunpack.c.l.b16 %v352
        %v501 = vunpack.c.h.b16 %v352
        %v502 = vunpack.c.l.b16 %v353
        %v503 = vunpack.c.h.b16 %v353
        %v504 = vunpack.c.l.b16 %v354
        %v505 = vunpack.c.h.b16 %v354
        %v506 = vunpack.c.l.b16 %v355
        %v507 = vunpack.c.h.b16 %v355
        %v508 = vunpack.c.l.b16 %v356
        %v509 = vunpack.c.h.b16 %v356
        %v510 = vunpack.c.l.b16 %v357
        %v511 = vunpack.c.h.b16 %v357
        %v512 = vunpack.c.l.b16 %v358
        %v513 = vunpack.c.h.b16 %v358
        %v514 = vunpack.c.l.b16 %v359
        %v515 = vunpack.c.h.b16 %v359
        %v516 = vunpack.c.l.b16 %v360
        %v517 = vunpack.c.h.b16 %v360
        %v518 = vunpack.c.l.b16 %v361
        %v519 = vunpack.c.h.b16 %v361
        %v520 = vunpack.c.l.b16 %v362
        %v521 = vunpack.c.h.b16 %v362
        %v522 = vunpack.c.l.b16 %v363
        %v523 = vunpack.c.h.b16 %v363
        %v524 = vpack.c.b16 %v464, %v460
        %v525 = vpack.c.b16 %v465, %v461
        %v526 = vpack.c.b16 %v466, %v462
        %v527 = vpack.c.b16 %v467, %v463
        %v528 = vpack.c.b16 %v472, %v468
        %v529 = vpack.c.b16 %v473, %v469
        %v530 = vpack.c.b16 %v474, %v470
        %v531 = vpack.c.b16 %v475, %v471
        %v532 = vpack.c.b16 %v480, %v476
        %v533 = vpack.c.b16 %v481, %v477
        %v534 = vpack.c.b16 %v482, %v478
        %v535 = vpack.c.b16 %v483, %v479
        %v536 = vpack.c.b16 %v488, %v484
        %v537 = vpack.c.b16 %v489, %v485
        %v538 = vpack.c.b16 %v490, %v486
        %v539 = vpack.c.b16 %v491, %v487
        %v540 = vpack.c.b16 %v496, %v492
        %v541 = vpack.c.b16 %v497, %v493
        %v542 = vpack.c.b16 %v498, %v494
        %v543 = vpack.c.b16 %v499, %v495
        %v544 = vpack.c.b16 %v504, %v500
        %v545 = vpack.c.b16 %v505, %v501
        %v546 = vpack.c.b16 %v506, %v502
        %v547 = vpack.c.b16 %v507, %v503
        %v548 = vpack.c.b16 %v512, %v508
        %v549 = vpack.c.b16 %v513, %v509
        %v550 = vpack.c.b16 %v514, %v510
        %v551 = vpack.c.b16 %v515, %v511
        %v552 = vpack.c.b16 %v520, %v516
        %v553 = vpack.c.b16 %v521, %v517
        %v554 = vpack.c.b16 %v522, %v518
        %v555 = vpack.c.b16 %v523, %v519
        %v652 = vunpack.c.l.b16 %v364
        %v653 = vunpack.c.l.b16 %v365
        %v654 = vunpack.c.l.b16 %v366
        %v655 = vunpack.c.l.b16 %v367
        %v656 = vunpack.c.l.b16 %v368
        %v657 = vunpack.c.l.b16 %v369
        %v658 = vunpack.c.l.b16 %v370
        %v659 = vunpack.c.l.b16 %v371
        %v660 = vunpack.c.l.b16 %v372
        %v661 = vunpack.c.l.b16 %v373
        %v662 = vunpack.c.l.b16 %v374
        %v663 = vunpack.c.l.b16 %v375
        %v664 = vunpack.c.l.b16 %v376
        %v665 = vunpack.c.l.b16 %v377
        %v666 = vunpack.c.l.b16 %v378
        %v667 = vunpack.c.l.b16 %v379
        %v668 = vunpack.c.l.b16 %v380
        %v669 = vunpack.c.l.b16 %v381
        %v670 = vunpack.c.l.b16 %v382
        %v671 = vunpack.c.l.b16 %v383
        %v672 = vunpack.c.l.b16 %v384
        %v673 = vunpack.c.l.b16 %v385
        %v674 = vunpack.c.l.b16 %v386
        %v675 = vunpack.c.l.b16 %v387
        %v676 = vunpack.c.l.b16 %v388
        %v677 = vunpack.c.l.b16 %v389
        %v678 = vunpack.c.l.b16 %v390
        %v679 = vunpack.c.l.b16 %v391
        %v680 = vunpack.c.l.b16 %v392
        %v681 = vunpack.c.l.b16 %v393
        %v682 = vunpack.c.l.b16 %v394
        %v683 = vunpack.c.l.b16 %v395
        %v684 = vunpack.c.l.b16 %v396
        %v685 = vunpack.c.l.b16 %v397
        %v686 = vunpack.c.l.b16 %v398
        %v687 = vunpack.c.l.b16 %v399
        %v688 = vunpack.c.l.b16 %v400
        %v689 = vunpack.c.l.b16 %v401
        %v690 = vunpack.c.l.b16 %v402
        %v691 = vunpack.c.l.b16 %v403
        %v692 = vunpack.c.l.b16 %v404
        %v693 = vunpack.c.l.b16 %v405
        %v694 = vunpack.c.l.b16 %v406
        %v695 = vunpack.c.l.b16 %v407
        %v696 = vunpack.c.l.b16 %v408
        %v697 = vunpack.c.l.b16 %v409
        %v698 = vunpack.c.l.b16 %v410
        %v699 = vunpack.c.l.b16 %v411
        %v700 = vunpack.c.l.b16 %v412
        %v701 = vunpack.c.l.b16 %v413
        %v702 = vunpack.c.l.b16 %v414
        %v703 = vunpack.c.l.b16 %v415
        %v704 = vunpack.c.l.b16 %v416
        %v705 = vunpack.c.l.b16 %v417
        %v706 = vunpack.c.l.b16 %v418
        %v707 = vunpack.c.l.b16 %v419
        %v708 = vunpack.c.l.b16 %v420
        %v709 = vunpack.c.l.b16 %v421
        %v710 = vunpack.c.l.b16 %v422
        %v711 = vunpack.c.l.b16 %v423
        %v712 = vunpack.c.l.b16 %v424
        %v713 = vunpack.c.l.b16 %v425
        %v714 = vunpack.c.l.b16 %v426
        %v715 = vunpack.c.l.b16 %v427
        %v716 = vpack.c.b16 %v653, %v652
        %v717 = vpack.c.b16 %v655, %v654
        %v718 = vpack.c.b16 %v657, %v656
        %v719 = vpack.c.b16 %v659, %v658
        %v720 = vpack.c.b16 %v661, %v660
        %v721 = vpack.c.b16 %v663, %v662
        %v722 = vpack.c.b16 %v665, %v664
        %v723 = vpack.c.b16 %v667, %v666
        %v724 = vpack.c.b16 %v669, %v668
        %v725 = vpack.c.b16 %v671, %v670
        %v726 = vpack.c.b16 %v673, %v672
        %v727 = vpack.c.b16 %v675, %v674
        %v728 = vpack.c.b16 %v677, %v676
        %v729 = vpack.c.b16 %v679, %v678
        %v730 = vpack.c.b16 %v681, %v680
        %v731 = vpack.c.b16 %v683, %v682
        %v732 = vpack.c.b16 %v685, %v684
        %v733 = vpack.c.b16 %v687, %v686
        %v734 = vpack.c.b16 %v689, %v688
        %v735 = vpack.c.b16 %v691, %v690
        %v736 = vpack.c.b16 %v693, %v692
        %v737 = vpack.c.b16 %v695, %v694
        %v738 = vpack.c.b16 %v697, %v696
        %v739 = vpack.c.b16 %v699, %v698
        %v740 = vpack.c.b16 %v701, %v700
        %v741 = vpack.c.b16 %v703, %v702
        %v742 = vpack.c.b16 %v705, %v704
        %v743 = vpack.c.b16 %v707, %v706
        %v744 = vpack.c.b16 %v709, %v708
        %v745 = vpack.c.b16 %v711, %v710
        %v746 = vpack.c.b16 %v713, %v712
        %v747 = vpack.c.b16 %v715, %v714
        %780 = vmatprep.subr.bf16.mxu0 0
        %781 = vmatpush1.bf16.msra.mxu0 %v723
        %782 = vmatprep.subr.bf16.mxu0 0
        %783 = vmatpush1.bf16.msra.mxu0 %v722
        %784 = vmatprep.subr.bf16.mxu0 0
        %785 = vmatpush1.bf16.msra.mxu0 %v721
        %786 = vmatprep.subr.bf16.mxu0 0
        %787 = vmatpush1.bf16.msra.mxu0 %v720
        %788 = vmatprep.subr.bf16.mxu0 0
        %789 = vmatpush1.bf16.msra.mxu0 %v719
        %790 = vmatprep.subr.bf16.mxu0 0
        %791 = vmatpush1.bf16.msra.mxu0 %v718
        %792 = vmatprep.subr.bf16.mxu0 0
        %793 = vmatpush1.bf16.msra.mxu0 %v717
        %794 = vmatprep.subr.bf16.mxu0 0
        %795 = vmatpush1.bf16.msra.mxu0 %v716
        %796 = vmatprep.subr.bf16.mxu0 0
        %797 = vmatpush2.bf16.msra.mxu0 %v731
        %798 = vmatprep.subr.bf16.mxu0 0
        %799 = vmatpush2.bf16.msra.mxu0 %v730
        %800 = vmatprep.subr.bf16.mxu0 0
        %801 = vmatpush2.bf16.msra.mxu0 %v729
        %802 = vmatprep.subr.bf16.mxu0 0
        %803 = vmatpush2.bf16.msra.mxu0 %v728
        %804 = vmatprep.subr.bf16.mxu0 0
        %805 = vmatpush2.bf16.msra.mxu0 %v727
        %806 = vmatprep.subr.bf16.mxu0 0
        %807 = vmatpush2.bf16.msra.mxu0 %v726
        %808 = vmatprep.subr.bf16.mxu0 0
        %809 = vmatpush2.bf16.msra.mxu0 %v725
        %810 = vmatprep.subr.bf16.mxu0 0
        %811 = vmatpush2.bf16.msra.mxu0 %v724
        %812 = vmatprep.mubr.bf16.mxu0 %v525
        %813 = vmatmul.mubr.bf16.gmra.mxu0 %v524
        %v814 = vpop.f32.mrf.mxu0
        %v815 = vadd.f32 0.0, %v814
        %v816 = vpop.f32.mrf.mxu0
        %v817 = vpop.f32.mrf.mxu0
        %v818 = vadd.f32 0.0, %v817
        %v819 = vpop.f32.mrf.mxu0
        %820 = vmatprep.mubr.bf16.mxu0 %v529
        %821 = vmatmul.mubr.bf16.gmra.mxu0 %v528
        %v822 = vpop.f32.mrf.mxu0
        %v823 = vadd.f32 0.0, %v822
        %v824 = vpop.f32.mrf.mxu0
        %v825 = vpop.f32.mrf.mxu0
        %v826 = vadd.f32 0.0, %v825
        %v827 = vpop.f32.mrf.mxu0
        %828 = vmatprep.mubr.bf16.mxu0 %v533
        %829 = vmatmul.mubr.bf16.gmra.mxu0 %v532
        %v830 = vpop.f32.mrf.mxu0
        %v831 = vadd.f32 0.0, %v830
        %v832 = vpop.f32.mrf.mxu0
        %v833 = vpop.f32.mrf.mxu0
        %v834 = vadd.f32 0.0, %v833
        %v835 = vpop.f32.mrf.mxu0
        %836 = vmatprep.mubr.bf16.mxu0 %v537
        %837 = vmatmul.mubr.bf16.gmra.mxu0 %v536
        %v838 = vpop.f32.mrf.mxu0
        %v839 = vadd.f32 0.0, %v838
        %v840 = vpop.f32.mrf.mxu0
        %v841 = vpop.f32.mrf.mxu0
        %v842 = vadd.f32 0.0, %v841
        %v843 = vpop.f32.mrf.mxu0
        %844 = vmatprep.mubr.bf16.mxu0 %v541
        %845 = vmatmul.mubr.bf16.gmra.mxu0 %v540
        %v846 = vpop.f32.mrf.mxu0
        %v847 = vadd.f32 0.0, %v846
        %v848 = vpop.f32.mrf.mxu0
        %v849 = vpop.f32.mrf.mxu0
        %v850 = vadd.f32 0.0, %v849
        %v851 = vpop.f32.mrf.mxu0
        %852 = vmatprep.mubr.bf16.mxu0 %v545
        %853 = vmatmul.mubr.bf16.gmra.mxu0 %v544
        %v854 = vpop.f32.mrf.mxu0
        %v855 = vadd.f32 0.0, %v854
        %v856 = vpop.f32.mrf.mxu0
        %v857 = vpop.f32.mrf.mxu0
        %v858 = vadd.f32 0.0, %v857
        %v859 = vpop.f32.mrf.mxu0
        %860 = vmatprep.mubr.bf16.mxu0 %v549
        %861 = vmatmul.mubr.bf16.gmra.mxu0 %v548
        %v862 = vpop.f32.mrf.mxu0
        %v863 = vadd.f32 0.0, %v862
        %v864 = vpop.f32.mrf.mxu0
        %v865 = vpop.f32.mrf.mxu0
        %v866 = vadd.f32 0.0, %v865
        %v867 = vpop.f32.mrf.mxu0
        %868 = vmatprep.mubr.bf16.mxu0 %v553
        %869 = vmatmul.mubr.bf16.gmra.mxu0 %v552
        %v870 = vpop.f32.mrf.mxu0
        %v871 = vadd.f32 0.0, %v870
        %v872 = vpop.f32.mrf.mxu0
        %v873 = vpop.f32.mrf.mxu0
        %v874 = vadd.f32 0.0, %v873
        %v875 = vpop.f32.mrf.mxu0
        %876 = vdwg.mxu0
        %877 = vmatprep.subr.bf16.mxu0 0
        %878 = vmatpush1.bf16.msra.mxu0 %v739
        %879 = vmatprep.subr.bf16.mxu0 0
        %880 = vmatpush1.bf16.msra.mxu0 %v738
        %881 = vmatprep.subr.bf16.mxu0 0
        %882 = vmatpush1.bf16.msra.mxu0 %v737
        %883 = vmatprep.subr.bf16.mxu0 0
        %884 = vmatpush1.bf16.msra.mxu0 %v736
        %885 = vmatprep.subr.bf16.mxu0 0
        %886 = vmatpush1.bf16.msra.mxu0 %v735
        %887 = vmatprep.subr.bf16.mxu0 0
        %888 = vmatpush1.bf16.msra.mxu0 %v734
        %889 = vmatprep.subr.bf16.mxu0 0
        %890 = vmatpush1.bf16.msra.mxu0 %v733
        %891 = vmatprep.subr.bf16.mxu0 0
        %892 = vmatpush1.bf16.msra.mxu0 %v732
        %893 = vmatprep.subr.bf16.mxu0 0
        %894 = vmatpush2.bf16.msra.mxu0 %v747
        %895 = vmatprep.subr.bf16.mxu0 0
        %896 = vmatpush2.bf16.msra.mxu0 %v746
        %897 = vmatprep.subr.bf16.mxu0 0
        %898 = vmatpush2.bf16.msra.mxu0 %v745
        %899 = vmatprep.subr.bf16.mxu0 0
        %900 = vmatpush2.bf16.msra.mxu0 %v744
        %901 = vmatprep.subr.bf16.mxu0 0
        %902 = vmatpush2.bf16.msra.mxu0 %v743
        %903 = vmatprep.subr.bf16.mxu0 0
        %904 = vmatpush2.bf16.msra.mxu0 %v742
        %905 = vmatprep.subr.bf16.mxu0 0
        %906 = vmatpush2.bf16.msra.mxu0 %v741
        %907 = vmatprep.subr.bf16.mxu0 0
        %908 = vmatpush2.bf16.msra.mxu0 %v740
        %909 = vmatprep.mubr.bf16.mxu0 %v527
        %910 = vmatmul.mubr.bf16.gmra.mxu0 %v526
        %v911 = vpop.f32.mrf.mxu0
        %v912 = vadd.f32 %v815, %v911
        %v913 = vpop.f32.mrf.mxu0
        %v914 = vpop.f32.mrf.mxu0
        %v915 = vadd.f32 %v818, %v914
        %v916 = vpop.f32.mrf.mxu0
        %917 = vmatprep.mubr.bf16.mxu0 %v531
        %918 = vmatmul.mubr.bf16.gmra.mxu0 %v530
        %v919 = vpop.f32.mrf.mxu0
        %v920 = vadd.f32 %v823, %v919
        %v921 = vpop.f32.mrf.mxu0
        %v922 = vpop.f32.mrf.mxu0
        %v923 = vadd.f32 %v826, %v922
        %v924 = vpop.f32.mrf.mxu0
        %925 = vmatprep.mubr.bf16.mxu0 %v535
        %926 = vmatmul.mubr.bf16.gmra.mxu0 %v534
        %v927 = vpop.f32.mrf.mxu0
        %v928 = vadd.f32 %v831, %v927
        %v929 = vpop.f32.mrf.mxu0
        %v930 = vpop.f32.mrf.mxu0
        %v931 = vadd.f32 %v834, %v930
        %v932 = vpop.f32.mrf.mxu0
        %933 = vmatprep.mubr.bf16.mxu0 %v539
        %934 = vmatmul.mubr.bf16.gmra.mxu0 %v538
        %v935 = vpop.f32.mrf.mxu0
        %v936 = vadd.f32 %v839, %v935
        %v937 = vpop.f32.mrf.mxu0
        %v938 = vpop.f32.mrf.mxu0
        %v939 = vadd.f32 %v842, %v938
        %v940 = vpop.f32.mrf.mxu0
        %941 = vmatprep.mubr.bf16.mxu0 %v543
        %942 = vmatmul.mubr.bf16.gmra.mxu0 %v542
        %v943 = vpop.f32.mrf.mxu0
        %v944 = vadd.f32 %v847, %v943
        %v945 = vpop.f32.mrf.mxu0
        %v946 = vpop.f32.mrf.mxu0
        %v947 = vadd.f32 %v850, %v946
        %v948 = vpop.f32.mrf.mxu0
        %949 = vmatprep.mubr.bf16.mxu0 %v547
        %950 = vmatmul.mubr.bf16.gmra.mxu0 %v546
        %v951 = vpop.f32.mrf.mxu0
        %v952 = vadd.f32 %v855, %v951
        %v953 = vpop.f32.mrf.mxu0
        %v954 = vpop.f32.mrf.mxu0
        %v955 = vadd.f32 %v858, %v954
        %v956 = vpop.f32.mrf.mxu0
        %957 = vmatprep.mubr.bf16.mxu0 %v551
        %958 = vmatmul.mubr.bf16.gmra.mxu0 %v550
        %v959 = vpop.f32.mrf.mxu0
        %v960 = vadd.f32 %v863, %v959
        %v961 = vpop.f32.mrf.mxu0
        %v962 = vpop.f32.mrf.mxu0
        %v963 = vadd.f32 %v866, %v962
        %v964 = vpop.f32.mrf.mxu0
        %965 = vmatprep.mubr.bf16.mxu0 %v555
        %966 = vmatmul.mubr.bf16.gmra.mxu0 %v554
        %v967 = vpop.f32.mrf.mxu0
        %v968 = vadd.f32 %v871, %v967
        %v969 = vpop.f32.mrf.mxu0
        %v970 = vpop.f32.mrf.mxu0
        %v971 = vadd.f32 %v874, %v970
        %v972 = vpop.f32.mrf.mxu0
        %973 = vdwg.mxu0
        %v974 = vadd.f32 %v316, %v912
        %v975 = vadd.f32 %v317, %v915
        %v976 = vadd.f32 %v318, %v920
        %v977 = vadd.f32 %v319, %v923
        %v978 = vadd.f32 %v320, %v928
        %v979 = vadd.f32 %v321, %v931
        %v980 = vadd.f32 %v322, %v936
        %v981 = vadd.f32 %v323, %v939
        %v982 = vadd.f32 %v324, %v944
        %v983 = vadd.f32 %v325, %v947
        %v984 = vadd.f32 %v326, %v952
        %v985 = vadd.f32 %v327, %v955
        %v986 = vadd.f32 %v328, %v960
        %v987 = vadd.f32 %v329, %v963
        %v988 = vadd.f32 %v330, %v968
        %v989 = vadd.f32 %v331, %v971
        %990 = vst [vmem:[#allocation2] sm:$0xff] %v974
        %991 = vst [vmem:[#allocation2 + $0x8] sm:$0xff] %v975
        %992 = vst [vmem:[#allocation2 + $0x10] sm:$0xff] %v976
        %993 = vst [vmem:[#allocation2 + $0x18] sm:$0xff] %v977
        %994 = vst [vmem:[#allocation2 + $0x20] sm:$0xff] %v978
        %995 = vst [vmem:[#allocation2 + $0x28] sm:$0xff] %v979
        %996 = vst [vmem:[#allocation2 + $0x30] sm:$0xff] %v980
        %997 = vst [vmem:[#allocation2 + $0x38] sm:$0xff] %v981
        %998 = vst [vmem:[#allocation2 + $0x40] sm:$0xff] %v982
        %999 = vst [vmem:[#allocation2 + $0x48] sm:$0xff] %v983
        %1000 = vst [vmem:[#allocation2 + $0x50] sm:$0xff] %v984
        %1001 = vst [vmem:[#allocation2 + $0x58] sm:$0xff] %v985
        %1002 = vst [vmem:[#allocation2 + $0x60] sm:$0xff] %v986
        %1003 = vst [vmem:[#allocation2 + $0x68] sm:$0xff] %v987
        %1004 = vst [vmem:[#allocation2 + $0x70] sm:$0xff] %v988
        %1005 = vst [vmem:[#allocation2 + $0x78] sm:$0xff] %v989
        %p1006 = scmp.eq.s32.totalorder %s19, 1
        // Predicated region
        $region60: #{_lambda_.5} parent=50 // pred_check
          %p1007 = pneg %p1006
        $region61: #{_lambda_.5} parent=50 // pred_check_branch
          %1009 = sbr.rel (%p1007) target = $region63
        $region62: #{_lambda_.5} parent=50 // pred_region
          %v1010 = vld [vmem:[#allocation2] sm:$0xff]
          %v1011 = vld [vmem:[#allocation2 + $0x8] sm:$0xff]
          %v1012 = vld [vmem:[#allocation2 + $0x10] sm:$0xff]
          %v1013 = vld [vmem:[#allocation2 + $0x18] sm:$0xff]
          %v1014 = vld [vmem:[#allocation2 + $0x20] sm:$0xff]
          %v1015 = vld [vmem:[#allocation2 + $0x28] sm:$0xff]
          %v1016 = vld [vmem:[#allocation2 + $0x30] sm:$0xff]
          %v1017 = vld [vmem:[#allocation2 + $0x38] sm:$0xff]
          %v1018 = vld [vmem:[#allocation2 + $0x40] sm:$0xff]
          %v1019 = vld [vmem:[#allocation2 + $0x48] sm:$0xff]
          %v1020 = vld [vmem:[#allocation2 + $0x50] sm:$0xff]
          %v1021 = vld [vmem:[#allocation2 + $0x58] sm:$0xff]
          %v1022 = vld [vmem:[#allocation2 + $0x60] sm:$0xff]
          %v1023 = vld [vmem:[#allocation2 + $0x68] sm:$0xff]
          %v1024 = vld [vmem:[#allocation2 + $0x70] sm:$0xff]
          %v1025 = vld [vmem:[#allocation2 + $0x78] sm:$0xff]
          %v1026 = vld [vmem:[%s2] sm:$0x1]
          %v1028 = vlaneseq
          %v1029 = vshrl.u32 %v1028, 7
          %v1030 = vsub.s32 0, %v1029
          %v1031 = vrot.slane %v1026, %v1030
          %v1033 = vadd.f32 %v1010, %v1031
          %v1034 = vadd.f32 %v1011, %v1031
          %v1035 = vadd.f32 %v1012, %v1031
          %v1036 = vadd.f32 %v1013, %v1031
          %v1037 = vadd.f32 %v1014, %v1031
          %v1038 = vadd.f32 %v1015, %v1031
          %v1039 = vadd.f32 %v1016, %v1031
          %v1040 = vadd.f32 %v1017, %v1031
          %v1041 = vadd.f32 %v1018, %v1031
          %v1042 = vadd.f32 %v1019, %v1031
          %v1043 = vadd.f32 %v1020, %v1031
          %v1044 = vadd.f32 %v1021, %v1031
          %v1045 = vadd.f32 %v1022, %v1031
          %v1046 = vadd.f32 %v1023, %v1031
          %v1047 = vadd.f32 %v1024, %v1031
          %v1048 = vadd.f32 %v1025, %v1031
          %vm1049 = vcmp.gt.f32.partialorder %v1033, 0.0
          %vm1050 = vcmp.gt.f32.partialorder %v1034, 0.0
          %vm1051 = vcmp.gt.f32.partialorder %v1035, 0.0
          %vm1052 = vcmp.gt.f32.partialorder %v1036, 0.0
          %vm1053 = vcmp.gt.f32.partialorder %v1037, 0.0
          %vm1054 = vcmp.gt.f32.partialorder %v1038, 0.0
          %vm1055 = vcmp.gt.f32.partialorder %v1039, 0.0
          %vm1056 = vcmp.gt.f32.partialorder %v1040, 0.0
          %vm1057 = vcmp.gt.f32.partialorder %v1041, 0.0
          %vm1058 = vcmp.gt.f32.partialorder %v1042, 0.0
          %vm1059 = vcmp.gt.f32.partialorder %v1043, 0.0
          %vm1060 = vcmp.gt.f32.partialorder %v1044, 0.0
          %vm1061 = vcmp.gt.f32.partialorder %v1045, 0.0
          %vm1062 = vcmp.gt.f32.partialorder %v1046, 0.0
          %vm1063 = vcmp.gt.f32.partialorder %v1047, 0.0
          %vm1064 = vcmp.gt.f32.partialorder %v1048, 0.0
          %v1065 = vmul.f32 %v1033, 0.2
          %v1066 = vmul.f32 %v1034, 0.2
          %v1067 = vmul.f32 %v1035, 0.2
          %v1068 = vmul.f32 %v1036, 0.2
          %v1069 = vmul.f32 %v1037, 0.2
          %v1070 = vmul.f32 %v1038, 0.2
          %v1071 = vmul.f32 %v1039, 0.2
          %v1072 = vmul.f32 %v1040, 0.2
          %v1073 = vmul.f32 %v1041, 0.2
          %v1074 = vmul.f32 %v1042, 0.2
          %v1075 = vmul.f32 %v1043, 0.2
          %v1076 = vmul.f32 %v1044, 0.2
          %v1077 = vmul.f32 %v1045, 0.2
          %v1078 = vmul.f32 %v1046, 0.2
          %v1079 = vmul.f32 %v1047, 0.2
          %v1080 = vmul.f32 %v1048, 0.2
          %v1081 = vsel %vm1049, %v1033, %v1065
          %v1082 = vsel %vm1050, %v1034, %v1066
          %v1083 = vsel %vm1051, %v1035, %v1067
          %v1084 = vsel %vm1052, %v1036, %v1068
          %v1085 = vsel %vm1053, %v1037, %v1069
          %v1086 = vsel %vm1054, %v1038, %v1070
          %v1087 = vsel %vm1055, %v1039, %v1071
          %v1088 = vsel %vm1056, %v1040, %v1072
          %v1089 = vsel %vm1057, %v1041, %v1073
          %v1090 = vsel %vm1058, %v1042, %v1074
          %v1091 = vsel %vm1059, %v1043, %v1075
          %v1092 = vsel %vm1060, %v1044, %v1076
          %v1093 = vsel %vm1061, %v1045, %v1077
          %v1094 = vsel %vm1062, %v1046, %v1078
          %v1095 = vsel %vm1063, %v1047, %v1079
          %v1096 = vsel %vm1064, %v1048, %v1080
          %v1097 = vpack.c.bf16 %v1082, %v1081
          %v1098 = vpack.c.bf16 %v1084, %v1083
          %v1099 = vpack.c.bf16 %v1086, %v1085
          %v1100 = vpack.c.bf16 %v1088, %v1087
          %v1101 = vpack.c.bf16 %v1090, %v1089
          %v1102 = vpack.c.bf16 %v1092, %v1091
          %v1103 = vpack.c.bf16 %v1094, %v1093
          %v1104 = vpack.c.bf16 %v1096, %v1095
          %v1113 = vunpack.c.l.b16 %v1097
          %v1114 = vunpack.c.h.b16 %v1097
          %v1115 = vunpack.c.l.b16 %v1098
          %v1116 = vunpack.c.h.b16 %v1098
          %v1117 = vunpack.c.l.b16 %v1099
          %v1118 = vunpack.c.h.b16 %v1099
          %v1119 = vunpack.c.l.b16 %v1100
          %v1120 = vunpack.c.h.b16 %v1100
          %v1121 = vunpack.c.l.b16 %v1101
          %v1122 = vunpack.c.h.b16 %v1101
          %v1123 = vunpack.c.l.b16 %v1102
          %v1124 = vunpack.c.h.b16 %v1102
          %v1125 = vunpack.c.l.b16 %v1103
          %v1126 = vunpack.c.h.b16 %v1103
          %v1127 = vunpack.c.l.b16 %v1104
          %v1128 = vunpack.c.h.b16 %v1104
          %v1129 = vpack.c.b16 %v1113, %v1113
          %v1130 = vpack.c.b16 %v1114, %v1114
          %v1131 = vpack.c.b16 %v1115, %v1115
          %v1132 = vpack.c.b16 %v1116, %v1116
          %v1133 = vpack.c.b16 %v1117, %v1117
          %v1134 = vpack.c.b16 %v1118, %v1118
          %v1135 = vpack.c.b16 %v1119, %v1119
          %v1136 = vpack.c.b16 %v1120, %v1120
          %v1137 = vpack.c.b16 %v1121, %v1121
          %v1138 = vpack.c.b16 %v1122, %v1122
          %v1139 = vpack.c.b16 %v1123, %v1123
          %v1140 = vpack.c.b16 %v1124, %v1124
          %v1141 = vpack.c.b16 %v1125, %v1125
          %v1142 = vpack.c.b16 %v1126, %v1126
          %v1143 = vpack.c.b16 %v1127, %v1127
          %v1144 = vpack.c.b16 %v1128, %v1128
          %1161 = vst [vmem:[%s293] sm:$0xf] %v1129
          %1162 = vst [vmem:[%s293 + $0x4] sm:$0xf] %v1130
          %1163 = vst [vmem:[%s293 + $0x8] sm:$0xf] %v1131
          %1164 = vst [vmem:[%s293 + $0xc] sm:$0xf] %v1132
          %1165 = vst [vmem:[%s293 + $0x10] sm:$0xf] %v1133
          %1166 = vst [vmem:[%s293 + $0x14] sm:$0xf] %v1134
          %1167 = vst [vmem:[%s293 + $0x18] sm:$0xf] %v1135
          %1168 = vst [vmem:[%s293 + $0x1c] sm:$0xf] %v1136
          %1169 = vst [vmem:[%s293 + $0x20] sm:$0xf] %v1137
          %1170 = vst [vmem:[%s293 + $0x24] sm:$0xf] %v1138
          %1171 = vst [vmem:[%s293 + $0x28] sm:$0xf] %v1139
          %1172 = vst [vmem:[%s293 + $0x2c] sm:$0xf] %v1140
          %1173 = vst [vmem:[%s293 + $0x30] sm:$0xf] %v1141
          %1174 = vst [vmem:[%s293 + $0x34] sm:$0xf] %v1142
          %1175 = vst [vmem:[%s293 + $0x38] sm:$0xf] %v1143
          %1176 = vst [vmem:[%s293 + $0x3c] sm:$0xf] %v1144
        $region63: #{_lambda_.5} parent=50 // pred_fallthru
          _
        %s1177 = smul.u32 16, %s18
        %p1178 = scmp.lt.s32.totalorder %s1177, 15
        %s1179 = scalar_select %p1178, %s1177, 15
        %s1180 = smul.addr %s1179, 4
        %s1181 = scalar_lea.vmem %s3, %s1180
        // Predicated region
        $region64: #{_lambda_.5} parent=50 // pred_check
          %p1182 = pneg %p119
        $region65: #{_lambda_.5} parent=50 // pred_check_branch
          %1184 = sbr.rel (%p1182) target = $region67
        $region66: #{_lambda_.5} parent=50 // pred_region
          %s1185 = smul.u32 16, %s18
        $region67: #{_lambda_.5} parent=50 // pred_fallthru
          _
        // Predicated region
        $region68: #{_lambda_.5} parent=50 // pred_check
          %p1186 = pneg %p119
        $region69: #{_lambda_.5} parent=50 // pred_check_branch
          %1188 = sbr.rel (%p1186) target = $region71
        $region70: #{_lambda_.5} parent=50 // pred_region
          %s1189 = smul.u32 16, %s18
          %p1190 = scmp.lt.s32.totalorder %s1189, 15
          %s1191 = scalar_select %p1190, %s1189, 15
          %s1192 = smul.addr %s1191, 4
          %s1193 = scalar_lea.vmem %s3, %s1192
        $region71: #{_lambda_.5} parent=50 // pred_fallthru
          _
      $region51: #{_lambda_.5} parent=5 // pred_fallthru
        _
      %p1194 = scmp.le.s32.totalorder 2, %s9
      // Predicated region
      $region72: #{_lambda_.5} parent=5 // pred_check
        %p1195 = pneg %p1194
      $region73: #{_lambda_.5} parent=5 // pred_check_branch
        %1197 = sbr.rel (%p1195) target = $region75
      $region74: #{_lambda_.5} parent=5 // pred_region
        %s1198 = ssub.s32 %s9, 2
      $region75: #{_lambda_.5} parent=5 // pred_fallthru
        _
    $region6: #{_lambda_.5} parent=1 // loop_footer
      %s13 = sadd.s32 1, %s9
    $region7: #{_lambda_.5} parent=1 // loop_footer_branch
      %8 = sbr.rel target = $region3
    $region8: #{_lambda_.5} parent=1 // loop_exit
      _

// kernel: _lambda_.6
$region0: #{_lambda_.6}
  #allocation0 [shape = 'u32[]', space=smem, size = 0x4, offset = 0x4, fixed_abs, tag = 'smem constant byte address 0x4 - core index']
  #allocation1 [shape = 'u32[144,128]{1,0:T(1,128)}', space=vmem, size = 0x12000, scoped, tag = 'internal scratch']
  #allocation2 [shape = 'f32[32,256]{1,0:T(8,128)}', space=vmem, size = 0x8000, scoped, tag = 'scratch operand']
  %s0 = inlined_call_operand.vmem [shape: bf16[32,2048], index: 0, kind: input, shape index: {}]
  %s1 = inlined_call_operand.vmem [shape: bf16[2048,256], index: 1, kind: input, shape index: {}]
  %s2 = inlined_call_operand.vmem [shape: f32[1,256], index: 2, kind: input, shape index: {}]
  %s3 = inlined_call_operand.vmem [shape: bf16[32,256], index: 3, kind: output, shape index: {}]
  %s4 = sld [smem:[#allocation0]]
  $region76: #{_lambda_.6} parent=0
    _
  %s6 = ssub.s32 1, %s4
  %s7 = scalar_select 0, %s6, %s4
  $region1: #{_lambda_.6} parent=0
    #allocation3 [shape = 'u8[65536]{0}', space=vmem, size = 0x10000, scoped, tag = 'input window, operand 0']
    loop: start=0, step=1, limit=6
    $region2: #{_lambda_.6} parent=1 // loop_pre_header
      _
    $region3: #{_lambda_.6} parent=1 // loop_header
      %s9 = sphi 0, %s13
      %p10 = scmp.ge.s32.totalorder %s9, 6
      %s16 = sphi 0, %s28
      %s17 = sphi 0, %s24
      %s18 = sphi 0, %s16
      %s19 = sphi 0, %s17
      %s20 = sphi 0, %s18
      %s21 = sphi 0, %s19
      %s33 = sphi 0, %s35
      %s36 = sphi 0, %s33
      %s37 = sphi 0, %s36
      %s53 = sphi 0, %s37
      %s59 = sphi 0, %s61
      %s62 = sphi 0, %s59
      %s63 = sphi 0, %s62
      %s79 = sphi 0, %s63
      %s83 = sphi 0, %s83
      %s85 = sphi 0, %s83
      %s86 = sphi 0, %s85
      %s100 = sphi 0, %s86
      %s106 = sphi 0, %s108
      %s109 = sphi 0, %s106
      %s110 = sphi 0, %s109
      %s126 = sphi 0, %s110
    $region4: #{_lambda_.6} parent=1 // loop_header_branch
      %12 = sbr.rel (%p10) target = $region8
    $region5: #{_lambda_.6} parent=1 // loop_body
      %s14 = ssub.s32 %s9, 1
      %s15 = ssub.s32 %s9, 2
      %s22 = sadd.s32 1, %s17
      %p23 = scmp.ge.s32.totalorder %s22, 4
      %s24 = scalar_select %p23, 0, %s22
      %s25 = sadd.s32 1, %s16
      %s26 = scalar_select %p23, %s25, %s16
      %p27 = scmp.ge.s32.totalorder %s26, 1
      %s28 = scalar_select %p27, 0, %s26
      %s29 = ssub.s32 %s16, %s28
      %s30 = ssub.s32 %s17, %s24
      %s31 = sor.u32 %s29, %s30
      %p32 = scmp.eq.s32.totalorder %s31, 0
      %s34 = sadd.s32 %s33, 1
      %s35 = scalar_select %p32, %s33, %s34
      %p38 = pneg %p32
      %p39 = scmp.eq.s32.totalorder %s9, 3
      %p40 = por %p38, %p39
      %p41 = scmp.ne.s32.totalorder %s33, %s36
      %p42 = scmp.eq.s32.totalorder %s9, 0
      %p43 = por %p41, %p42
      %p44 = scmp.ne.s32.totalorder %s33, %s36
      %p45 = scmp.eq.s32.totalorder %s14, 3
      %p46 = por %p44, %p45
      %p47 = scmp.ne.s32.totalorder %s36, %s37
      %p48 = scmp.eq.s32.totalorder %s14, 0
      %p49 = por %p47, %p48
      %p50 = scmp.ne.s32.totalorder %s36, %s37
      %p51 = scmp.eq.s32.totalorder %s15, 3
      %p52 = por %p50, %p51
      %p54 = scmp.ne.s32.totalorder %s37, %s53
      %p55 = scmp.eq.s32.totalorder %s15, 0
      %p56 = por %p54, %p55
      %s57 = ssub.s32 %s17, %s24
      %p58 = scmp.eq.s32.totalorder %s57, 0
      %s60 = sadd.s32 %s59, 1
      %s61 = scalar_select %p58, %s59, %s60
      %p64 = pneg %p58
      %p65 = scmp.eq.s32.totalorder %s9, 3
      %p66 = por %p64, %p65
      %p67 = scmp.ne.s32.totalorder %s59, %s62
      %p68 = scmp.eq.s32.totalorder %s9, 0
      %p69 = por %p67, %p68
      %p70 = scmp.ne.s32.totalorder %s59, %s62
      %p71 = scmp.eq.s32.totalorder %s14, 3
      %p72 = por %p70, %p71
      %p73 = scmp.ne.s32.totalorder %s62, %s63
      %p74 = scmp.eq.s32.totalorder %s14, 0
      %p75 = por %p73, %p74
      %p76 = scmp.ne.s32.totalorder %s62, %s63
      %p77 = scmp.eq.s32.totalorder %s15, 3
      %p78 = por %p76, %p77
      %p80 = scmp.ne.s32.totalorder %s63, %s79
      %p81 = scmp.eq.s32.totalorder %s15, 0
      %p82 = por %p80, %p81
      %s84 = sadd.s32 %s83, 1
      %p87 = scmp.eq.s32.totalorder %s9, 3
      %p88 = scmp.ne.s32.totalorder %s83, %s85
      %p89 = scmp.eq.s32.totalorder %s9, 0
      %p90 = por %p88, %p89
      %p91 = scmp.ne.s32.totalorder %s83, %s85
      %p92 = scmp.eq.s32.totalorder %s14, 3
      %p93 = por %p91, %p92
      %p94 = scmp.ne.s32.totalorder %s85, %s86
      %p95 = scmp.eq.s32.totalorder %s14, 0
      %p96 = por %p94, %p95
      %p97 = scmp.ne.s32.totalorder %s85, %s86
      %p98 = scmp.eq.s32.totalorder %s15, 3
      %p99 = por %p97, %p98
      %p101 = scmp.ne.s32.totalorder %s86, %s100
      %p102 = scmp.eq.s32.totalorder %s15, 0
      %p103 = por %p101, %p102
      %s104 = ssub.s32 %s16, %s28
      %p105 = scmp.eq.s32.totalorder %s104, 0
      %s107 = sadd.s32 %s106, 1
      %s108 = scalar_select %p105, %s106, %s107
      %p111 = pneg %p105
      %p112 = scmp.eq.s32.totalorder %s9, 3
      %p113 = por %p111, %p112
      %p114 = scmp.ne.s32.totalorder %s106, %s109
      %p115 = scmp.eq.s32.totalorder %s9, 0
      %p116 = por %p114, %p115
      %p117 = scmp.ne.s32.totalorder %s106, %s109
      %p118 = scmp.eq.s32.totalorder %s14, 3
      %p119 = por %p117, %p118
      %p120 = scmp.ne.s32.totalorder %s109, %s110
      %p121 = scmp.eq.s32.totalorder %s14, 0
      %p122 = por %p120, %p121
      %p123 = scmp.ne.s32.totalorder %s109, %s110
      %p124 = scmp.eq.s32.totalorder %s15, 3
      %p125 = por %p123, %p124
      %p127 = scmp.ne.s32.totalorder %s110, %s126
      %p128 = scmp.eq.s32.totalorder %s15, 0
      %p129 = por %p127, %p128
      %p130 = scmp.le.s32.totalorder 1, %s9
      %p131 = scmp.lt.s32.totalorder %s9, 5
      %p132 = pnand %p130, %p131
      %p133 = pneg %p132
      // Predicated region
      $region9: #{_lambda_.6} parent=5 // pred_check
        _
      $region10: #{_lambda_.6} parent=5 // pred_check_branch
        %135 = sbr.rel (%p132) target = $region12
      $region11: #{_lambda_.6} parent=5 // pred_region
        %s136 = ssub.s32 %s9, 1
        // Predicated region
        $region13: #{_lambda_.6} parent=11 // pred_check
          %p137 = pneg %p96
        $region14: #{_lambda_.6} parent=11 // pred_check_branch
          %139 = sbr.rel (%p137) target = $region16
        $region15: #{_lambda_.6} parent=11 // pred_region
          _
        $region16: #{_lambda_.6} parent=11 // pred_fallthru
          _
      $region12: #{_lambda_.6} parent=5 // pred_fallthru
        _
      %p140 = scmp.lt.s32.totalorder %s9, 4
      // Predicated region
      $region17: #{_lambda_.6} parent=5 // pred_check
        %p141 = pneg %p140
      $region18: #{_lambda_.6} parent=5 // pred_check_branch
        %143 = sbr.rel (%p141) target = $region20
      $region19: #{_lambda_.6} parent=5 // pred_region
        // Predicated region
        $region21: #{_lambda_.6} parent=19 // pred_check
          %p144 = pneg %p43
        $region22: #{_lambda_.6} parent=19 // pred_check_branch
          %146 = sbr.rel (%p144) target = $region24
        $region23: #{_lambda_.6} parent=19 // pred_region
          %s147 = sand.u32 %s33, 1
          %s148 = sand.u32 %s33, 1
          %s149 = smul.addr %s148, 64
          %s150 = scalar_lea.vmem [#allocation3], %s149
          %s151 = smul.u32 4, %s16
          %s152 = smul.u32 4, %s17
          %s153 = smul.addr %s151, 16
          %s154 = sadd.s32 %s152, %s153
          %s155 = smul.addr %s154, 4
          %s156 = scalar_lea.vmem %s0, %s155
          // Predicated region
          $region25: #{_lambda_.6} parent=23 // pred_check
            _
          $region26: #{_lambda_.6} parent=23 // pred_check_branch
            %158 = sbr.rel (0) target = $region28
          $region27: #{_lambda_.6} parent=23 // pred_region
            // Predicated region
            $region29: #{_lambda_.6} parent=27 // pred_check
              _
            $region30: #{_lambda_.6} parent=27 // pred_check_branch
              %160 = sbr.rel (0) target = $region32
            $region31: #{_lambda_.6} parent=27 // pred_region
              loop: start=0, step=1, limit=1
              $region33: #{_lambda_.6} parent=31 // loop_pre_header
                _
              $region34: #{_lambda_.6} parent=31 // loop_header
                %s162 = sphi 0, %s166
                %p163 = scmp.ge.s32.totalorder %s162, 1
                %s167 = sphi %s156, %s156
                %s168 = sphi %s150, %s150
              $region35: #{_lambda_.6} parent=31 // loop_header_branch
                %165 = sbr.rel (%p163) target = $region39
              $region36: #{_lambda_.6} parent=31 // loop_body
                %v169 = vld [vmem:[%s167] sm:$0xff]
                %170 = vst [vmem:[%s168] sm:$0xff] %v169
                %v171 = vld [vmem:[%s167 + $0x8] sm:$0xff]
                %172 = vst [vmem:[%s168 + $0x8] sm:$0xff] %v171
                %v173 = vld [vmem:[%s167 + $0x40] sm:$0xff]
                %174 = vst [vmem:[%s168 + $0x10] sm:$0xff] %v173
                %v175 = vld [vmem:[%s167 + $0x48] sm:$0xff]
                %176 = vst [vmem:[%s168 + $0x18] sm:$0xff] %v175
                %v177 = vld [vmem:[%s167 + $0x80] sm:$0xff]
                %178 = vst [vmem:[%s168 + $0x20] sm:$0xff] %v177
                %v179 = vld [vmem:[%s167 + $0x88] sm:$0xff]
                %180 = vst [vmem:[%s168 + $0x28] sm:$0xff] %v179
                %v181 = vld [vmem:[%s167 + $0xc0] sm:$0xff]
                %182 = vst [vmem:[%s168 + $0x30] sm:$0xff] %v181
                %v183 = vld [vmem:[%s167 + $0xc8] sm:$0xff]
                %184 = vst [vmem:[%s168 + $0x38] sm:$0xff] %v183
              $region37: #{_lambda_.6} parent=31 // loop_footer
                %s166 = sadd.s32 1, %s162
              $region38: #{_lambda_.6} parent=31 // loop_footer_branch
                %161 = sbr.rel target = $region34
              $region39: #{_lambda_.6} parent=31 // loop_exit
                _
            $region32: #{_lambda_.6} parent=27 // pred_fallthru
              _
            // Predicated region
            $region40: #{_lambda_.6} parent=27 // pred_check
              _
            $region41: #{_lambda_.6} parent=27 // pred_check_branch
              %186 = sbr.rel target = $region43
            $region42: #{_lambda_.6} parent=27 // pred_region
              _
            $region43: #{_lambda_.6} parent=27 // pred_fallthru
              _
          $region28: #{_lambda_.6} parent=23 // pred_fallthru
            _
          %187 = vnop
        $region24: #{_lambda_.6} parent=19 // pred_fallthru
          _
        // Predicated region
        $region44: #{_lambda_.6} parent=19 // pred_check
          %p188 = pneg %p69
        $region45: #{_lambda_.6} parent=19 // pred_check_branch
          %190 = sbr.rel (%p188) target = $region47
        $region46: #{_lambda_.6} parent=19 // pred_region
          %s191 = smul.u32 64, %s17
          %p192 = scmp.lt.s32.totalorder %s191, 255
          %s193 = scalar_select %p192, %s191, 255
          %s194 = smul.addr %s193, 2
          %s195 = smul.addr %s194, 4
          %s196 = scalar_lea.vmem %s1, %s195
          %s197 = smul.u32 64, %s17
        $region47: #{_lambda_.6} parent=19 // pred_fallthru
          _
      $region20: #{_lambda_.6} parent=5 // pred_fallthru
        _
      %p198 = scmp.le.s32.totalorder 1, %s9
      %p199 = scmp.lt.s32.totalorder %s9, 5
      %p200 = pnand %p198, %p199
      %p201 = pneg %p200
      // Predicated region
      $region48: #{_lambda_.6} parent=5 // pred_check
        _
      $region49: #{_lambda_.6} parent=5 // pred_check_branch
        %203 = sbr.rel (%p200) target = $region51
      $region50: #{_lambda_.6} parent=5 // pred_region
        %s204 = ssub.s32 %s9, 1
        %s205 = sand.u32 %s36, 1
        %s206 = sand.u32 %s36, 1
        %s207 = smul.addr %s206, 64
        %s208 = scalar_lea.vmem [#allocation3], %s207
        // Predicated region
        $region52: #{_lambda_.6} parent=50 // pred_check
          %p209 = pneg %p49
        $region53: #{_lambda_.6} parent=50 // pred_check_branch
          %211 = sbr.rel (%p209) target = $region55
        $region54: #{_lambda_.6} parent=50 // pred_region
          _
        $region55: #{_lambda_.6} parent=50 // pred_fallthru
          _
        %s212 = sand.u32 %s36, 1
        %s213 = sand.u32 %s36, 1
        %s214 = smul.addr %s213, 64
        %s215 = scalar_lea.vmem [#allocation3], %s214
        %p216 = pneg %p49
        %p217 = pneg %p46
        %s218 = smul.u32 64, %s19
        %p219 = scmp.lt.s32.totalorder %s218, 255
        %s220 = scalar_select %p219, %s218, 255
        %s221 = smul.addr %s220, 2
        %s222 = smul.addr %s221, 4
        %s223 = scalar_lea.vmem %s1, %s222
        %p224 = pneg %p75
        %p225 = pneg %p72
        %p226 = pneg %p96
        %p227 = pneg %p93
        %p228 = pneg %p122
        %p229 = pneg %p119
        %s230 = smul.u32 4, %s18
        %p231 = scmp.lt.s32.totalorder %s230, 3
        %s232 = scalar_select %p231, %s230, 3
        %s233 = smul.addr %s232, 2
        %s234 = smul.addr %s233, 4
        %s235 = scalar_lea.vmem %s3, %s234
        %s236 = smul.u32 4, %s18
        %s237 = smul.u32 4, %s19
        %s238 = smul.u32 64, %s19
        %p239 = scmp.lt.s32.totalorder %s238, 255
        %s240 = scalar_select %p239, %s238, 255
        %s241 = smul.addr %s240, 2
        %s242 = smul.addr %s241, 4
        %s243 = scalar_lea.vmem %s1, %s242
        %s244 = smul.u32 64, %s19
        %s245 = smul.u32 4, %s18
        %p246 = scmp.lt.s32.totalorder %s245, 3
        %s247 = scalar_select %p246, %s245, 3
        %s248 = smul.addr %s247, 2
        %s249 = smul.addr %s248, 4
        %s250 = scalar_lea.vmem %s3, %s249
        %s251 = smul.u32 4, %s18
        %p252 = scmp.eq.s32.totalorder %s19, 0
        // Predicated region
        $region56: #{_lambda_.6} parent=50 // pred_check
          %p253 = pneg %p252
        $region57: #{_lambda_.6} parent=50 // pred_check_branch
          %255 = sbr.rel (%p253) target = $region59
        $region58: #{_lambda_.6} parent=50 // pred_region
          %256 = vst [vmem:[#allocation2] sm:$0xff] 0.0
          %257 = vst [vmem:[#allocation2 + $0x8] sm:$0xff] 0.0
          %258 = vst [vmem:[#allocation2 + $0x10] sm:$0xff] 0.0
          %259 = vst [vmem:[#allocation2 + $0x18] sm:$0xff] 0.0
          %260 = vst [vmem:[#allocation2 + $0x20] sm:$0xff] 0.0
          %261 = vst [vmem:[#allocation2 + $0x28] sm:$0xff] 0.0
          %262 = vst [vmem:[#allocation2 + $0x30] sm:$0xff] 0.0
          %263 = vst [vmem:[#allocation2 + $0x38] sm:$0xff] 0.0
        $region59: #{_lambda_.6} parent=50 // pred_fallthru
          _
        %v264 = vld [vmem:[#allocation2] sm:$0xff]
        %v265 = vld [vmem:[#allocation2 + $0x8] sm:$0xff]
        %v266 = vld [vmem:[#allocation2 + $0x10] sm:$0xff]
        %v267 = vld [vmem:[#allocation2 + $0x18] sm:$0xff]
        %v268 = vld [vmem:[#allocation2 + $0x20] sm:$0xff]
        %v269 = vld [vmem:[#allocation2 + $0x28] sm:$0xff]
        %v270 = vld [vmem:[#allocation2 + $0x30] sm:$0xff]
        %v271 = vld [vmem:[#allocation2 + $0x38] sm:$0xff]
        %v272 = vld [vmem:[%s208] sm:$0xff]
        %v273 = vld [vmem:[%s208 + $0x8] sm:$0xff]
        %v274 = vld [vmem:[%s208 + $0x10] sm:$0xff]
        %v275 = vld [vmem:[%s208 + $0x18] sm:$0xff]
        %v276 = vld [vmem:[%s208 + $0x20] sm:$0xff]
        %v277 = vld [vmem:[%s208 + $0x28] sm:$0xff]
        %v278 = vld [vmem:[%s208 + $0x30] sm:$0xff]
        %v279 = vld [vmem:[%s208 + $0x38] sm:$0xff]
        %v280 = vld [vmem:[%s243] sm:$0xff]
        %v281 = vld [vmem:[%s243 + $0x8] sm:$0xff]
        %v282 = vld [vmem:[%s243 + $0x10] sm:$0xff]
        %v283 = vld [vmem:[%s243 + $0x18] sm:$0xff]
        %v284 = vld [vmem:[%s243 + $0x20] sm:$0xff]
        %v285 = vld [vmem:[%s243 + $0x28] sm:$0xff]
        %v286 = vld [vmem:[%s243 + $0x30] sm:$0xff]
        %v287 = vld [vmem:[%s243 + $0x38] sm:$0xff]
        %v288 = vld [vmem:[%s243 + $0x40] sm:$0xff]
        %v289 = vld [vmem:[%s243 + $0x48] sm:$0xff]
        %v290 = vld [vmem:[%s243 + $0x50] sm:$0xff]
        %v291 = vld [vmem:[%s243 + $0x58] sm:$0xff]
        %v292 = vld [vmem:[%s243 + $0x60] sm:$0xff]
        %v293 = vld [vmem:[%s243 + $0x68] sm:$0xff]
        %v294 = vld [vmem:[%s243 + $0x70] sm:$0xff]
        %v295 = vld [vmem:[%s243 + $0x78] sm:$0xff]
        %v296 = vld [vmem:[%s243 + $0x80] sm:$0xff]
        %v297 = vld [vmem:[%s243 + $0x88] sm:$0xff]
        %v298 = vld [vmem:[%s243 + $0x90] sm:$0xff]
        %v299 = vld [vmem:[%s243 + $0x98] sm:$0xff]
        %v300 = vld [vmem:[%s243 + $0xa0] sm:$0xff]
        %v301 = vld [vmem:[%s243 + $0xa8] sm:$0xff]
        %v302 = vld [vmem:[%s243 + $0xb0] sm:$0xff]
        %v303 = vld [vmem:[%s243 + $0xb8] sm:$0xff]
        %v304 = vld [vmem:[%s243 + $0xc0] sm:$0xff]
        %v305 = vld [vmem:[%s243 + $0xc8] sm:$0xff]
        %v306 = vld [vmem:[%s243 + $0xd0] sm:$0xff]
        %v307 = vld [vmem:[%s243 + $0xd8] sm:$0xff]
        %v308 = vld [vmem:[%s243 + $0xe0] sm:$0xff]
        %v309 = vld [vmem:[%s243 + $0xe8] sm:$0xff]
        %v310 = vld [vmem:[%s243 + $0xf0] sm:$0xff]
        %v311 = vld [vmem:[%s243 + $0xf8] sm:$0xff]
        %v312 = vld [vmem:[%s243 + $0x100] sm:$0xff]
        %v313 = vld [vmem:[%s243 + $0x108] sm:$0xff]
        %v314 = vld [vmem:[%s243 + $0x110] sm:$0xff]
        %v315 = vld [vmem:[%s243 + $0x118] sm:$0xff]
        %v316 = vld [vmem:[%s243 + $0x120] sm:$0xff]
        %v317 = vld [vmem:[%s243 + $0x128] sm:$0xff]
        %v318 = vld [vmem:[%s243 + $0x130] sm:$0xff]
        %v319 = vld [vmem:[%s243 + $0x138] sm:$0xff]
        %v320 = vld [vmem:[%s243 + $0x140] sm:$0xff]
        %v321 = vld [vmem:[%s243 + $0x148] sm:$0xff]
        %v322 = vld [vmem:[%s243 + $0x150] sm:$0xff]
        %v323 = vld [vmem:[%s243 + $0x158] sm:$0xff]
        %v324 = vld [vmem:[%s243 + $0x160] sm:$0xff]
        %v325 = vld [vmem:[%s243 + $0x168] sm:$0xff]
        %v326 = vld [vmem:[%s243 + $0x170] sm:$0xff]
        %v327 = vld [vmem:[%s243 + $0x178] sm:$0xff]
        %v328 = vld [vmem:[%s243 + $0x180] sm:$0xff]
        %v329 = vld [vmem:[%s243 + $0x188] sm:$0xff]
        %v330 = vld [vmem:[%s243 + $0x190] sm:$0xff]
        %v331 = vld [vmem:[%s243 + $0x198] sm:$0xff]
        %v332 = vld [vmem:[%s243 + $0x1a0] sm:$0xff]
        %v333 = vld [vmem:[%s243 + $0x1a8] sm:$0xff]
        %v334 = vld [vmem:[%s243 + $0x1b0] sm:$0xff]
        %v335 = vld [vmem:[%s243 + $0x1b8] sm:$0xff]
        %v336 = vld [vmem:[%s243 + $0x1c0] sm:$0xff]
        %v337 = vld [vmem:[%s243 + $0x1c8] sm:$0xff]
        %v338 = vld [vmem:[%s243 + $0x1d0] sm:$0xff]
        %v339 = vld [vmem:[%s243 + $0x1d8] sm:$0xff]
        %v340 = vld [vmem:[%s243 + $0x1e0] sm:$0xff]
        %v341 = vld [vmem:[%s243 + $0x1e8] sm:$0xff]
        %v342 = vld [vmem:[%s243 + $0x1f0] sm:$0xff]
        %v343 = vld [vmem:[%s243 + $0x1f8] sm:$0xff]
        %v352 = vunpack.c.l.b16 %v272
        %v353 = vunpack.c.h.b16 %v272
        %v354 = vunpack.c.l.b16 %v273
        %v355 = vunpack.c.h.b16 %v273
        %v356 = vunpack.c.l.b16 %v274
        %v357 = vunpack.c.h.b16 %v274
        %v358 = vunpack.c.l.b16 %v275
        %v359 = vunpack.c.h.b16 %v275
        %v360 = vunpack.c.l.b16 %v276
        %v361 = vunpack.c.h.b16 %v276
        %v362 = vunpack.c.l.b16 %v277
        %v363 = vunpack.c.h.b16 %v277
        %v364 = vunpack.c.l.b16 %v278
        %v365 = vunpack.c.h.b16 %v278
        %v366 = vunpack.c.l.b16 %v279
        %v367 = vunpack.c.h.b16 %v279
        %v368 = vpack.c.b16 %v356, %v352
        %v369 = vpack.c.b16 %v357, %v353
        %v370 = vpack.c.b16 %v358, %v354
        %v371 = vpack.c.b16 %v359, %v355
        %v372 = vpack.c.b16 %v364, %v360
        %v373 = vpack.c.b16 %v365, %v361
        %v374 = vpack.c.b16 %v366, %v362
        %v375 = vpack.c.b16 %v367, %v363
        %v448 = vunpack.c.l.b16 %v280
        %v449 = vunpack.c.h.b16 %v280
        %v450 = vunpack.c.l.b16 %v281
        %v451 = vunpack.c.h.b16 %v281
        %v452 = vunpack.c.l.b16 %v282
        %v453 = vunpack.c.h.b16 %v282
        %v454 = vunpack.c.l.b16 %v283
        %v455 = vunpack.c.h.b16 %v283
        %v456 = vunpack.c.l.b16 %v284
        %v457 = vunpack.c.h.b16 %v284
        %v458 = vunpack.c.l.b16 %v285
        %v459 = vunpack.c.h.b16 %v285
        %v460 = vunpack.c.l.b16 %v286
        %v461 = vunpack.c.h.b16 %v286
        %v462 = vunpack.c.l.b16 %v287
        %v463 = vunpack.c.h.b16 %v287
        %v464 = vunpack.c.l.b16 %v288
        %v465 = vunpack.c.h.b16 %v288
        %v466 = vunpack.c.l.b16 %v289
        %v467 = vunpack.c.h.b16 %v289
        %v468 = vunpack.c.l.b16 %v290
        %v469 = vunpack.c.h.b16 %v290
        %v470 = vunpack.c.l.b16 %v291
        %v471 = vunpack.c.h.b16 %v291
        %v472 = vunpack.c.l.b16 %v292
        %v473 = vunpack.c.h.b16 %v292
        %v474 = vunpack.c.l.b16 %v293
        %v475 = vunpack.c.h.b16 %v293
        %v476 = vunpack.c.l.b16 %v294
        %v477 = vunpack.c.h.b16 %v294
        %v478 = vunpack.c.l.b16 %v295
        %v479 = vunpack.c.h.b16 %v295
        %v480 = vunpack.c.l.b16 %v296
        %v481 = vunpack.c.h.b16 %v296
        %v482 = vunpack.c.l.b16 %v297
        %v483 = vunpack.c.h.b16 %v297
        %v484 = vunpack.c.l.b16 %v298
        %v485 = vunpack.c.h.b16 %v298
        %v486 = vunpack.c.l.b16 %v299
        %v487 = vunpack.c.h.b16 %v299
        %v488 = vunpack.c.l.b16 %v300
        %v489 = vunpack.c.h.b16 %v300
        %v490 = vunpack.c.l.b16 %v301
        %v491 = vunpack.c.h.b16 %v301
        %v492 = vunpack.c.l.b16 %v302
        %v493 = vunpack.c.h.b16 %v302
        %v494 = vunpack.c.l.b16 %v303
        %v495 = vunpack.c.h.b16 %v303
        %v496 = vunpack.c.l.b16 %v304
        %v497 = vunpack.c.h.b16 %v304
        %v498 = vunpack.c.l.b16 %v305
        %v499 = vunpack.c.h.b16 %v305
        %v500 = vunpack.c.l.b16 %v306
        %v501 = vunpack.c.h.b16 %v306
        %v502 = vunpack.c.l.b16 %v307
        %v503 = vunpack.c.h.b16 %v307
        %v504 = vunpack.c.l.b16 %v308
        %v505 = vunpack.c.h.b16 %v308
        %v506 = vunpack.c.l.b16 %v309
        %v507 = vunpack.c.h.b16 %v309
        %v508 = vunpack.c.l.b16 %v310
        %v509 = vunpack.c.h.b16 %v310
        %v510 = vunpack.c.l.b16 %v311
        %v511 = vunpack.c.h.b16 %v311
        %v512 = vunpack.c.l.b16 %v312
        %v513 = vunpack.c.h.b16 %v312
        %v514 = vunpack.c.l.b16 %v313
        %v515 = vunpack.c.h.b16 %v313
        %v516 = vunpack.c.l.b16 %v314
        %v517 = vunpack.c.h.b16 %v314
        %v518 = vunpack.c.l.b16 %v315
        %v519 = vunpack.c.h.b16 %v315
        %v520 = vunpack.c.l.b16 %v316
        %v521 = vunpack.c.h.b16 %v316
        %v522 = vunpack.c.l.b16 %v317
        %v523 = vunpack.c.h.b16 %v317
        %v524 = vunpack.c.l.b16 %v318
        %v525 = vunpack.c.h.b16 %v318
        %v526 = vunpack.c.l.b16 %v319
        %v527 = vunpack.c.h.b16 %v319
        %v528 = vunpack.c.l.b16 %v320
        %v529 = vunpack.c.h.b16 %v320
        %v530 = vunpack.c.l.b16 %v321
        %v531 = vunpack.c.h.b16 %v321
        %v532 = vunpack.c.l.b16 %v322
        %v533 = vunpack.c.h.b16 %v322
        %v534 = vunpack.c.l.b16 %v323
        %v535 = vunpack.c.h.b16 %v323
        %v536 = vunpack.c.l.b16 %v324
        %v537 = vunpack.c.h.b16 %v324
        %v538 = vunpack.c.l.b16 %v325
        %v539 = vunpack.c.h.b16 %v325
        %v540 = vunpack.c.l.b16 %v326
        %v541 = vunpack.c.h.b16 %v326
        %v542 = vunpack.c.l.b16 %v327
        %v543 = vunpack.c.h.b16 %v327
        %v544 = vunpack.c.l.b16 %v328
        %v545 = vunpack.c.h.b16 %v328
        %v546 = vunpack.c.l.b16 %v329
        %v547 = vunpack.c.h.b16 %v329
        %v548 = vunpack.c.l.b16 %v330
        %v549 = vunpack.c.h.b16 %v330
        %v550 = vunpack.c.l.b16 %v331
        %v551 = vunpack.c.h.b16 %v331
        %v552 = vunpack.c.l.b16 %v332
        %v553 = vunpack.c.h.b16 %v332
        %v554 = vunpack.c.l.b16 %v333
        %v555 = vunpack.c.h.b16 %v333
        %v556 = vunpack.c.l.b16 %v334
        %v557 = vunpack.c.h.b16 %v334
        %v558 = vunpack.c.l.b16 %v335
        %v559 = vunpack.c.h.b16 %v335
        %v560 = vunpack.c.l.b16 %v336
        %v561 = vunpack.c.h.b16 %v336
        %v562 = vunpack.c.l.b16 %v337
        %v563 = vunpack.c.h.b16 %v337
        %v564 = vunpack.c.l.b16 %v338
        %v565 = vunpack.c.h.b16 %v338
        %v566 = vunpack.c.l.b16 %v339
        %v567 = vunpack.c.h.b16 %v339
        %v568 = vunpack.c.l.b16 %v340
        %v569 = vunpack.c.h.b16 %v340
        %v570 = vunpack.c.l.b16 %v341
        %v571 = vunpack.c.h.b16 %v341
        %v572 = vunpack.c.l.b16 %v342
        %v573 = vunpack.c.h.b16 %v342
        %v574 = vunpack.c.l.b16 %v343
        %v575 = vunpack.c.h.b16 %v343
        %v576 = vpack.c.b16 %v450, %v448
        %v577 = vpack.c.b16 %v451, %v449
        %v578 = vpack.c.b16 %v454, %v452
        %v579 = vpack.c.b16 %v455, %v453
        %v580 = vpack.c.b16 %v458, %v456
        %v581 = vpack.c.b16 %v459, %v457
        %v582 = vpack.c.b16 %v462, %v460
        %v583 = vpack.c.b16 %v463, %v461
        %v584 = vpack.c.b16 %v466, %v464
        %v585 = vpack.c.b16 %v467, %v465
        %v586 = vpack.c.b16 %v470, %v468
        %v587 = vpack.c.b16 %v471, %v469
        %v588 = vpack.c.b16 %v474, %v472
        %v589 = vpack.c.b16 %v475, %v473
        %v590 = vpack.c.b16 %v478, %v476
        %v591 = vpack.c.b16 %v479, %v477
        %v592 = vpack.c.b16 %v482, %v480
        %v593 = vpack.c.b16 %v483, %v481
        %v594 = vpack.c.b16 %v486, %v484
        %v595 = vpack.c.b16 %v487, %v485
        %v596 = vpack.c.b16 %v490, %v488
        %v597 = vpack.c.b16 %v491, %v489
        %v598 = vpack.c.b16 %v494, %v492
        %v599 = vpack.c.b16 %v495, %v493
        %v600 = vpack.c.b16 %v498, %v496
        %v601 = vpack.c.b16 %v499, %v497
        %v602 = vpack.c.b16 %v502, %v500
        %v603 = vpack.c.b16 %v503, %v501
        %v604 = vpack.c.b16 %v506, %v504
        %v605 = vpack.c.b16 %v507, %v505
        %v606 = vpack.c.b16 %v510, %v508
        %v607 = vpack.c.b16 %v511, %v509
        %v608 = vpack.c.b16 %v514, %v512
        %v609 = vpack.c.b16 %v515, %v513
        %v610 = vpack.c.b16 %v518, %v516
        %v611 = vpack.c.b16 %v519, %v517
        %v612 = vpack.c.b16 %v522, %v520
        %v613 = vpack.c.b16 %v523, %v521
        %v614 = vpack.c.b16 %v526, %v524
        %v615 = vpack.c.b16 %v527, %v525
        %v616 = vpack.c.b16 %v530, %v528
        %v617 = vpack.c.b16 %v531, %v529
        %v618 = vpack.c.b16 %v534, %v532
        %v619 = vpack.c.b16 %v535, %v533
        %v620 = vpack.c.b16 %v538, %v536
        %v621 = vpack.c.b16 %v539, %v537
        %v622 = vpack.c.b16 %v542, %v540
        %v623 = vpack.c.b16 %v543, %v541
        %v624 = vpack.c.b16 %v546, %v544
        %v625 = vpack.c.b16 %v547, %v545
        %v626 = vpack.c.b16 %v550, %v548
        %v627 = vpack.c.b16 %v551, %v549
        %v628 = vpack.c.b16 %v554, %v552
        %v629 = vpack.c.b16 %v555, %v553
        %v630 = vpack.c.b16 %v558, %v556
        %v631 = vpack.c.b16 %v559, %v557
        %v632 = vpack.c.b16 %v562, %v560
        %v633 = vpack.c.b16 %v563, %v561
        %v634 = vpack.c.b16 %v566, %v564
        %v635 = vpack.c.b16 %v567, %v565
        %v636 = vpack.c.b16 %v570, %v568
        %v637 = vpack.c.b16 %v571, %v569
        %v638 = vpack.c.b16 %v574, %v572
        %v639 = vpack.c.b16 %v575, %v573
        %704 = vmatprep.subr.bf16.mxu0 %v591
        %705 = vmatpush1.bf16.msra.mxu0 %v590
        %706 = vmatprep.subr.bf16.mxu0 %v589
        %707 = vmatpush1.bf16.msra.mxu0 %v588
        %708 = vmatprep.subr.bf16.mxu0 %v587
        %709 = vmatpush1.bf16.msra.mxu0 %v586
        %710 = vmatprep.subr.bf16.mxu0 %v585
        %711 = vmatpush1.bf16.msra.mxu0 %v584
        %712 = vmatprep.subr.bf16.mxu0 %v583
        %713 = vmatpush1.bf16.msra.mxu0 %v582
        %714 = vmatprep.subr.bf16.mxu0 %v581
        %715 = vmatpush1.bf16.msra.mxu0 %v580
        %716 = vmatprep.subr.bf16.mxu0 %v579
        %717 = vmatpush1.bf16.msra.mxu0 %v578
        %718 = vmatprep.subr.bf16.mxu0 %v577
        %719 = vmatpush1.bf16.msra.mxu0 %v576
        %720 = vmatprep.subr.bf16.mxu0 %v607
        %721 = vmatpush2.bf16.msra.mxu0 %v606
        %722 = vmatprep.subr.bf16.mxu0 %v605
        %723 = vmatpush2.bf16.msra.mxu0 %v604
        %724 = vmatprep.subr.bf16.mxu0 %v603
        %725 = vmatpush2.bf16.msra.mxu0 %v602
        %726 = vmatprep.subr.bf16.mxu0 %v601
        %727 = vmatpush2.bf16.msra.mxu0 %v600
        %728 = vmatprep.subr.bf16.mxu0 %v599
        %729 = vmatpush2.bf16.msra.mxu0 %v598
        %730 = vmatprep.subr.bf16.mxu0 %v597
        %731 = vmatpush2.bf16.msra.mxu0 %v596
        %732 = vmatprep.subr.bf16.mxu0 %v595
        %733 = vmatpush2.bf16.msra.mxu0 %v594
        %734 = vmatprep.subr.bf16.mxu0 %v593
        %735 = vmatpush2.bf16.msra.mxu0 %v592
        %736 = vmatprep.mubr.bf16.mxu0 %v369
        %737 = vmatmul.mubr.bf16.gmra.mxu0 %v368
        %v738 = vpop.f32.mrf.mxu0
        %v739 = vadd.f32 0.0, %v738
        %v740 = vpop.f32.mrf.mxu0
        %v741 = vadd.f32 0.0, %v740
        %v742 = vpop.f32.mrf.mxu0
        %v743 = vadd.f32 0.0, %v742
        %v744 = vpop.f32.mrf.mxu0
        %v745 = vadd.f32 0.0, %v744
        %746 = vmatprep.mubr.bf16.mxu0 %v373
        %747 = vmatmul.mubr.bf16.gmra.mxu0 %v372
        %v748 = vpop.f32.mrf.mxu0
        %v749 = vadd.f32 0.0, %v748
        %v750 = vpop.f32.mrf.mxu0
        %v751 = vadd.f32 0.0, %v750
        %v752 = vpop.f32.mrf.mxu0
        %v753 = vadd.f32 0.0, %v752
        %v754 = vpop.f32.mrf.mxu0
        %v755 = vadd.f32 0.0, %v754
        %756 = vdwg.mxu0
        %757 = vmatprep.subr.bf16.mxu0 %v623
        %758 = vmatpush1.bf16.msra.mxu0 %v622
        %759 = vmatprep.subr.bf16.mxu0 %v621
        %760 = vmatpush1.bf16.msra.mxu0 %v620
        %761 = vmatprep.subr.bf16.mxu0 %v619
        %762 = vmatpush1.bf16.msra.mxu0 %v618
        %763 = vmatprep.subr.bf16.mxu0 %v617
        %764 = vmatpush1.bf16.msra.mxu0 %v616
        %765 = vmatprep.subr.bf16.mxu0 %v615
        %766 = vmatpush1.bf16.msra.mxu0 %v614
        %767 = vmatprep.subr.bf16.mxu0 %v613
        %768 = vmatpush1.bf16.msra.mxu0 %v612
        %769 = vmatprep.subr.bf16.mxu0 %v611
        %770 = vmatpush1.bf16.msra.mxu0 %v610
        %771 = vmatprep.subr.bf16.mxu0 %v609
        %772 = vmatpush1.bf16.msra.mxu0 %v608
        %773 = vmatprep.subr.bf16.mxu0 %v639
        %774 = vmatpush2.bf16.msra.mxu0 %v638
        %775 = vmatprep.subr.bf16.mxu0 %v637
        %776 = vmatpush2.bf16.msra.mxu0 %v636
        %777 = vmatprep.subr.bf16.mxu0 %v635
        %778 = vmatpush2.bf16.msra.mxu0 %v634
        %779 = vmatprep.subr.bf16.mxu0 %v633
        %780 = vmatpush2.bf16.msra.mxu0 %v632
        %781 = vmatprep.subr.bf16.mxu0 %v631
        %782 = vmatpush2.bf16.msra.mxu0 %v630
        %783 = vmatprep.subr.bf16.mxu0 %v629
        %784 = vmatpush2.bf16.msra.mxu0 %v628
        %785 = vmatprep.subr.bf16.mxu0 %v627
        %786 = vmatpush2.bf16.msra.mxu0 %v626
        %787 = vmatprep.subr.bf16.mxu0 %v625
        %788 = vmatpush2.bf16.msra.mxu0 %v624
        %789 = vmatprep.mubr.bf16.mxu0 %v371
        %790 = vmatmul.mubr.bf16.gmra.mxu0 %v370
        %v791 = vpop.f32.mrf.mxu0
        %v792 = vadd.f32 %v739, %v791
        %v793 = vpop.f32.mrf.mxu0
        %v794 = vadd.f32 %v741, %v793
        %v795 = vpop.f32.mrf.mxu0
        %v796 = vadd.f32 %v743, %v795
        %v797 = vpop.f32.mrf.mxu0
        %v798 = vadd.f32 %v745, %v797
        %799 = vmatprep.mubr.bf16.mxu0 %v375
        %800 = vmatmul.mubr.bf16.gmra.mxu0 %v374
        %v801 = vpop.f32.mrf.mxu0
        %v802 = vadd.f32 %v749, %v801
        %v803 = vpop.f32.mrf.mxu0
        %v804 = vadd.f32 %v751, %v803
        %v805 = vpop.f32.mrf.mxu0
        %v806 = vadd.f32 %v753, %v805
        %v807 = vpop.f32.mrf.mxu0
        %v808 = vadd.f32 %v755, %v807
        %809 = vdwg.mxu0
        %v810 = vadd.f32 %v264, %v792
        %v811 = vadd.f32 %v265, %v794
        %v812 = vadd.f32 %v266, %v796
        %v813 = vadd.f32 %v267, %v798
        %v814 = vadd.f32 %v268, %v802
        %v815 = vadd.f32 %v269, %v804
        %v816 = vadd.f32 %v270, %v806
        %v817 = vadd.f32 %v271, %v808
        %818 = vst [vmem:[#allocation2] sm:$0xff] %v810
        %819 = vst [vmem:[#allocation2 + $0x8] sm:$0xff] %v811
        %820 = vst [vmem:[#allocation2 + $0x10] sm:$0xff] %v812
        %821 = vst [vmem:[#allocation2 + $0x18] sm:$0xff] %v813
        %822 = vst [vmem:[#allocation2 + $0x20] sm:$0xff] %v814
        %823 = vst [vmem:[#allocation2 + $0x28] sm:$0xff] %v815
        %824 = vst [vmem:[#allocation2 + $0x30] sm:$0xff] %v816
        %825 = vst [vmem:[#allocation2 + $0x38] sm:$0xff] %v817
        %p826 = scmp.eq.s32.totalorder %s19, 3
        // Predicated region
        $region60: #{_lambda_.6} parent=50 // pred_check
          %p827 = pneg %p826
        $region61: #{_lambda_.6} parent=50 // pred_check_branch
          %829 = sbr.rel (%p827) target = $region63
        $region62: #{_lambda_.6} parent=50 // pred_region
          %v830 = vld [vmem:[#allocation2] sm:$0xff]
          %v831 = vld [vmem:[#allocation2 + $0x8] sm:$0xff]
          %v832 = vld [vmem:[#allocation2 + $0x10] sm:$0xff]
          %v833 = vld [vmem:[#allocation2 + $0x18] sm:$0xff]
          %v834 = vld [vmem:[#allocation2 + $0x20] sm:$0xff]
          %v835 = vld [vmem:[#allocation2 + $0x28] sm:$0xff]
          %v836 = vld [vmem:[#allocation2 + $0x30] sm:$0xff]
          %v837 = vld [vmem:[#allocation2 + $0x38] sm:$0xff]
          %v838 = vld [vmem:[%s2] sm:$0x3]
          %v840 = vlaneseq
          %v841 = vshrl.u32 %v840, 7
          %v842 = vsub.s32 0, %v841
          %v843 = vrot.slane %v838, %v842
          %v844 = vlaneseq
          %v845 = vshrl.u32 %v844, 7
          %v846 = vsub.s32 1, %v845
          %v847 = vrot.slane %v838, %v846
          %v850 = vadd.f32 %v830, %v843
          %v851 = vadd.f32 %v831, %v847
          %v852 = vadd.f32 %v832, %v843
          %v853 = vadd.f32 %v833, %v847
          %v854 = vadd.f32 %v834, %v843
          %v855 = vadd.f32 %v835, %v847
          %v856 = vadd.f32 %v836, %v843
          %v857 = vadd.f32 %v837, %v847
          %vm858 = vcmp.gt.f32.partialorder %v850, 0.0
          %vm859 = vcmp.gt.f32.partialorder %v851, 0.0
          %vm860 = vcmp.gt.f32.partialorder %v852, 0.0
          %vm861 = vcmp.gt.f32.partialorder %v853, 0.0
          %vm862 = vcmp.gt.f32.partialorder %v854, 0.0
          %vm863 = vcmp.gt.f32.partialorder %v855, 0.0
          %vm864 = vcmp.gt.f32.partialorder %v856, 0.0
          %vm865 = vcmp.gt.f32.partialorder %v857, 0.0
          %v866 = vmul.f32 %v850, 0.2
          %v867 = vmul.f32 %v851, 0.2
          %v868 = vmul.f32 %v852, 0.2
          %v869 = vmul.f32 %v853, 0.2
          %v870 = vmul.f32 %v854, 0.2
          %v871 = vmul.f32 %v855, 0.2
          %v872 = vmul.f32 %v856, 0.2
          %v873 = vmul.f32 %v857, 0.2
          %v874 = vsel %vm858, %v850, %v866
          %v875 = vsel %vm859, %v851, %v867
          %v876 = vsel %vm860, %v852, %v868
          %v877 = vsel %vm861, %v853, %v869
          %v878 = vsel %vm862, %v854, %v870
          %v879 = vsel %vm863, %v855, %v871
          %v880 = vsel %vm864, %v856, %v872
          %v881 = vsel %vm865, %v857, %v873
          %v882 = vpack.c.bf16 %v876, %v874
          %v883 = vpack.c.bf16 %v877, %v875
          %v884 = vpack.c.bf16 %v880, %v878
          %v885 = vpack.c.bf16 %v881, %v879
          %v890 = vunpack.c.l.b16 %v882
          %v891 = vunpack.c.l.b16 %v883
          %v892 = vunpack.c.h.b16 %v882
          %v893 = vunpack.c.h.b16 %v883
          %v894 = vunpack.c.l.b16 %v884
          %v895 = vunpack.c.l.b16 %v885
          %v896 = vunpack.c.h.b16 %v884
          %v897 = vunpack.c.h.b16 %v885
          %v898 = vpack.c.b16 %v891, %v890
          %v899 = vpack.c.b16 %v893, %v892
          %v900 = vpack.c.b16 %v895, %v894
          %v901 = vpack.c.b16 %v897, %v896
          %906 = vst [vmem:[%s250] sm:$0xff] %v898
          %907 = vst [vmem:[%s250 + $0x8] sm:$0xff] %v899
          %908 = vst [vmem:[%s250 + $0x10] sm:$0xff] %v900
          %909 = vst [vmem:[%s250 + $0x18] sm:$0xff] %v901
        $region63: #{_lambda_.6} parent=50 // pred_fallthru
          _
        %s910 = smul.u32 4, %s18
        %p911 = scmp.lt.s32.totalorder %s910, 3
        %s912 = scalar_select %p911, %s910, 3
        %s913 = smul.addr %s912, 2
        %s914 = smul.addr %s913, 4
        %s915 = scalar_lea.vmem %s3, %s914
        // Predicated region
        $region64: #{_lambda_.6} parent=50 // pred_check
          %p916 = pneg %p119
        $region65: #{_lambda_.6} parent=50 // pred_check_branch
          %918 = sbr.rel (%p916) target = $region67
        $region66: #{_lambda_.6} parent=50 // pred_region
          %s919 = smul.u32 4, %s18
        $region67: #{_lambda_.6} parent=50 // pred_fallthru
          _
        // Predicated region
        $region68: #{_lambda_.6} parent=50 // pred_check
          %p920 = pneg %p119
        $region69: #{_lambda_.6} parent=50 // pred_check_branch
          %922 = sbr.rel (%p920) target = $region71
        $region70: #{_lambda_.6} parent=50 // pred_region
          %s923 = smul.u32 4, %s18
          %p924 = scmp.lt.s32.totalorder %s923, 3
          %s925 = scalar_select %p924, %s923, 3
          %s926 = smul.addr %s925, 2
          %s927 = smul.addr %s926, 4
          %s928 = scalar_lea.vmem %s3, %s927
        $region71: #{_lambda_.6} parent=50 // pred_fallthru
          _
      $region51: #{_lambda_.6} parent=5 // pred_fallthru
        _
      %p929 = scmp.le.s32.totalorder 2, %s9
      // Predicated region
      $region72: #{_lambda_.6} parent=5 // pred_check
        %p930 = pneg %p929
      $region73: #{_lambda_.6} parent=5 // pred_check_branch
        %932 = sbr.rel (%p930) target = $region75
      $region74: #{_lambda_.6} parent=5 // pred_region
        %s933 = ssub.s32 %s9, 2
      $region75: #{_lambda_.6} parent=5 // pred_fallthru
        _
    $region6: #{_lambda_.6} parent=1 // loop_footer
      %s13 = sadd.s32 1, %s9
    $region7: #{_lambda_.6} parent=1 // loop_footer_branch
      %8 = sbr.rel target = $region3
    $region8: #{_lambda_.6} parent=1 // loop_exit
      _

// kernel: _lambda_.7
$region0: #{_lambda_.7}
  #allocation0 [shape = 'u32[]', space=smem, size = 0x4, offset = 0x4, fixed_abs, tag = 'smem constant byte address 0x4 - core index']
  #allocation1 [shape = 'u32[144,128]{1,0:T(1,128)}', space=vmem, size = 0x12000, scoped, tag = 'internal scratch']
  #allocation2 [shape = 'f32[8,128]{1,0:T(8,128)}', space=vmem, size = 0x1000, scoped, tag = 'scratch operand']
  %s0 = inlined_call_operand.vmem [shape: bf16[8,4096], index: 0, kind: input, shape index: {}]
  %s1 = inlined_call_operand.vmem [shape: bf16[4096,128], index: 1, kind: input, shape index: {}]
  %s2 = inlined_call_operand.vmem [shape: f32[1,128], index: 2, kind: input, shape index: {}]
  %s3 = inlined_call_operand.vmem [shape: bf16[128,128], index: 3, kind: input, shape index: {}]
  %s4 = inlined_call_operand.vmem [shape: f32[1,128], index: 4, kind: input, shape index: {}]
  %s5 = inlined_call_operand.vmem [shape: f32[8,128], index: 5, kind: output, shape index: {}]
  %s6 = sld [smem:[#allocation0]]
  $region61: #{_lambda_.7} parent=0
    _
  %s8 = ssub.s32 1, %s6
  %s9 = scalar_select 0, %s8, %s6
  loop: start=0, step=1, limit=10
  $region2: #{_lambda_.7} parent=0 // loop_pre_header
    _
  $region3: #{_lambda_.7} parent=0 // loop_header
    %s11 = sphi 0, %s15
    %p12 = scmp.ge.s32.totalorder %s11, 10
    %s21 = sphi 0, %s23
    %s24 = sphi 0, %s21
    %s25 = sphi 0, %s24
    %s41 = sphi 0, %s25
    %s47 = sphi 0, %s49
    %s50 = sphi 0, %s47
    %s51 = sphi 0, %s50
    %s67 = sphi 0, %s51
    %s71 = sphi 0, %s71
    %s73 = sphi 0, %s71
    %s74 = sphi 0, %s73
    %s88 = sphi 0, %s74
    %s92 = sphi 0, %s92
    %s94 = sphi 0, %s92
    %s95 = sphi 0, %s94
    %s109 = sphi 0, %s95
    %s113 = sphi 0, %s113
    %s115 = sphi 0, %s113
    %s116 = sphi 0, %s115
    %s130 = sphi 0, %s116
    %s134 = sphi 0, %s134
    %s136 = sphi 0, %s134
    %s137 = sphi 0, %s136
    %s151 = sphi 0, %s137
  $region4: #{_lambda_.7} parent=0 // loop_header_branch
    %14 = sbr.rel (%p12) target = $region8
  $region5: #{_lambda_.7} parent=0 // loop_body
    %s16 = ssub.s32 %s11, 1
    %s17 = ssub.s32 %s11, 2
    %s18 = sadd.s32 %s11, 1
    %s19 = ssub.s32 %s11, %s18
    %p20 = scmp.eq.s32.totalorder %s19, 0
    %s22 = sadd.s32 %s21, 1
    %s23 = scalar_select %p20, %s21, %s22
    %p26 = pneg %p20
    %p27 = scmp.eq.s32.totalorder %s11, 7
    %p28 = por %p26, %p27
    %p29 = scmp.ne.s32.totalorder %s21, %s24
    %p30 = scmp.eq.s32.totalorder %s11, 0
    %p31 = por %p29, %p30
    %p32 = scmp.ne.s32.totalorder %s21, %s24
    %p33 = scmp.eq.s32.totalorder %s16, 7
    %p34 = por %p32, %p33
    %p35 = scmp.ne.s32.totalorder %s24, %s25
    %p36 = scmp.eq.s32.totalorder %s16, 0
    %p37 = por %p35, %p36
    %p38 = scmp.ne.s32.totalorder %s24, %s25
    %p39 = scmp.eq.s32.totalorder %s17, 7
    %p40 = por %p38, %p39
    %p42 = scmp.ne.s32.totalorder %s25, %s41
    %p43 = scmp.eq.s32.totalorder %s17, 0
    %p44 = por %p42, %p43
    %s45 = ssub.s32 %s11, %s18
    %p46 = scmp.eq.s32.totalorder %s45, 0
    %s48 = sadd.s32 %s47, 1
    %s49 = scalar_select %p46, %s47, %s48
    %p52 = pneg %p46
    %p53 = scmp.eq.s32.totalorder %s11, 7
    %p54 = por %p52, %p53
    %p55 = scmp.ne.s32.totalorder %s47, %s50
    %p56 = scmp.eq.s32.totalorder %s11, 0
    %p57 = por %p55, %p56
    %p58 = scmp.ne.s32.totalorder %s47, %s50
    %p59 = scmp.eq.s32.totalorder %s16, 7
    %p60 = por %p58, %p59
    %p61 = scmp.ne.s32.totalorder %s50, %s51
    %p62 = scmp.eq.s32.totalorder %s16, 0
    %p63 = por %p61, %p62
    %p64 = scmp.ne.s32.totalorder %s50, %s51
    %p65 = scmp.eq.s32.totalorder %s17, 7
    %p66 = por %p64, %p65
    %p68 = scmp.ne.s32.totalorder %s51, %s67
    %p69 = scmp.eq.s32.totalorder %s17, 0
    %p70 = por %p68, %p69
    %s72 = sadd.s32 %s71, 1
    %p75 = scmp.eq.s32.totalorder %s11, 7
    %p76 = scmp.ne.s32.totalorder %s71, %s73
    %p77 = scmp.eq.s32.totalorder %s11, 0
    %p78 = por %p76, %p77
    %p79 = scmp.ne.s32.totalorder %s71, %s73
    %p80 = scmp.eq.s32.totalorder %s16, 7
    %p81 = por %p79, %p80
    %p82 = scmp.ne.s32.totalorder %s73, %s74
    %p83 = scmp.eq.s32.totalorder %s16, 0
    %p84 = por %p82, %p83
    %p85 = scmp.ne.s32.totalorder %s73, %s74
    %p86 = scmp.eq.s32.totalorder %s17, 7
    %p87 = por %p85, %p86
    %p89 = scmp.ne.s32.totalorder %s74, %s88
    %p90 = scmp.eq.s32.totalorder %s17, 0
    %p91 = por %p89, %p90
    %s93 = sadd.s32 %s92, 1
    %p96 = scmp.eq.s32.totalorder %s11, 7
    %p97 = scmp.ne.s32.totalorder %s92, %s94
    %p98 = scmp.eq.s32.totalorder %s11, 0
    %p99 = por %p97, %p98
    %p100 = scmp.ne.s32.totalorder %s92, %s94
    %p101 = scmp.eq.s32.totalorder %s16, 7
    %p102 = por %p100, %p101
    %p103 = scmp.ne.s32.totalorder %s94, %s95
    %p104 = scmp.eq.s32.totalorder %s16, 0
    %p105 = por %p103, %p104
    %p106 = scmp.ne.s32.totalorder %s94, %s95
    %p107 = scmp.eq.s32.totalorder %s17, 7
    %p108 = por %p106, %p107
    %p110 = scmp.ne.s32.totalorder %s95, %s109
    %p111 = scmp.eq.s32.totalorder %s17, 0
    %p112 = por %p110, %p111
    %s114 = sadd.s32 %s113, 1
    %p117 = scmp.eq.s32.totalorder %s11, 7
    %p118 = scmp.ne.s32.totalorder %s113, %s115
    %p119 = scmp.eq.s32.totalorder %s11, 0
    %p120 = por %p118, %p119
    %p121 = scmp.ne.s32.totalorder %s113, %s115
    %p122 = scmp.eq.s32.totalorder %s16, 7
    %p123 = por %p121, %p122
    %p124 = scmp.ne.s32.totalorder %s115, %s116
    %p125 = scmp.eq.s32.totalorder %s16, 0
    %p126 = por %p124, %p125
    %p127 = scmp.ne.s32.totalorder %s115, %s116
    %p128 = scmp.eq.s32.totalorder %s17, 7
    %p129 = por %p127, %p128
    %p131 = scmp.ne.s32.totalorder %s116, %s130
    %p132 = scmp.eq.s32.totalorder %s17, 0
    %p133 = por %p131, %p132
    %s135 = sadd.s32 %s134, 1
    %p138 = scmp.eq.s32.totalorder %s11, 7
    %p139 = scmp.ne.s32.totalorder %s134, %s136
    %p140 = scmp.eq.s32.totalorder %s11, 0
    %p141 = por %p139, %p140
    %p142 = scmp.ne.s32.totalorder %s134, %s136
    %p143 = scmp.eq.s32.totalorder %s16, 7
    %p144 = por %p142, %p143
    %p145 = scmp.ne.s32.totalorder %s136, %s137
    %p146 = scmp.eq.s32.totalorder %s16, 0
    %p147 = por %p145, %p146
    %p148 = scmp.ne.s32.totalorder %s136, %s137
    %p149 = scmp.eq.s32.totalorder %s17, 7
    %p150 = por %p148, %p149
    %p152 = scmp.ne.s32.totalorder %s137, %s151
    %p153 = scmp.eq.s32.totalorder %s17, 0
    %p154 = por %p152, %p153
    %p155 = scmp.le.s32.totalorder 1, %s11
    %p156 = scmp.lt.s32.totalorder %s11, 9
    %p157 = pnand %p155, %p156
    %p158 = pneg %p157
    // Predicated region
    $region9: #{_lambda_.7} parent=5 // pred_check
      _
    $region10: #{_lambda_.7} parent=5 // pred_check_branch
      %160 = sbr.rel (%p157) target = $region12
    $region11: #{_lambda_.7} parent=5 // pred_region
      %s161 = ssub.s32 %s11, 1
      // Predicated region
      $region13: #{_lambda_.7} parent=11 // pred_check
        %p162 = pneg %p84
      $region14: #{_lambda_.7} parent=11 // pred_check_branch
        %164 = sbr.rel (%p162) target = $region16
      $region15: #{_lambda_.7} parent=11 // pred_region
        _
      $region16: #{_lambda_.7} parent=11 // pred_fallthru
        _
      // Predicated region
      $region17: #{_lambda_.7} parent=11 // pred_check
        %p165 = pneg %p105
      $region18: #{_lambda_.7} parent=11 // pred_check_branch
        %167 = sbr.rel (%p165) target = $region20
      $region19: #{_lambda_.7} parent=11 // pred_region
        _
      $region20: #{_lambda_.7} parent=11 // pred_fallthru
        _
      // Predicated region
      $region21: #{_lambda_.7} parent=11 // pred_check
        %p168 = pneg %p126
      $region22: #{_lambda_.7} parent=11 // pred_check_branch
        %170 = sbr.rel (%p168) target = $region24
      $region23: #{_lambda_.7} parent=11 // pred_region
        _
      $region24: #{_lambda_.7} parent=11 // pred_fallthru
        _
    $region12: #{_lambda_.7} parent=5 // pred_fallthru
      _
    %p171 = scmp.lt.s32.totalorder %s11, 8
    // Predicated region
    $region25: #{_lambda_.7} parent=5 // pred_check
      %p172 = pneg %p171
    $region26: #{_lambda_.7} parent=5 // pred_check_branch
      %174 = sbr.rel (%p172) target = $region28
    $region27: #{_lambda_.7} parent=5 // pred_region
      // Predicated region
      $region29: #{_lambda_.7} parent=27 // pred_check
        %p175 = pneg %p31
      $region30: #{_lambda_.7} parent=27 // pred_check_branch
        %177 = sbr.rel (%p175) target = $region32
      $region31: #{_lambda_.7} parent=27 // pred_region
        %s178 = smul.u32 4, %s11
        %p179 = scmp.lt.s32.totalorder %s178, 31
        %s180 = scalar_select %p179, %s178, 31
        %s181 = smul.addr %s180, 4
        %s182 = scalar_lea.vmem %s0, %s181
        %s183 = smul.u32 4, %s11
      $region32: #{_lambda_.7} parent=27 // pred_fallthru
        _
      // Predicated region
      $region33: #{_lambda_.7} parent=27 // pred_check
        %p184 = pneg %p57
      $region34: #{_lambda_.7} parent=27 // pred_check_branch
        %186 = sbr.rel (%p184) target = $region36
      $region35: #{_lambda_.7} parent=27 // pred_region
        %s187 = smul.u32 64, %s11
        %p188 = scmp.lt.s32.totalorder %s187, 511
        %s189 = scalar_select %p188, %s187, 511
        %s190 = smul.addr %s189, 4
        %s191 = scalar_lea.vmem %s1, %s190
        %s192 = smul.u32 64, %s11
      $region36: #{_lambda_.7} parent=27 // pred_fallthru
        _
    $region28: #{_lambda_.7} parent=5 // pred_fallthru
      _
    %p193 = scmp.le.s32.totalorder 1, %s11
    %p194 = scmp.lt.s32.totalorder %s11, 9
    %p195 = pnand %p193, %p194
    %p196 = pneg %p195
    // Predicated region
    $region37: #{_lambda_.7} parent=5 // pred_check
      _
    $region38: #{_lambda_.7} parent=5 // pred_check_branch
      %198 = sbr.rel (%p195) target = $region40
    $region39: #{_lambda_.7} parent=5 // pred_region
      %s199 = ssub.s32 %s11, 1
      %s200 = smul.u32 4, %s16
      %p201 = scmp.lt.s32.totalorder %s200, 31
      %s202 = scalar_select %p201, %s200, 31
      %s203 = smul.addr %s202, 4
      %s204 = scalar_lea.vmem %s0, %s203
      %p205 = pneg %p37
      %p206 = pneg %p34
      %s207 = smul.u32 64, %s16
      %p208 = scmp.lt.s32.totalorder %s207, 511
      %s209 = scalar_select %p208, %s207, 511
      %s210 = smul.addr %s209, 4
      %s211 = scalar_lea.vmem %s1, %s210
      %p212 = pneg %p63
      %p213 = pneg %p60
      %p214 = pneg %p84
      %p215 = pneg %p81
      %p216 = pneg %p105
      %p217 = pneg %p102
      %p218 = pneg %p126
      %p219 = pneg %p123
      %p220 = pneg %p147
      %p221 = pneg %p144
      %s222 = smul.u32 4, %s16
      %p223 = scmp.lt.s32.totalorder %s222, 31
      %s224 = scalar_select %p223, %s222, 31
      %s225 = smul.addr %s224, 4
      %s226 = scalar_lea.vmem %s0, %s225
      %s227 = smul.u32 4, %s16
      %s228 = smul.u32 64, %s16
      %p229 = scmp.lt.s32.totalorder %s228, 511
      %s230 = scalar_select %p229, %s228, 511
      %s231 = smul.addr %s230, 4
      %s232 = scalar_lea.vmem %s1, %s231
      %s233 = smul.u32 64, %s16
      %p235 = scmp.eq.s32.totalorder %s16, 0
      // Predicated region
      $region41: #{_lambda_.7} parent=39 // pred_check
        %p236 = pneg %p235
      $region42: #{_lambda_.7} parent=39 // pred_check_branch
        %238 = sbr.rel (%p236) target = $region44
      $region43: #{_lambda_.7} parent=39 // pred_region
        %239 = vst [vmem:[#allocation2] sm:$0xff] 0.0
      $region44: #{_lambda_.7} parent=39 // pred_fallthru
        _
      %v240 = vld [vmem:[#allocation2] sm:$0xff]
      %v241 = vld [vmem:[%s226] sm:$0xff]
      %v242 = vld [vmem:[%s226 + $0x8] sm:$0xff]
      %v243 = vld [vmem:[%s232] sm:$0xf]
      %v244 = vld [vmem:[%s232 + $0x4] sm:$0xf]
      %v245 = vld [vmem:[%s232 + $0x8] sm:$0xf]
      %v246 = vld [vmem:[%s232 + $0xc] sm:$0xf]
      %v247 = vld [vmem:[%s232 + $0x10] sm:$0xf]
      %v248 = vld [vmem:[%s232 + $0x14] sm:$0xf]
      %v249 = vld [vmem:[%s232 + $0x18] sm:$0xf]
      %v250 = vld [vmem:[%s232 + $0x1c] sm:$0xf]
      %v251 = vld [vmem:[%s232 + $0x20] sm:$0xf]
      %v252 = vld [vmem:[%s232 + $0x24] sm:$0xf]
      %v253 = vld [vmem:[%s232 + $0x28] sm:$0xf]
      %v254 = vld [vmem:[%s232 + $0x2c] sm:$0xf]
      %v255 = vld [vmem:[%s232 + $0x30] sm:$0xf]
      %v256 = vld [vmem:[%s232 + $0x34] sm:$0xf]
      %v257 = vld [vmem:[%s232 + $0x38] sm:$0xf]
      %v258 = vld [vmem:[%s232 + $0x3c] sm:$0xf]
      %v259 = vld [vmem:[%s232 + $0x40] sm:$0xf]
      %v260 = vld [vmem:[%s232 + $0x44] sm:$0xf]
      %v261 = vld [vmem:[%s232 + $0x48] sm:$0xf]
      %v262 = vld [vmem:[%s232 + $0x4c] sm:$0xf]
      %v263 = vld [vmem:[%s232 + $0x50] sm:$0xf]
      %v264 = vld [vmem:[%s232 + $0x54] sm:$0xf]
      %v265 = vld [vmem:[%s232 + $0x58] sm:$0xf]
      %v266 = vld [vmem:[%s232 + $0x5c] sm:$0xf]
      %v267 = vld [vmem:[%s232 + $0x60] sm:$0xf]
      %v268 = vld [vmem:[%s232 + $0x64] sm:$0xf]
      %v269 = vld [vmem:[%s232 + $0x68] sm:$0xf]
      %v270 = vld [vmem:[%s232 + $0x6c] sm:$0xf]
      %v271 = vld [vmem:[%s232 + $0x70] sm:$0xf]
      %v272 = vld [vmem:[%s232 + $0x74] sm:$0xf]
      %v273 = vld [vmem:[%s232 + $0x78] sm:$0xf]
      %v274 = vld [vmem:[%s232 + $0x7c] sm:$0xf]
      %v275 = vld [vmem:[%s232 + $0x80] sm:$0xf]
      %v276 = vld [vmem:[%s232 + $0x84] sm:$0xf]
      %v277 = vld [vmem:[%s232 + $0x88] sm:$0xf]
      %v278 = vld [vmem:[%s232 + $0x8c] sm:$0xf]
      %v279 = vld [vmem:[%s232 + $0x90] sm:$0xf]
      %v280 = vld [vmem:[%s232 + $0x94] sm:$0xf]
      %v281 = vld [vmem:[%s232 + $0x98] sm:$0xf]
      %v282 = vld [vmem:[%s232 + $0x9c] sm:$0xf]
      %v283 = vld [vmem:[%s232 + $0xa0] sm:$0xf]
      %v284 = vld [vmem:[%s232 + $0xa4] sm:$0xf]
      %v285 = vld [vmem:[%s232 + $0xa8] sm:$0xf]
      %v286 = vld [vmem:[%s232 + $0xac] sm:$0xf]
      %v287 = vld [vmem:[%s232 + $0xb0] sm:$0xf]
      %v288 = vld [vmem:[%s232 + $0xb4] sm:$0xf]
      %v289 = vld [vmem:[%s232 + $0xb8] sm:$0xf]
      %v290 = vld [vmem:[%s232 + $0xbc] sm:$0xf]
      %v291 = vld [vmem:[%s232 + $0xc0] sm:$0xf]
      %v292 = vld [vmem:[%s232 + $0xc4] sm:$0xf]
      %v293 = vld [vmem:[%s232 + $0xc8] sm:$0xf]
      %v294 = vld [vmem:[%s232 + $0xcc] sm:$0xf]
      %v295 = vld [vmem:[%s232 + $0xd0] sm:$0xf]
      %v296 = vld [vmem:[%s232 + $0xd4] sm:$0xf]
      %v297 = vld [vmem:[%s232 + $0xd8] sm:$0xf]
      %v298 = vld [vmem:[%s232 + $0xdc] sm:$0xf]
      %v299 = vld [vmem:[%s232 + $0xe0] sm:$0xf]
      %v300 = vld [vmem:[%s232 + $0xe4] sm:$0xf]
      %v301 = vld [vmem:[%s232 + $0xe8] sm:$0xf]
      %v302 = vld [vmem:[%s232 + $0xec] sm:$0xf]
      %v303 = vld [vmem:[%s232 + $0xf0] sm:$0xf]
      %v304 = vld [vmem:[%s232 + $0xf4] sm:$0xf]
      %v305 = vld [vmem:[%s232 + $0xf8] sm:$0xf]
      %v306 = vld [vmem:[%s232 + $0xfc] sm:$0xf]
      %v309 = vunpack.c.l.b16 %v241
      %v310 = vunpack.c.h.b16 %v241
      %v311 = vunpack.c.l.b16 %v242
      %v312 = vunpack.c.h.b16 %v242
      %v313 = vpack.c.b16 %v309, %v309
      %v314 = vpack.c.b16 %v310, %v310
      %v315 = vpack.c.b16 %v311, %v311
      %v316 = vpack.c.b16 %v312, %v312
      %v385 = vunpack.c.l.b16 %v243
      %v386 = vunpack.c.l.b16 %v244
      %v387 = vunpack.c.l.b16 %v245
      %v388 = vunpack.c.l.b16 %v246
      %v389 = vunpack.c.l.b16 %v247
      %v390 = vunpack.c.l.b16 %v248
      %v391 = vunpack.c.l.b16 %v249
      %v392 = vunpack.c.l.b16 %v250
      %v393 = vunpack.c.l.b16 %v251
      %v394 = vunpack.c.l.b16 %v252
      %v395 = vunpack.c.l.b16 %v253
      %v396 = vunpack.c.l.b16 %v254
      %v397 = vunpack.c.l.b16 %v255
      %v398 = vunpack.c.l.b16 %v256
      %v399 = vunpack.c.l.b16 %v257
      %v400 = vunpack.c.l.b16 %v258
      %v401 = vunpack.c.l.b16 %v259
      %v402 = vunpack.c.l.b16 %v260
      %v403 = vunpack.c.l.b16 %v261
      %v404 = vunpack.c.l.b16 %v262
      %v405 = vunpack.c.l.b16 %v263
      %v406 = vunpack.c.l.b16 %v264
      %v407 = vunpack.c.l.b16 %v265
      %v408 = vunpack.c.l.b16 %v266
      %v409 = vunpack.c.l.b16 %v267
      %v410 = vunpack.c.l.b16 %v268
      %v411 = vunpack.c.l.b16 %v269
      %v412 = vunpack.c.l.b16 %v270
      %v413 = vunpack.c.l.b16 %v271
      %v414 = vunpack.c.l.b16 %v272
      %v415 = vunpack.c.l.b16 %v273
      %v416 = vunpack.c.l.b16 %v274
      %v417 = vunpack.c.l.b16 %v275
      %v418 = vunpack.c.l.b16 %v276
      %v419 = vunpack.c.l.b16 %v277
      %v420 = vunpack.c.l.b16 %v278
      %v421 = vunpack.c.l.b16 %v279
      %v422 = vunpack.c.l.b16 %v280
      %v423 = vunpack.c.l.b16 %v281
      %v424 = vunpack.c.l.b16 %v282
      %v425 = vunpack.c.l.b16 %v283
      %v426 = vunpack.c.l.b16 %v284
      %v427 = vunpack.c.l.b16 %v285
      %v428 = vunpack.c.l.b16 %v286
      %v429 = vunpack.c.l.b16 %v287
      %v430 = vunpack.c.l.b16 %v288
      %v431 = vunpack.c.l.b16 %v289
      %v432 = vunpack.c.l.b16 %v290
      %v433 = vunpack.c.l.b16 %v291
      %v434 = vunpack.c.l.b16 %v292
      %v435 = vunpack.c.l.b16 %v293
      %v436 = vunpack.c.l.b16 %v294
      %v437 = vunpack.c.l.b16 %v295
      %v438 = vunpack.c.l.b16 %v296
      %v439 = vunpack.c.l.b16 %v297
      %v440 = vunpack.c.l.b16 %v298
      %v441 = vunpack.c.l.b16 %v299
      %v442 = vunpack.c.l.b16 %v300
      %v443 = vunpack.c.l.b16 %v301
      %v444 = vunpack.c.l.b16 %v302
      %v445 = vunpack.c.l.b16 %v303
      %v446 = vunpack.c.l.b16 %v304
      %v447 = vunpack.c.l.b16 %v305
      %v448 = vunpack.c.l.b16 %v306
      %v449 = vpack.c.b16 %v386, %v385
      %v450 = vpack.c.b16 %v388, %v387
      %v451 = vpack.c.b16 %v390, %v389
      %v452 = vpack.c.b16 %v392, %v391
      %v453 = vpack.c.b16 %v394, %v393
      %v454 = vpack.c.b16 %v396, %v395
      %v455 = vpack.c.b16 %v398, %v397
      %v456 = vpack.c.b16 %v400, %v399
      %v457 = vpack.c.b16 %v402, %v401
      %v458 = vpack.c.b16 %v404, %v403
      %v459 = vpack.c.b16 %v406, %v405
      %v460 = vpack.c.b16 %v408, %v407
      %v461 = vpack.c.b16 %v410, %v409
      %v462 = vpack.c.b16 %v412, %v411
      %v463 = vpack.c.b16 %v414, %v413
      %v464 = vpack.c.b16 %v416, %v415
      %v465 = vpack.c.b16 %v418, %v417
      %v466 = vpack.c.b16 %v420, %v419
      %v467 = vpack.c.b16 %v422, %v421
      %v468 = vpack.c.b16 %v424, %v423
      %v469 = vpack.c.b16 %v426, %v425
      %v470 = vpack.c.b16 %v428, %v427
      %v471 = vpack.c.b16 %v430, %v429
      %v472 = vpack.c.b16 %v432, %v431
      %v473 = vpack.c.b16 %v434, %v433
      %v474 = vpack.c.b16 %v436, %v435
      %v475 = vpack.c.b16 %v438, %v437
      %v476 = vpack.c.b16 %v440, %v439
      %v477 = vpack.c.b16 %v442, %v441
      %v478 = vpack.c.b16 %v444, %v443
      %v479 = vpack.c.b16 %v446, %v445
      %v480 = vpack.c.b16 %v448, %v447
      %513 = vmatprep.subr.bf16.mxu0 0
      %514 = vmatpush1.bf16.msra.mxu0 %v456
      %515 = vmatprep.subr.bf16.mxu0 0
      %516 = vmatpush1.bf16.msra.mxu0 %v455
      %517 = vmatprep.subr.bf16.mxu0 0
      %518 = vmatpush1.bf16.msra.mxu0 %v454
      %519 = vmatprep.subr.bf16.mxu0 0
      %520 = vmatpush1.bf16.msra.mxu0 %v453
      %521 = vmatprep.subr.bf16.mxu0 0
      %522 = vmatpush1.bf16.msra.mxu0 %v452
      %523 = vmatprep.subr.bf16.mxu0 0
      %524 = vmatpush1.bf16.msra.mxu0 %v451
      %525 = vmatprep.subr.bf16.mxu0 0
      %526 = vmatpush1.bf16.msra.mxu0 %v450
      %527 = vmatprep.subr.bf16.mxu0 0
      %528 = vmatpush1.bf16.msra.mxu0 %v449
      %529 = vmatprep.subr.bf16.mxu0 0
      %530 = vmatpush2.bf16.msra.mxu0 %v464
      %531 = vmatprep.subr.bf16.mxu0 0
      %532 = vmatpush2.bf16.msra.mxu0 %v463
      %533 = vmatprep.subr.bf16.mxu0 0
      %534 = vmatpush2.bf16.msra.mxu0 %v462
      %535 = vmatprep.subr.bf16.mxu0 0
      %536 = vmatpush2.bf16.msra.mxu0 %v461
      %537 = vmatprep.subr.bf16.mxu0 0
      %538 = vmatpush2.bf16.msra.mxu0 %v460
      %539 = vmatprep.subr.bf16.mxu0 0
      %540 = vmatpush2.bf16.msra.mxu0 %v459
      %541 = vmatprep.subr.bf16.mxu0 0
      %542 = vmatpush2.bf16.msra.mxu0 %v458
      %543 = vmatprep.subr.bf16.mxu0 0
      %544 = vmatpush2.bf16.msra.mxu0 %v457
      %545 = vmatprep.mubr.bf16.mxu0 %v314
      %546 = vmatmul.mubr.bf16.gmra.mxu0 %v313
      %v547 = vpop.f32.mrf.mxu0
      %v548 = vadd.f32 0.0, %v547
      %v549 = vpop.f32.mrf.mxu0
      %v550 = vpop.f32.mrf.mxu0
      %v551 = vpop.f32.mrf.mxu0
      %552 = vdwg.mxu0
      %553 = vmatprep.subr.bf16.mxu0 0
      %554 = vmatpush1.bf16.msra.mxu0 %v472
      %555 = vmatprep.subr.bf16.mxu0 0
      %556 = vmatpush1.bf16.msra.mxu0 %v471
      %557 = vmatprep.subr.bf16.mxu0 0
      %558 = vmatpush1.bf16.msra.mxu0 %v470
      %559 = vmatprep.subr.bf16.mxu0 0
      %560 = vmatpush1.bf16.msra.mxu0 %v469
      %561 = vmatprep.subr.bf16.mxu0 0
      %562 = vmatpush1.bf16.msra.mxu0 %v468
      %563 = vmatprep.subr.bf16.mxu0 0
      %564 = vmatpush1.bf16.msra.mxu0 %v467
      %565 = vmatprep.subr.bf16.mxu0 0
      %566 = vmatpush1.bf16.msra.mxu0 %v466
      %567 = vmatprep.subr.bf16.mxu0 0
      %568 = vmatpush1.bf16.msra.mxu0 %v465
      %569 = vmatprep.subr.bf16.mxu0 0
      %570 = vmatpush2.bf16.msra.mxu0 %v480
      %571 = vmatprep.subr.bf16.mxu0 0
      %572 = vmatpush2.bf16.msra.mxu0 %v479
      %573 = vmatprep.subr.bf16.mxu0 0
      %574 = vmatpush2.bf16.msra.mxu0 %v478
      %575 = vmatprep.subr.bf16.mxu0 0
      %576 = vmatpush2.bf16.msra.mxu0 %v477
      %577 = vmatprep.subr.bf16.mxu0 0
      %578 = vmatpush2.bf16.msra.mxu0 %v476
      %579 = vmatprep.subr.bf16.mxu0 0
      %580 = vmatpush2.bf16.msra.mxu0 %v475
      %581 = vmatprep.subr.bf16.mxu0 0
      %582 = vmatpush2.bf16.msra.mxu0 %v474
      %583 = vmatprep.subr.bf16.mxu0 0
      %584 = vmatpush2.bf16.msra.mxu0 %v473
      %585 = vmatprep.mubr.bf16.mxu0 %v316
      %586 = vmatmul.mubr.bf16.gmra.mxu0 %v315
      %v587 = vpop.f32.mrf.mxu0
      %v588 = vadd.f32 %v548, %v587
      %v589 = vpop.f32.mrf.mxu0
      %v590 = vpop.f32.mrf.mxu0
      %v591 = vpop.f32.mrf.mxu0
      %592 = vdwg.mxu0
      %v593 = vadd.f32 %v240, %v588
      %594 = vst [vmem:[#allocation2] sm:$0xff] %v593
      %p595 = scmp.eq.s32.totalorder %s16, 7
      // Predicated region
      $region45: #{_lambda_.7} parent=39 // pred_check
        %p596 = pneg %p595
      $region46: #{_lambda_.7} parent=39 // pred_check_branch
        %598 = sbr.rel (%p596) target = $region48
      $region47: #{_lambda_.7} parent=39 // pred_region
        %v599 = vld [vmem:[#allocation2] sm:$0xff]
        %v600 = vld [vmem:[%s2] sm:$0x1]
        %v602 = vlaneseq
        %v603 = vshrl.u32 %v602, 7
        %v604 = vsub.s32 0, %v603
        %v605 = vrot.slane %v600, %v604
        %v607 = vadd.f32 %v599, %v605
        %vm608 = vcmp.gt.f32.partialorder %v607, 0.0
        %v609 = vmul.f32 %v607, 0.2
        %v610 = vsel %vm608, %v607, %v609
        %v611 = vpack.c.bf16 %v610, %v610
        %v612 = vld [vmem:[%s3] sm:$0xf]
        %v613 = vld [vmem:[%s3 + $0x4] sm:$0xf]
        %v614 = vld [vmem:[%s3 + $0x8] sm:$0xf]
        %v615 = vld [vmem:[%s3 + $0xc] sm:$0xf]
        %v616 = vld [vmem:[%s3 + $0x10] sm:$0xf]
        %v617 = vld [vmem:[%s3 + $0x14] sm:$0xf]
        %v618 = vld [vmem:[%s3 + $0x18] sm:$0xf]
        %v619 = vld [vmem:[%s3 + $0x1c] sm:$0xf]
        %v620 = vld [vmem:[%s3 + $0x20] sm:$0xf]
        %v621 = vld [vmem:[%s3 + $0x24] sm:$0xf]
        %v622 = vld [vmem:[%s3 + $0x28] sm:$0xf]
        %v623 = vld [vmem:[%s3 + $0x2c] sm:$0xf]
        %v624 = vld [vmem:[%s3 + $0x30] sm:$0xf]
        %v625 = vld [vmem:[%s3 + $0x34] sm:$0xf]
        %v626 = vld [vmem:[%s3 + $0x38] sm:$0xf]
        %v627 = vld [vmem:[%s3 + $0x3c] sm:$0xf]
        %v628 = vld [vmem:[%s4] sm:$0x1]
        %v630 = vlaneseq
        %v631 = vshrl.u32 %v630, 7
        %v632 = vsub.s32 0, %v631
        %v633 = vrot.slane %v628, %v632
        %v651 = vunpack.c.l.b16 %v612
        %v652 = vunpack.c.l.b16 %v613
        %v653 = vunpack.c.l.b16 %v614
        %v654 = vunpack.c.l.b16 %v615
        %v655 = vunpack.c.l.b16 %v616
        %v656 = vunpack.c.l.b16 %v617
        %v657 = vunpack.c.l.b16 %v618
        %v658 = vunpack.c.l.b16 %v619
        %v659 = vunpack.c.l.b16 %v620
        %v660 = vunpack.c.l.b16 %v621
        %v661 = vunpack.c.l.b16 %v622
        %v662 = vunpack.c.l.b16 %v623
        %v663 = vunpack.c.l.b16 %v624
        %v664 = vunpack.c.l.b16 %v625
        %v665 = vunpack.c.l.b16 %v626
        %v666 = vunpack.c.l.b16 %v627
        %v667 = vpack.c.b16 %v652, %v651
        %v668 = vpack.c.b16 %v654, %v653
        %v669 = vpack.c.b16 %v656, %v655
        %v670 = vpack.c.b16 %v658, %v657
        %v671 = vpack.c.b16 %v660, %v659
        %v672 = vpack.c.b16 %v662, %v661
        %v673 = vpack.c.b16 %v664, %v663
        %v674 = vpack.c.b16 %v666, %v665
        %683 = vmatprep.subr.bf16.mxu0 0
        %684 = vmatpush1.bf16.msra.mxu0 %v674
        %685 = vmatprep.subr.bf16.mxu0 0
        %686 = vmatpush1.bf16.msra.mxu0 %v673
        %687 = vmatprep.subr.bf16.mxu0 0
        %688 = vmatpush1.bf16.msra.mxu0 %v672
        %689 = vmatprep.subr.bf16.mxu0 0
        %690 = vmatpush1.bf16.msra.mxu0 %v671
        %691 = vmatprep.subr.bf16.mxu0 0
        %692 = vmatpush1.bf16.msra.mxu0 %v670
        %693 = vmatprep.subr.bf16.mxu0 0
        %694 = vmatpush1.bf16.msra.mxu0 %v669
        %695 = vmatprep.subr.bf16.mxu0 0
        %696 = vmatpush1.bf16.msra.mxu0 %v668
        %697 = vmatprep.subr.bf16.mxu0 0
        %698 = vmatpush1.bf16.msra.mxu0 %v667
        %699 = vmatprep.subr.bf16.mxu0 0
        %700 = vmatpush2.bf16.msra.mxu0 0
        %701 = vmatprep.subr.bf16.mxu0 0
        %702 = vmatpush2.bf16.msra.mxu0 0
        %703 = vmatprep.subr.bf16.mxu0 0
        %704 = vmatpush2.bf16.msra.mxu0 0
        %705 = vmatprep.subr.bf16.mxu0 0
        %706 = vmatpush2.bf16.msra.mxu0 0
        %707 = vmatprep.subr.bf16.mxu0 0
        %708 = vmatpush2.bf16.msra.mxu0 0
        %709 = vmatprep.subr.bf16.mxu0 0
        %710 = vmatpush2.bf16.msra.mxu0 0
        %711 = vmatprep.subr.bf16.mxu0 0
        %712 = vmatpush2.bf16.msra.mxu0 0
        %713 = vmatprep.subr.bf16.mxu0 0
        %714 = vmatpush2.bf16.msra.mxu0 0
        %715 = vmatprep.mubr.bf16.mxu0 0
        %716 = vmatmul.mubr.bf16.gmra.mxu0 %v611
        %v717 = vpop.f32.mrf.mxu0
        %v718 = vadd.f32 %v633, %v717
        %v719 = vpop.f32.mrf.mxu0
        %v720 = vpop.f32.mrf.mxu0
        %v721 = vpop.f32.mrf.mxu0
        %722 = vdwg.mxu0
        %723 = vst [vmem:[%s5] sm:$0xff] %v718
      $region48: #{_lambda_.7} parent=39 // pred_fallthru
        _
      // Predicated region
      $region49: #{_lambda_.7} parent=39 // pred_check
        %p724 = pneg %p144
      $region50: #{_lambda_.7} parent=39 // pred_check_branch
        %726 = sbr.rel (%p724) target = $region52
      $region51: #{_lambda_.7} parent=39 // pred_region
        _
      $region52: #{_lambda_.7} parent=39 // pred_fallthru
        _
      // Predicated region
      $region53: #{_lambda_.7} parent=39 // pred_check
        %p727 = pneg %p144
      $region54: #{_lambda_.7} parent=39 // pred_check_branch
        %729 = sbr.rel (%p727) target = $region56
      $region55: #{_lambda_.7} parent=39 // pred_region
        _
      $region56: #{_lambda_.7} parent=39 // pred_fallthru
        _
    $region40: #{_lambda_.7} parent=5 // pred_fallthru
      _
    %p730 = scmp.le.s32.totalorder 2, %s11
    // Predicated region
    $region57: #{_lambda_.7} parent=5 // pred_check
      %p731 = pneg %p730
    $region58: #{_lambda_.7} parent=5 // pred_check_branch
      %733 = sbr.rel (%p731) target = $region60
    $region59: #{_lambda_.7} parent=5 // pred_region
      %s734 = ssub.s32 %s11, 2
    $region60: #{_lambda_.7} parent=5 // pred_fallthru
      _
  $region6: #{_lambda_.7} parent=0 // loop_footer
    %s15 = sadd.s32 1, %s11
  $region7: #{_lambda_.7} parent=0 // loop_footer_branch
    %10 = sbr.rel target = $region3
  $region8: #{_lambda_.7} parent=0 // loop_exit
    _

</llo_original>
